<compile_context>
chip_gen: v6e
topology: v6e:2x2x1
jax: 0.10.0
libtpu: 0.0.40
codegen_flags: <defaults>
</compile_context>

<pallas_src>
import functools

import jax
import jax.numpy as jnp
from jax.experimental import pallas as pl
from jax.experimental.pallas import tpu as pltpu


# ----------------------------------------------------------------------------
# Fused forward kernel: LSTM stack + Conv1d + attention + FC, all VMEM-resident.
# ----------------------------------------------------------------------------
def fused_attn_conv_lstm_kernel(*refs, num_layers, ksize, pad):
    n_lstm = 3 * num_layers
    x_ref = refs[0]
    lstm_refs = refs[1:1 + n_lstm]
    w_conv_ref, b_conv_ref, w_fc_ref, b_fc_ref = refs[1 + n_lstm:1 + n_lstm + 4]
    out_ref, seq_sc, xp_sc = refs[1 + n_lstm + 4:]

    B, S, D = x_ref.shape
    H = lstm_refs[1].shape[0]                       # w_hh is (H, 4H)

    x_f = x_ref[...].astype(jnp.float32)            # (B, S, D)

    # ------------------------- LSTM layer 0 (batch-first input) -------------------------
    w_ih = lstm_refs[0][...]
    w_hh = lstm_refs[1][...]
    b = lstm_refs[2][...]                           # (1, 4H)
    # Hoisted input projection for all timesteps: one (B*S, D) x (D, 4H) matmul.
    gx = jnp.einsum('bsd,dg->bsg', x_f, w_ih,
                    preferred_element_type=jnp.float32) + b      # (B, S, 4H)
    h = jnp.zeros((B, H), jnp.float32)
    c = jnp.zeros((B, H), jnp.float32)
    for t in range(S):                              # static unroll (S known at trace time)
        g = gx[:, t, :] + jnp.dot(h, w_hh, preferred_element_type=jnp.float32)
        i_g = jax.nn.sigmoid(g[:, 0 * H:1 * H])     # PyTorch gate order: i, f, g, o
        f_g = jax.nn.sigmoid(g[:, 1 * H:2 * H])
        g_g = jnp.tanh(g[:, 2 * H:3 * H])
        o_g = jax.nn.sigmoid(g[:, 3 * H:4 * H])
        c = f_g * c + i_g * g_g
        h = o_g * jnp.tanh(c)
        if num_layers > 1:
            seq_sc[t] = h                           # time-major (S, B, H) layer output

    # --------------------- LSTM layers 1..L-1 (seq kept in VMEM scratch) ----------------
    for layer in range(1, num_layers):
        w_ih = lstm_refs[3 * layer][...]
        w_hh = lstm_refs[3 * layer + 1][...]
        b = lstm_refs[3 * layer + 2][...]
        seq_prev = seq_sc[...]                      # (S, B, H)
        gx = jnp.einsum('sbh,hg->sbg', seq_prev, w_ih,
                        preferred_element_type=jnp.float32) + b  # (S, B, 4H), hoisted
        h = jnp.zeros((B, H), jnp.float32)
        c = jnp.zeros((B, H), jnp.float32)
        for t in range(S):
            g = gx[t] + jnp.dot(h, w_hh, preferred_element_type=jnp.float32)
            i_g = jax.nn.sigmoid(g[:, 0 * H:1 * H])
            f_g = jax.nn.sigmoid(g[:, 1 * H:2 * H])
            g_g = jnp.tanh(g[:, 2 * H:3 * H])
            o_g = jax.nn.sigmoid(g[:, 3 * H:4 * H])
            c = f_g * c + i_g * g_g
            h = o_g * jnp.tanh(c)
            if layer < num_layers - 1:
                seq_sc[t] = h                       # safe: gx already consumed seq_sc

    h_last = h   # == lstm_out[:, -1, :] — the only LSTM row the module's FC consumes

    # ---------------- Conv1d ('same' padding materialized in VMEM scratch) --------------
    xp_sc[...] = jnp.zeros_like(xp_sc)
    xp_sc[:, pl.ds(pad, S), :] = x_f                # (B, S+2*pad, D), zero-padded
    conv = b_conv_ref[...]                          # (1, H), broadcasts to (B, S, H)
    for j in range(ksize):                          # small static tap unroll (K=3)
        conv = conv + jnp.einsum('bsd,dh->bsh', xp_sc[:, pl.ds(j, S), :],
                                 w_conv_ref[j],
                                 preferred_element_type=jnp.float32)

    # ------------------- Attention (only the last query row is needed) ------------------
    # scores[b, s] = <lstm_out[b, -1, :], conv[b, s, :]>  — VPU multiply + lane reduction.
    scores = jnp.sum(conv * h_last[:, None, :], axis=-1)          # (B, S)
    m = jnp.max(scores, axis=-1, keepdims=True)
    e = jnp.exp(scores - m)
    p = e / jnp.sum(e, axis=-1, keepdims=True)                    # softmax over S
    attn = jnp.einsum('bqs,bsh->bqh', p[:, None, :], conv,
                      preferred_element_type=jnp.float32)[:, 0, :]  # (B, H)

    # ------------------- Final FC on cat(lstm_last, attn_last) --------------------------
    w_fc = w_fc_ref[...]                            # (2H, O)
    out = (jnp.dot(h_last, w_fc[:H, :], preferred_element_type=jnp.float32)
           + jnp.dot(attn, w_fc[H:, :], preferred_element_type=jnp.float32)
           + b_fc_ref[...])
    out_ref[...] = out.astype(out_ref.dtype)


# ----------------------------------------------------------------------------
# Wrapper: single pallas_call, everything in VMEM, no grid.
# ----------------------------------------------------------------------------
def attn_conv_lstm_forward(x, params):
    B, S, D = x.shape
    num_layers = len(params['lstm'])
    H = params['lstm'][0][1].shape[0]
    O = params['fc_w'].shape[1]
    K = params['conv_w'].shape[0]
    pad = params['pad']

    inputs = [x]
    for (w_ih_t, w_hh_t, b) in params['lstm']:
        inputs += [w_ih_t, w_hh_t, b]
    inputs += [params['conv_w'], params['conv_b'], params['fc_w'], params['fc_b']]

    kern = functools.partial(fused_attn_conv_lstm_kernel,
                             num_layers=num_layers, ksize=K, pad=pad)
    return pl.pallas_call(
        kern,
        out_shape=jax.ShapeDtypeStruct((B, O), jnp.float32),
        in_specs=[pl.BlockSpec(memory_space=pltpu.MemorySpace.VMEM)] * len(inputs),
        out_specs=pl.BlockSpec(memory_space=pltpu.MemorySpace.VMEM),
        scratch_shapes=[
            pltpu.VMEM((S, B, H), jnp.float32),            # layer-to-layer h sequence
            pltpu.VMEM((B, S + 2 * pad, D), jnp.float32),  # zero-padded conv input
        ],
    )(*inputs)


# ----------------------------------------------------------------------------
# Deterministic parameter init (PyTorch-like uniform scales, no checkpoint).
# ----------------------------------------------------------------------------
def init_params(key, input_size, hidden_size, num_layers, output_size, kernel_size):
    assert kernel_size % 2 == 1, "padding=(K-1)//2 only gives 'same' length for odd K"
    keys = jax.random.split(key, 4 * num_layers + 4)
    ki = 0
    std = 1.0 / float(hidden_size) ** 0.5
    lstm = []
    for layer in range(num_layers):
        d_in = input_size if layer == 0 else hidden_size
        w_ih = jax.random.uniform(keys[ki], (4 * hidden_size, d_in),
                                  minval=-std, maxval=std, dtype=jnp.float32); ki += 1
        w_hh = jax.random.uniform(keys[ki], (4 * hidden_size, hidden_size),
                                  minval=-std, maxval=std, dtype=jnp.float32); ki += 1
        b_ih = jax.random.uniform(keys[ki], (4 * hidden_size,),
                                  minval=-std, maxval=std, dtype=jnp.float32); ki += 1
        b_hh = jax.random.uniform(keys[ki], (4 * hidden_size,),
                                  minval=-std, maxval=std, dtype=jnp.float32); ki += 1
        lstm.append((w_ih.T, w_hh.T, (b_ih + b_hh).reshape(1, -1)))

    c_std = 1.0 / float(input_size * kernel_size) ** 0.5
    conv_w = jax.random.uniform(keys[ki], (hidden_size, input_size, kernel_size),
                                minval=-c_std, maxval=c_std, dtype=jnp.float32); ki += 1
    conv_b = jax.random.uniform(keys[ki], (hidden_size,),
                                minval=-c_std, maxval=c_std, dtype=jnp.float32); ki += 1

    f_std = 1.0 / float(2 * hidden_size) ** 0.5
    fc_w = jax.random.uniform(keys[ki], (output_size, 2 * hidden_size),
                              minval=-f_std, maxval=f_std, dtype=jnp.float32); ki += 1
    fc_b = jax.random.uniform(keys[ki], (output_size,),
                              minval=-f_std, maxval=f_std, dtype=jnp.float32)

    return {
        'lstm': lstm,
        'conv_w': jnp.transpose(conv_w, (2, 1, 0)),       # (K, D, H): each tap a (D,H) matmul
        'conv_b': conv_b.reshape(1, hidden_size),
        'fc_w': fc_w.T,                                   # (2H, O)
        'fc_b': fc_b.reshape(1, output_size),
        'pad': (kernel_size - 1) // 2,
    }


# ----------------------------------------------------------------------------
# Pure-JAX reference (mirrors the PyTorch forward) for validation.
# ----------------------------------------------------------------------------
def reference_forward(x, params):
    B, S, _ = x.shape
    inp = x
    for (w_ih_t, w_hh_t, b) in params['lstm']:
        H = w_hh_t.shape[0]
        h = jnp.zeros((B, H), jnp.float32)
        c = jnp.zeros((B, H), jnp.float32)
        outs = []
        for t in range(S):
            g = inp[:, t, :] @ w_ih_t + h @ w_hh_t + b
            i = jax.nn.sigmoid(g[:, :H])
            f = jax.nn.sigmoid(g[:, H:2 * H])
            gg = jnp.tanh(g[:, 2 * H:3 * H])
            o = jax.nn.sigmoid(g[:, 3 * H:])
            c = f * c + i * gg
            h = o * jnp.tanh(c)
            outs.append(h)
        inp = jnp.stack(outs, axis=1)
    lstm_out = inp

    pad = params['pad']
    K = params['conv_w'].shape[0]
    xp = jnp.pad(x, ((0, 0), (pad, pad), (0, 0)))
    conv_out = params['conv_b'][None, :, :]
    for j in range(K):
        conv_out = conv_out + jnp.einsum('bsd,dh->bsh',
                                         xp[:, j:j + S, :], params['conv_w'][j])

    scores = jnp.einsum('bqh,bkh->bqk', lstm_out, conv_out)
    attn_w = jax.nn.softmax(scores, axis=-1)
    attn = jnp.einsum('bqk,bkh->bqh', attn_w, conv_out)
    out = jnp.concatenate([lstm_out, attn], axis=-1)[:, -1, :]
    return out @ params['fc_w'] + params['fc_b']


if __name__ == "__main__":
    # Small shapes consistent with the module: batch=2, seq=8, input=4,
    # hidden=32, num_layers=2, output=4, kernel_size=3 (odd -> 'same' length).
    B, S, D_IN = 2, 8, 4
    HIDDEN, LAYERS, OUT, KSIZE = 32, 2, 4, 3

    key = jax.random.PRNGKey(0)
    kx, kp = jax.random.split(key)
    x = jax.random.normal(kx, (B, S, D_IN), dtype=jnp.float32)
    params = init_params(kp, D_IN, HIDDEN, LAYERS, OUT, KSIZE)

    out = attn_conv_lstm_forward(x, params)
    out = jax.block_until_ready(out)
    assert out.shape == (B, OUT)

    ref = reference_forward(x, params)
    assert bool(jnp.allclose(out, ref, rtol=1e-4, atol=1e-4)), "mismatch vs reference"

    print("KERNEL_OK")
</pallas_src>

<mosaic_0001>
module attributes {stable_mosaic.version = 11 : i64} {
  func.func @fused_attn_conv_lstm_kernel(%arg0: memref<2x8x4xf32, #tpu.memory_space<vmem>>, %arg1: memref<4x128xf32, #tpu.memory_space<vmem>>, %arg2: memref<32x128xf32, #tpu.memory_space<vmem>>, %arg3: memref<1x128xf32, #tpu.memory_space<vmem>>, %arg4: memref<32x128xf32, #tpu.memory_space<vmem>>, %arg5: memref<32x128xf32, #tpu.memory_space<vmem>>, %arg6: memref<1x128xf32, #tpu.memory_space<vmem>>, %arg7: memref<3x4x32xf32, #tpu.memory_space<vmem>>, %arg8: memref<1x32xf32, #tpu.memory_space<vmem>>, %arg9: memref<64x4xf32, #tpu.memory_space<vmem>>, %arg10: memref<1x4xf32, #tpu.memory_space<vmem>>, %arg11: memref<2x4xf32, #tpu.memory_space<vmem>>, %arg12: memref<8x2x32xf32, #tpu.memory_space<vmem>>, %arg13: memref<2x10x4xf32, #tpu.memory_space<vmem>>) attributes {dimension_semantics = [], scalar_prefetch = 0 : i64, scratch_operands = 2 : i64, tpu.core_type = #tpu.core_type<tc>} {
    %c0 = arith.constant 0 : index
    %c0_0 = arith.constant 0 : index
    %c0_1 = arith.constant 0 : index
    %0 = vector.load %arg0[%c0, %c0_0, %c0_1] : memref<2x8x4xf32, #tpu.memory_space<vmem>>, vector<2x8x4xf32>
    %c0_2 = arith.constant 0 : index
    %c0_3 = arith.constant 0 : index
    %1 = vector.load %arg1[%c0_2, %c0_3] : memref<4x128xf32, #tpu.memory_space<vmem>>, vector<4x128xf32>
    %c0_4 = arith.constant 0 : index
    %c0_5 = arith.constant 0 : index
    %2 = vector.load %arg2[%c0_4, %c0_5] : memref<32x128xf32, #tpu.memory_space<vmem>>, vector<32x128xf32>
    %c0_6 = arith.constant 0 : index
    %c0_7 = arith.constant 0 : index
    %3 = vector.load %arg3[%c0_6, %c0_7] : memref<1x128xf32, #tpu.memory_space<vmem>>, vector<1x128xf32>
    "tpu.trace_start"() <{level = 10 : i32, message = "bsd,dg->bsg"}> : () -> ()
    %cst = arith.constant dense<0.000000e+00> : vector<2x8x128xf32>
    %4 = tpu.matmul %0, %1, %cst {dimension_numbers = #tpu.dot_dimension_numbers<[2], [0], [0, 1], [1], [0, 0, 0, 1, 1, 1], [], []>} : vector<2x8x4xf32>, vector<4x128xf32>, vector<2x8x128xf32> -> vector<2x8x128xf32>
    "tpu.trace_stop"() : () -> ()
    %5 = vector.shape_cast %3 : vector<1x128xf32> to vector<1x1x128xf32>
    %6 = vector.broadcast %5 : vector<1x1x128xf32> to vector<2x8x128xf32>
    %7 = arith.addf %4, %6 : vector<2x8x128xf32>
    %cst_8 = arith.constant 0.000000e+00 : f32
    %8 = vector.broadcast %cst_8 : f32 to vector<2x32xf32>
    %cst_9 = arith.constant 0.000000e+00 : f32
    %9 = vector.broadcast %cst_9 : f32 to vector<2x32xf32>
    %10 = vector.extract_strided_slice %7 {offsets = [0, 0, 0], sizes = [2, 1, 128], strides = [1, 1, 1]} : vector<2x8x128xf32> to vector<2x1x128xf32>
    %11 = vector.shape_cast %10 : vector<2x1x128xf32> to vector<2x128xf32>
    %cst_10 = arith.constant dense<0.000000e+00> : vector<2x128xf32>
    %12 = tpu.matmul %8, %2, %cst_10 {dimension_numbers = #tpu.dot_dimension_numbers<[1], [0], [0], [1], [0, 0, 1, 1], [], []>} : vector<2x32xf32>, vector<32x128xf32>, vector<2x128xf32> -> vector<2x128xf32>
    %13 = arith.addf %11, %12 : vector<2x128xf32>
    %14 = vector.extract_strided_slice %13 {offsets = [0, 0], sizes = [2, 32], strides = [1, 1]} : vector<2x128xf32> to vector<2x32xf32>
    %15 = arith.negf %14 : vector<2x32xf32>
    %16 = math.exp %15 : vector<2x32xf32>
    %cst_11 = arith.constant 1.000000e+00 : f32
    %17 = vector.broadcast %cst_11 : f32 to vector<2x32xf32>
    %18 = arith.addf %17, %16 : vector<2x32xf32>
    %19 = arith.divf %17, %18 : vector<2x32xf32>
    %20 = vector.extract_strided_slice %13 {offsets = [0, 32], sizes = [2, 32], strides = [1, 1]} : vector<2x128xf32> to vector<2x32xf32>
    %21 = arith.negf %20 : vector<2x32xf32>
    %22 = math.exp %21 : vector<2x32xf32>
    %cst_12 = arith.constant 1.000000e+00 : f32
    %23 = vector.broadcast %cst_12 : f32 to vector<2x32xf32>
    %24 = arith.addf %23, %22 : vector<2x32xf32>
    %25 = arith.divf %23, %24 : vector<2x32xf32>
    %26 = vector.extract_strided_slice %13 {offsets = [0, 64], sizes = [2, 32], strides = [1, 1]} : vector<2x128xf32> to vector<2x32xf32>
    %27 = math.tanh %26 : vector<2x32xf32>
    %28 = vector.extract_strided_slice %13 {offsets = [0, 96], sizes = [2, 32], strides = [1, 1]} : vector<2x128xf32> to vector<2x32xf32>
    %29 = arith.negf %28 : vector<2x32xf32>
    %30 = math.exp %29 : vector<2x32xf32>
    %cst_13 = arith.constant 1.000000e+00 : f32
    %31 = vector.broadcast %cst_13 : f32 to vector<2x32xf32>
    %32 = arith.addf %31, %30 : vector<2x32xf32>
    %33 = arith.divf %31, %32 : vector<2x32xf32>
    %34 = arith.mulf %25, %9 : vector<2x32xf32>
    %35 = arith.mulf %19, %27 : vector<2x32xf32>
    %36 = arith.addf %34, %35 : vector<2x32xf32>
    %37 = math.tanh %36 : vector<2x32xf32>
    %38 = arith.mulf %33, %37 : vector<2x32xf32>
    %c0_14 = arith.constant 0 : index
    %c0_15 = arith.constant 0 : index
    %c0_16 = arith.constant 0 : index
    %39 = vector.load %arg12[%c0_14, %c0_15, %c0_16] : memref<8x2x32xf32, #tpu.memory_space<vmem>>, vector<1x2x32xf32>
    %40 = vector.shape_cast %39 : vector<1x2x32xf32> to vector<2x32xf32>
    %41 = vector.shape_cast %38 : vector<2x32xf32> to vector<1x2x32xf32>
    tpu.vector_store %arg12[%c0_14, %c0_15, %c0_16], %41 {strides = array<i32>} : memref<8x2x32xf32, #tpu.memory_space<vmem>>, vector<1x2x32xf32>,
    %42 = vector.extract_strided_slice %7 {offsets = [0, 1, 0], sizes = [2, 1, 128], strides = [1, 1, 1]} : vector<2x8x128xf32> to vector<2x1x128xf32>
    %43 = vector.shape_cast %42 : vector<2x1x128xf32> to vector<2x128xf32>
    %cst_17 = arith.constant dense<0.000000e+00> : vector<2x128xf32>
    %44 = tpu.matmul %38, %2, %cst_17 {dimension_numbers = #tpu.dot_dimension_numbers<[1], [0], [0], [1], [0, 0, 1, 1], [], []>} : vector<2x32xf32>, vector<32x128xf32>, vector<2x128xf32> -> vector<2x128xf32>
    %45 = arith.addf %43, %44 : vector<2x128xf32>
    %46 = vector.extract_strided_slice %45 {offsets = [0, 0], sizes = [2, 32], strides = [1, 1]} : vector<2x128xf32> to vector<2x32xf32>
    %47 = arith.negf %46 : vector<2x32xf32>
    %48 = math.exp %47 : vector<2x32xf32>
    %cst_18 = arith.constant 1.000000e+00 : f32
    %49 = vector.broadcast %cst_18 : f32 to vector<2x32xf32>
    %50 = arith.addf %49, %48 : vector<2x32xf32>
    %51 = arith.divf %49, %50 : vector<2x32xf32>
    %52 = vector.extract_strided_slice %45 {offsets = [0, 32], sizes = [2, 32], strides = [1, 1]} : vector<2x128xf32> to vector<2x32xf32>
    %53 = arith.negf %52 : vector<2x32xf32>
    %54 = math.exp %53 : vector<2x32xf32>
    %cst_19 = arith.constant 1.000000e+00 : f32
    %55 = vector.broadcast %cst_19 : f32 to vector<2x32xf32>
    %56 = arith.addf %55, %54 : vector<2x32xf32>
    %57 = arith.divf %55, %56 : vector<2x32xf32>
    %58 = vector.extract_strided_slice %45 {offsets = [0, 64], sizes = [2, 32], strides = [1, 1]} : vector<2x128xf32> to vector<2x32xf32>
    %59 = math.tanh %58 : vector<2x32xf32>
    %60 = vector.extract_strided_slice %45 {offsets = [0, 96], sizes = [2, 32], strides = [1, 1]} : vector<2x128xf32> to vector<2x32xf32>
    %61 = arith.negf %60 : vector<2x32xf32>
    %62 = math.exp %61 : vector<2x32xf32>
    %cst_20 = arith.constant 1.000000e+00 : f32
    %63 = vector.broadcast %cst_20 : f32 to vector<2x32xf32>
    %64 = arith.addf %63, %62 : vector<2x32xf32>
    %65 = arith.divf %63, %64 : vector<2x32xf32>
    %66 = arith.mulf %57, %36 : vector<2x32xf32>
    %67 = arith.mulf %51, %59 : vector<2x32xf32>
    %68 = arith.addf %66, %67 : vector<2x32xf32>
    %69 = math.tanh %68 : vector<2x32xf32>
    %70 = arith.mulf %65, %69 : vector<2x32xf32>
    %c1 = arith.constant 1 : index
    %c0_21 = arith.constant 0 : index
    %c0_22 = arith.constant 0 : index
    %71 = vector.load %arg12[%c1, %c0_21, %c0_22] : memref<8x2x32xf32, #tpu.memory_space<vmem>>, vector<1x2x32xf32>
    %72 = vector.shape_cast %71 : vector<1x2x32xf32> to vector<2x32xf32>
    %73 = vector.shape_cast %70 : vector<2x32xf32> to vector<1x2x32xf32>
    tpu.vector_store %arg12[%c1, %c0_21, %c0_22], %73 {strides = array<i32>} : memref<8x2x32xf32, #tpu.memory_space<vmem>>, vector<1x2x32xf32>,
    %74 = vector.extract_strided_slice %7 {offsets = [0, 2, 0], sizes = [2, 1, 128], strides = [1, 1, 1]} : vector<2x8x128xf32> to vector<2x1x128xf32>
    %75 = vector.shape_cast %74 : vector<2x1x128xf32> to vector<2x128xf32>
    %cst_23 = arith.constant dense<0.000000e+00> : vector<2x128xf32>
    %76 = tpu.matmul %70, %2, %cst_23 {dimension_numbers = #tpu.dot_dimension_numbers<[1], [0], [0], [1], [0, 0, 1, 1], [], []>} : vector<2x32xf32>, vector<32x128xf32>, vector<2x128xf32> -> vector<2x128xf32>
    %77 = arith.addf %75, %76 : vector<2x128xf32>
    %78 = vector.extract_strided_slice %77 {offsets = [0, 0], sizes = [2, 32], strides = [1, 1]} : vector<2x128xf32> to vector<2x32xf32>
    %79 = arith.negf %78 : vector<2x32xf32>
    %80 = math.exp %79 : vector<2x32xf32>
    %cst_24 = arith.constant 1.000000e+00 : f32
    %81 = vector.broadcast %cst_24 : f32 to vector<2x32xf32>
    %82 = arith.addf %81, %80 : vector<2x32xf32>
    %83 = arith.divf %81, %82 : vector<2x32xf32>
    %84 = vector.extract_strided_slice %77 {offsets = [0, 32], sizes = [2, 32], strides = [1, 1]} : vector<2x128xf32> to vector<2x32xf32>
    %85 = arith.negf %84 : vector<2x32xf32>
    %86 = math.exp %85 : vector<2x32xf32>
    %cst_25 = arith.constant 1.000000e+00 : f32
    %87 = vector.broadcast %cst_25 : f32 to vector<2x32xf32>
    %88 = arith.addf %87, %86 : vector<2x32xf32>
    %89 = arith.divf %87, %88 : vector<2x32xf32>
    %90 = vector.extract_strided_slice %77 {offsets = [0, 64], sizes = [2, 32], strides = [1, 1]} : vector<2x128xf32> to vector<2x32xf32>
    %91 = math.tanh %90 : vector<2x32xf32>
    %92 = vector.extract_strided_slice %77 {offsets = [0, 96], sizes = [2, 32], strides = [1, 1]} : vector<2x128xf32> to vector<2x32xf32>
    %93 = arith.negf %92 : vector<2x32xf32>
    %94 = math.exp %93 : vector<2x32xf32>
    %cst_26 = arith.constant 1.000000e+00 : f32
    %95 = vector.broadcast %cst_26 : f32 to vector<2x32xf32>
    %96 = arith.addf %95, %94 : vector<2x32xf32>
    %97 = arith.divf %95, %96 : vector<2x32xf32>
    %98 = arith.mulf %89, %68 : vector<2x32xf32>
    %99 = arith.mulf %83, %91 : vector<2x32xf32>
    %100 = arith.addf %98, %99 : vector<2x32xf32>
    %101 = math.tanh %100 : vector<2x32xf32>
    %102 = arith.mulf %97, %101 : vector<2x32xf32>
    %c2 = arith.constant 2 : index
    %c0_27 = arith.constant 0 : index
    %c0_28 = arith.constant 0 : index
    %103 = vector.load %arg12[%c2, %c0_27, %c0_28] : memref<8x2x32xf32, #tpu.memory_space<vmem>>, vector<1x2x32xf32>
    %104 = vector.shape_cast %103 : vector<1x2x32xf32> to vector<2x32xf32>
    %105 = vector.shape_cast %102 : vector<2x32xf32> to vector<1x2x32xf32>
    tpu.vector_store %arg12[%c2, %c0_27, %c0_28], %105 {strides = array<i32>} : memref<8x2x32xf32, #tpu.memory_space<vmem>>, vector<1x2x32xf32>,
    %106 = vector.extract_strided_slice %7 {offsets = [0, 3, 0], sizes = [2, 1, 128], strides = [1, 1, 1]} : vector<2x8x128xf32> to vector<2x1x128xf32>
    %107 = vector.shape_cast %106 : vector<2x1x128xf32> to vector<2x128xf32>
    %cst_29 = arith.constant dense<0.000000e+00> : vector<2x128xf32>
    %108 = tpu.matmul %102, %2, %cst_29 {dimension_numbers = #tpu.dot_dimension_numbers<[1], [0], [0], [1], [0, 0, 1, 1], [], []>} : vector<2x32xf32>, vector<32x128xf32>, vector<2x128xf32> -> vector<2x128xf32>
    %109 = arith.addf %107, %108 : vector<2x128xf32>
    %110 = vector.extract_strided_slice %109 {offsets = [0, 0], sizes = [2, 32], strides = [1, 1]} : vector<2x128xf32> to vector<2x32xf32>
    %111 = arith.negf %110 : vector<2x32xf32>
    %112 = math.exp %111 : vector<2x32xf32>
    %cst_30 = arith.constant 1.000000e+00 : f32
    %113 = vector.broadcast %cst_30 : f32 to vector<2x32xf32>
    %114 = arith.addf %113, %112 : vector<2x32xf32>
    %115 = arith.divf %113, %114 : vector<2x32xf32>
    %116 = vector.extract_strided_slice %109 {offsets = [0, 32], sizes = [2, 32], strides = [1, 1]} : vector<2x128xf32> to vector<2x32xf32>
    %117 = arith.negf %116 : vector<2x32xf32>
    %118 = math.exp %117 : vector<2x32xf32>
    %cst_31 = arith.constant 1.000000e+00 : f32
    %119 = vector.broadcast %cst_31 : f32 to vector<2x32xf32>
    %120 = arith.addf %119, %118 : vector<2x32xf32>
    %121 = arith.divf %119, %120 : vector<2x32xf32>
    %122 = vector.extract_strided_slice %109 {offsets = [0, 64], sizes = [2, 32], strides = [1, 1]} : vector<2x128xf32> to vector<2x32xf32>
    %123 = math.tanh %122 : vector<2x32xf32>
    %124 = vector.extract_strided_slice %109 {offsets = [0, 96], sizes = [2, 32], strides = [1, 1]} : vector<2x128xf32> to vector<2x32xf32>
    %125 = arith.negf %124 : vector<2x32xf32>
    %126 = math.exp %125 : vector<2x32xf32>
    %cst_32 = arith.constant 1.000000e+00 : f32
    %127 = vector.broadcast %cst_32 : f32 to vector<2x32xf32>
    %128 = arith.addf %127, %126 : vector<2x32xf32>
    %129 = arith.divf %127, %128 : vector<2x32xf32>
    %130 = arith.mulf %121, %100 : vector<2x32xf32>
    %131 = arith.mulf %115, %123 : vector<2x32xf32>
    %132 = arith.addf %130, %131 : vector<2x32xf32>
    %133 = math.tanh %132 : vector<2x32xf32>
    %134 = arith.mulf %129, %133 : vector<2x32xf32>
    %c3 = arith.constant 3 : index
    %c0_33 = arith.constant 0 : index
    %c0_34 = arith.constant 0 : index
    %135 = vector.load %arg12[%c3, %c0_33, %c0_34] : memref<8x2x32xf32, #tpu.memory_space<vmem>>, vector<1x2x32xf32>
    %136 = vector.shape_cast %135 : vector<1x2x32xf32> to vector<2x32xf32>
    %137 = vector.shape_cast %134 : vector<2x32xf32> to vector<1x2x32xf32>
    tpu.vector_store %arg12[%c3, %c0_33, %c0_34], %137 {strides = array<i32>} : memref<8x2x32xf32, #tpu.memory_space<vmem>>, vector<1x2x32xf32>,
    %138 = vector.extract_strided_slice %7 {offsets = [0, 4, 0], sizes = [2, 1, 128], strides = [1, 1, 1]} : vector<2x8x128xf32> to vector<2x1x128xf32>
    %139 = vector.shape_cast %138 : vector<2x1x128xf32> to vector<2x128xf32>
    %cst_35 = arith.constant dense<0.000000e+00> : vector<2x128xf32>
    %140 = tpu.matmul %134, %2, %cst_35 {dimension_numbers = #tpu.dot_dimension_numbers<[1], [0], [0], [1], [0, 0, 1, 1], [], []>} : vector<2x32xf32>, vector<32x128xf32>, vector<2x128xf32> -> vector<2x128xf32>
    %141 = arith.addf %139, %140 : vector<2x128xf32>
    %142 = vector.extract_strided_slice %141 {offsets = [0, 0], sizes = [2, 32], strides = [1, 1]} : vector<2x128xf32> to vector<2x32xf32>
    %143 = arith.negf %142 : vector<2x32xf32>
    %144 = math.exp %143 : vector<2x32xf32>
    %cst_36 = arith.constant 1.000000e+00 : f32
    %145 = vector.broadcast %cst_36 : f32 to vector<2x32xf32>
    %146 = arith.addf %145, %144 : vector<2x32xf32>
    %147 = arith.divf %145, %146 : vector<2x32xf32>
    %148 = vector.extract_strided_slice %141 {offsets = [0, 32], sizes = [2, 32], strides = [1, 1]} : vector<2x128xf32> to vector<2x32xf32>
    %149 = arith.negf %148 : vector<2x32xf32>
    %150 = math.exp %149 : vector<2x32xf32>
    %cst_37 = arith.constant 1.000000e+00 : f32
    %151 = vector.broadcast %cst_37 : f32 to vector<2x32xf32>
    %152 = arith.addf %151, %150 : vector<2x32xf32>
    %153 = arith.divf %151, %152 : vector<2x32xf32>
    %154 = vector.extract_strided_slice %141 {offsets = [0, 64], sizes = [2, 32], strides = [1, 1]} : vector<2x128xf32> to vector<2x32xf32>
    %155 = math.tanh %154 : vector<2x32xf32>
    %156 = vector.extract_strided_slice %141 {offsets = [0, 96], sizes = [2, 32], strides = [1, 1]} : vector<2x128xf32> to vector<2x32xf32>
    %157 = arith.negf %156 : vector<2x32xf32>
    %158 = math.exp %157 : vector<2x32xf32>
    %cst_38 = arith.constant 1.000000e+00 : f32
    %159 = vector.broadcast %cst_38 : f32 to vector<2x32xf32>
    %160 = arith.addf %159, %158 : vector<2x32xf32>
    %161 = arith.divf %159, %160 : vector<2x32xf32>
    %162 = arith.mulf %153, %132 : vector<2x32xf32>
    %163 = arith.mulf %147, %155 : vector<2x32xf32>
    %164 = arith.addf %162, %163 : vector<2x32xf32>
    %165 = math.tanh %164 : vector<2x32xf32>
    %166 = arith.mulf %161, %165 : vector<2x32xf32>
    %c4 = arith.constant 4 : index
    %c0_39 = arith.constant 0 : index
    %c0_40 = arith.constant 0 : index
    %167 = vector.load %arg12[%c4, %c0_39, %c0_40] : memref<8x2x32xf32, #tpu.memory_space<vmem>>, vector<1x2x32xf32>
    %168 = vector.shape_cast %167 : vector<1x2x32xf32> to vector<2x32xf32>
    %169 = vector.shape_cast %166 : vector<2x32xf32> to vector<1x2x32xf32>
    tpu.vector_store %arg12[%c4, %c0_39, %c0_40], %169 {strides = array<i32>} : memref<8x2x32xf32, #tpu.memory_space<vmem>>, vector<1x2x32xf32>,
    %170 = vector.extract_strided_slice %7 {offsets = [0, 5, 0], sizes = [2, 1, 128], strides = [1, 1, 1]} : vector<2x8x128xf32> to vector<2x1x128xf32>
    %171 = vector.shape_cast %170 : vector<2x1x128xf32> to vector<2x128xf32>
    %cst_41 = arith.constant dense<0.000000e+00> : vector<2x128xf32>
    %172 = tpu.matmul %166, %2, %cst_41 {dimension_numbers = #tpu.dot_dimension_numbers<[1], [0], [0], [1], [0, 0, 1, 1], [], []>} : vector<2x32xf32>, vector<32x128xf32>, vector<2x128xf32> -> vector<2x128xf32>
    %173 = arith.addf %171, %172 : vector<2x128xf32>
    %174 = vector.extract_strided_slice %173 {offsets = [0, 0], sizes = [2, 32], strides = [1, 1]} : vector<2x128xf32> to vector<2x32xf32>
    %175 = arith.negf %174 : vector<2x32xf32>
    %176 = math.exp %175 : vector<2x32xf32>
    %cst_42 = arith.constant 1.000000e+00 : f32
    %177 = vector.broadcast %cst_42 : f32 to vector<2x32xf32>
    %178 = arith.addf %177, %176 : vector<2x32xf32>
    %179 = arith.divf %177, %178 : vector<2x32xf32>
    %180 = vector.extract_strided_slice %173 {offsets = [0, 32], sizes = [2, 32], strides = [1, 1]} : vector<2x128xf32> to vector<2x32xf32>
    %181 = arith.negf %180 : vector<2x32xf32>
    %182 = math.exp %181 : vector<2x32xf32>
    %cst_43 = arith.constant 1.000000e+00 : f32
    %183 = vector.broadcast %cst_43 : f32 to vector<2x32xf32>
    %184 = arith.addf %183, %182 : vector<2x32xf32>
    %185 = arith.divf %183, %184 : vector<2x32xf32>
    %186 = vector.extract_strided_slice %173 {offsets = [0, 64], sizes = [2, 32], strides = [1, 1]} : vector<2x128xf32> to vector<2x32xf32>
    %187 = math.tanh %186 : vector<2x32xf32>
    %188 = vector.extract_strided_slice %173 {offsets = [0, 96], sizes = [2, 32], strides = [1, 1]} : vector<2x128xf32> to vector<2x32xf32>
    %189 = arith.negf %188 : vector<2x32xf32>
    %190 = math.exp %189 : vector<2x32xf32>
    %cst_44 = arith.constant 1.000000e+00 : f32
    %191 = vector.broadcast %cst_44 : f32 to vector<2x32xf32>
    %192 = arith.addf %191, %190 : vector<2x32xf32>
    %193 = arith.divf %191, %192 : vector<2x32xf32>
    %194 = arith.mulf %185, %164 : vector<2x32xf32>
    %195 = arith.mulf %179, %187 : vector<2x32xf32>
    %196 = arith.addf %194, %195 : vector<2x32xf32>
    %197 = math.tanh %196 : vector<2x32xf32>
    %198 = arith.mulf %193, %197 : vector<2x32xf32>
    %c5 = arith.constant 5 : index
    %c0_45 = arith.constant 0 : index
    %c0_46 = arith.constant 0 : index
    %199 = vector.load %arg12[%c5, %c0_45, %c0_46] : memref<8x2x32xf32, #tpu.memory_space<vmem>>, vector<1x2x32xf32>
    %200 = vector.shape_cast %199 : vector<1x2x32xf32> to vector<2x32xf32>
    %201 = vector.shape_cast %198 : vector<2x32xf32> to vector<1x2x32xf32>
    tpu.vector_store %arg12[%c5, %c0_45, %c0_46], %201 {strides = array<i32>} : memref<8x2x32xf32, #tpu.memory_space<vmem>>, vector<1x2x32xf32>,
    %202 = vector.extract_strided_slice %7 {offsets = [0, 6, 0], sizes = [2, 1, 128], strides = [1, 1, 1]} : vector<2x8x128xf32> to vector<2x1x128xf32>
    %203 = vector.shape_cast %202 : vector<2x1x128xf32> to vector<2x128xf32>
    %cst_47 = arith.constant dense<0.000000e+00> : vector<2x128xf32>
    %204 = tpu.matmul %198, %2, %cst_47 {dimension_numbers = #tpu.dot_dimension_numbers<[1], [0], [0], [1], [0, 0, 1, 1], [], []>} : vector<2x32xf32>, vector<32x128xf32>, vector<2x128xf32> -> vector<2x128xf32>
    %205 = arith.addf %203, %204 : vector<2x128xf32>
    %206 = vector.extract_strided_slice %205 {offsets = [0, 0], sizes = [2, 32], strides = [1, 1]} : vector<2x128xf32> to vector<2x32xf32>
    %207 = arith.negf %206 : vector<2x32xf32>
    %208 = math.exp %207 : vector<2x32xf32>
    %cst_48 = arith.constant 1.000000e+00 : f32
    %209 = vector.broadcast %cst_48 : f32 to vector<2x32xf32>
    %210 = arith.addf %209, %208 : vector<2x32xf32>
    %211 = arith.divf %209, %210 : vector<2x32xf32>
    %212 = vector.extract_strided_slice %205 {offsets = [0, 32], sizes = [2, 32], strides = [1, 1]} : vector<2x128xf32> to vector<2x32xf32>
    %213 = arith.negf %212 : vector<2x32xf32>
    %214 = math.exp %213 : vector<2x32xf32>
    %cst_49 = arith.constant 1.000000e+00 : f32
    %215 = vector.broadcast %cst_49 : f32 to vector<2x32xf32>
    %216 = arith.addf %215, %214 : vector<2x32xf32>
    %217 = arith.divf %215, %216 : vector<2x32xf32>
    %218 = vector.extract_strided_slice %205 {offsets = [0, 64], sizes = [2, 32], strides = [1, 1]} : vector<2x128xf32> to vector<2x32xf32>
    %219 = math.tanh %218 : vector<2x32xf32>
    %220 = vector.extract_strided_slice %205 {offsets = [0, 96], sizes = [2, 32], strides = [1, 1]} : vector<2x128xf32> to vector<2x32xf32>
    %221 = arith.negf %220 : vector<2x32xf32>
    %222 = math.exp %221 : vector<2x32xf32>
    %cst_50 = arith.constant 1.000000e+00 : f32
    %223 = vector.broadcast %cst_50 : f32 to vector<2x32xf32>
    %224 = arith.addf %223, %222 : vector<2x32xf32>
    %225 = arith.divf %223, %224 : vector<2x32xf32>
    %226 = arith.mulf %217, %196 : vector<2x32xf32>
    %227 = arith.mulf %211, %219 : vector<2x32xf32>
    %228 = arith.addf %226, %227 : vector<2x32xf32>
    %229 = math.tanh %228 : vector<2x32xf32>
    %230 = arith.mulf %225, %229 : vector<2x32xf32>
    %c6 = arith.constant 6 : index
    %c0_51 = arith.constant 0 : index
    %c0_52 = arith.constant 0 : index
    %231 = vector.load %arg12[%c6, %c0_51, %c0_52] : memref<8x2x32xf32, #tpu.memory_space<vmem>>, vector<1x2x32xf32>
    %232 = vector.shape_cast %231 : vector<1x2x32xf32> to vector<2x32xf32>
    %233 = vector.shape_cast %230 : vector<2x32xf32> to vector<1x2x32xf32>
    tpu.vector_store %arg12[%c6, %c0_51, %c0_52], %233 {strides = array<i32>} : memref<8x2x32xf32, #tpu.memory_space<vmem>>, vector<1x2x32xf32>,
    %234 = vector.extract_strided_slice %7 {offsets = [0, 7, 0], sizes = [2, 1, 128], strides = [1, 1, 1]} : vector<2x8x128xf32> to vector<2x1x128xf32>
    %235 = vector.shape_cast %234 : vector<2x1x128xf32> to vector<2x128xf32>
    %cst_53 = arith.constant dense<0.000000e+00> : vector<2x128xf32>
    %236 = tpu.matmul %230, %2, %cst_53 {dimension_numbers = #tpu.dot_dimension_numbers<[1], [0], [0], [1], [0, 0, 1, 1], [], []>} : vector<2x32xf32>, vector<32x128xf32>, vector<2x128xf32> -> vector<2x128xf32>
    %237 = arith.addf %235, %236 : vector<2x128xf32>
    %238 = vector.extract_strided_slice %237 {offsets = [0, 0], sizes = [2, 32], strides = [1, 1]} : vector<2x128xf32> to vector<2x32xf32>
    %239 = arith.negf %238 : vector<2x32xf32>
    %240 = math.exp %239 : vector<2x32xf32>
    %cst_54 = arith.constant 1.000000e+00 : f32
    %241 = vector.broadcast %cst_54 : f32 to vector<2x32xf32>
    %242 = arith.addf %241, %240 : vector<2x32xf32>
    %243 = arith.divf %241, %242 : vector<2x32xf32>
    %244 = vector.extract_strided_slice %237 {offsets = [0, 32], sizes = [2, 32], strides = [1, 1]} : vector<2x128xf32> to vector<2x32xf32>
    %245 = arith.negf %244 : vector<2x32xf32>
    %246 = math.exp %245 : vector<2x32xf32>
    %cst_55 = arith.constant 1.000000e+00 : f32
    %247 = vector.broadcast %cst_55 : f32 to vector<2x32xf32>
    %248 = arith.addf %247, %246 : vector<2x32xf32>
    %249 = arith.divf %247, %248 : vector<2x32xf32>
    %250 = vector.extract_strided_slice %237 {offsets = [0, 64], sizes = [2, 32], strides = [1, 1]} : vector<2x128xf32> to vector<2x32xf32>
    %251 = math.tanh %250 : vector<2x32xf32>
    %252 = vector.extract_strided_slice %237 {offsets = [0, 96], sizes = [2, 32], strides = [1, 1]} : vector<2x128xf32> to vector<2x32xf32>
    %253 = arith.negf %252 : vector<2x32xf32>
    %254 = math.exp %253 : vector<2x32xf32>
    %cst_56 = arith.constant 1.000000e+00 : f32
    %255 = vector.broadcast %cst_56 : f32 to vector<2x32xf32>
    %256 = arith.addf %255, %254 : vector<2x32xf32>
    %257 = arith.divf %255, %256 : vector<2x32xf32>
    %258 = arith.mulf %249, %228 : vector<2x32xf32>
    %259 = arith.mulf %243, %251 : vector<2x32xf32>
    %260 = arith.addf %258, %259 : vector<2x32xf32>
    %261 = math.tanh %260 : vector<2x32xf32>
    %262 = arith.mulf %257, %261 : vector<2x32xf32>
    %c7 = arith.constant 7 : index
    %c0_57 = arith.constant 0 : index
    %c0_58 = arith.constant 0 : index
    %263 = vector.load %arg12[%c7, %c0_57, %c0_58] : memref<8x2x32xf32, #tpu.memory_space<vmem>>, vector<1x2x32xf32>
    %264 = vector.shape_cast %263 : vector<1x2x32xf32> to vector<2x32xf32>
    %265 = vector.shape_cast %262 : vector<2x32xf32> to vector<1x2x32xf32>
    tpu.vector_store %arg12[%c7, %c0_57, %c0_58], %265 {strides = array<i32>} : memref<8x2x32xf32, #tpu.memory_space<vmem>>, vector<1x2x32xf32>,
    %c0_59 = arith.constant 0 : index
    %c0_60 = arith.constant 0 : index
    %266 = vector.load %arg4[%c0_59, %c0_60] : memref<32x128xf32, #tpu.memory_space<vmem>>, vector<32x128xf32>
    %c0_61 = arith.constant 0 : index
    %c0_62 = arith.constant 0 : index
    %267 = vector.load %arg5[%c0_61, %c0_62] : memref<32x128xf32, #tpu.memory_space<vmem>>, vector<32x128xf32>
    %c0_63 = arith.constant 0 : index
    %c0_64 = arith.constant 0 : index
    %268 = vector.load %arg6[%c0_63, %c0_64] : memref<1x128xf32, #tpu.memory_space<vmem>>, vector<1x128xf32>
    %c0_65 = arith.constant 0 : index
    %c0_66 = arith.constant 0 : index
    %c0_67 = arith.constant 0 : index
    %269 = vector.load %arg12[%c0_65, %c0_66, %c0_67] : memref<8x2x32xf32, #tpu.memory_space<vmem>>, vector<8x2x32xf32>
    "tpu.trace_start"() <{level = 10 : i32, message = "sbh,hg->sbg"}> : () -> ()
    %cst_68 = arith.constant dense<0.000000e+00> : vector<8x2x128xf32>
    %270 = tpu.matmul %269, %266, %cst_68 {dimension_numbers = #tpu.dot_dimension_numbers<[2], [0], [0, 1], [1], [0, 0, 0, 1, 1, 1], [], []>} : vector<8x2x32xf32>, vector<32x128xf32>, vector<8x2x128xf32> -> vector<8x2x128xf32>
    "tpu.trace_stop"() : () -> ()
    %271 = vector.shape_cast %268 : vector<1x128xf32> to vector<1x1x128xf32>
    %272 = vector.broadcast %271 : vector<1x1x128xf32> to vector<8x2x128xf32>
    %273 = arith.addf %270, %272 : vector<8x2x128xf32>
    %cst_69 = arith.constant 0.000000e+00 : f32
    %274 = vector.broadcast %cst_69 : f32 to vector<2x32xf32>
    %cst_70 = arith.constant 0.000000e+00 : f32
    %275 = vector.broadcast %cst_70 : f32 to vector<2x32xf32>
    %276 = vector.extract_strided_slice %273 {offsets = [0, 0, 0], sizes = [1, 2, 128], strides = [1, 1, 1]} : vector<8x2x128xf32> to vector<1x2x128xf32>
    %277 = vector.shape_cast %276 : vector<1x2x128xf32> to vector<2x128xf32>
    %cst_71 = arith.constant dense<0.000000e+00> : vector<2x128xf32>
    %278 = tpu.matmul %274, %267, %cst_71 {dimension_numbers = #tpu.dot_dimension_numbers<[1], [0], [0], [1], [0, 0, 1, 1], [], []>} : vector<2x32xf32>, vector<32x128xf32>, vector<2x128xf32> -> vector<2x128xf32>
    %279 = arith.addf %277, %278 : vector<2x128xf32>
    %280 = vector.extract_strided_slice %279 {offsets = [0, 0], sizes = [2, 32], strides = [1, 1]} : vector<2x128xf32> to vector<2x32xf32>
    %281 = arith.negf %280 : vector<2x32xf32>
    %282 = math.exp %281 : vector<2x32xf32>
    %cst_72 = arith.constant 1.000000e+00 : f32
    %283 = vector.broadcast %cst_72 : f32 to vector<2x32xf32>
    %284 = arith.addf %283, %282 : vector<2x32xf32>
    %285 = arith.divf %283, %284 : vector<2x32xf32>
    %286 = vector.extract_strided_slice %279 {offsets = [0, 32], sizes = [2, 32], strides = [1, 1]} : vector<2x128xf32> to vector<2x32xf32>
    %287 = arith.negf %286 : vector<2x32xf32>
    %288 = math.exp %287 : vector<2x32xf32>
    %cst_73 = arith.constant 1.000000e+00 : f32
    %289 = vector.broadcast %cst_73 : f32 to vector<2x32xf32>
    %290 = arith.addf %289, %288 : vector<2x32xf32>
    %291 = arith.divf %289, %290 : vector<2x32xf32>
    %292 = vector.extract_strided_slice %279 {offsets = [0, 64], sizes = [2, 32], strides = [1, 1]} : vector<2x128xf32> to vector<2x32xf32>
    %293 = math.tanh %292 : vector<2x32xf32>
    %294 = vector.extract_strided_slice %279 {offsets = [0, 96], sizes = [2, 32], strides = [1, 1]} : vector<2x128xf32> to vector<2x32xf32>
    %295 = arith.negf %294 : vector<2x32xf32>
    %296 = math.exp %295 : vector<2x32xf32>
    %cst_74 = arith.constant 1.000000e+00 : f32
    %297 = vector.broadcast %cst_74 : f32 to vector<2x32xf32>
    %298 = arith.addf %297, %296 : vector<2x32xf32>
    %299 = arith.divf %297, %298 : vector<2x32xf32>
    %300 = arith.mulf %291, %275 : vector<2x32xf32>
    %301 = arith.mulf %285, %293 : vector<2x32xf32>
    %302 = arith.addf %300, %301 : vector<2x32xf32>
    %303 = math.tanh %302 : vector<2x32xf32>
    %304 = arith.mulf %299, %303 : vector<2x32xf32>
    %305 = vector.extract_strided_slice %273 {offsets = [1, 0, 0], sizes = [1, 2, 128], strides = [1, 1, 1]} : vector<8x2x128xf32> to vector<1x2x128xf32>
    %306 = vector.shape_cast %305 : vector<1x2x128xf32> to vector<2x128xf32>
    %cst_75 = arith.constant dense<0.000000e+00> : vector<2x128xf32>
    %307 = tpu.matmul %304, %267, %cst_75 {dimension_numbers = #tpu.dot_dimension_numbers<[1], [0], [0], [1], [0, 0, 1, 1], [], []>} : vector<2x32xf32>, vector<32x128xf32>, vector<2x128xf32> -> vector<2x128xf32>
    %308 = arith.addf %306, %307 : vector<2x128xf32>
    %309 = vector.extract_strided_slice %308 {offsets = [0, 0], sizes = [2, 32], strides = [1, 1]} : vector<2x128xf32> to vector<2x32xf32>
    %310 = arith.negf %309 : vector<2x32xf32>
    %311 = math.exp %310 : vector<2x32xf32>
    %cst_76 = arith.constant 1.000000e+00 : f32
    %312 = vector.broadcast %cst_76 : f32 to vector<2x32xf32>
    %313 = arith.addf %312, %311 : vector<2x32xf32>
    %314 = arith.divf %312, %313 : vector<2x32xf32>
    %315 = vector.extract_strided_slice %308 {offsets = [0, 32], sizes = [2, 32], strides = [1, 1]} : vector<2x128xf32> to vector<2x32xf32>
    %316 = arith.negf %315 : vector<2x32xf32>
    %317 = math.exp %316 : vector<2x32xf32>
    %cst_77 = arith.constant 1.000000e+00 : f32
    %318 = vector.broadcast %cst_77 : f32 to vector<2x32xf32>
    %319 = arith.addf %318, %317 : vector<2x32xf32>
    %320 = arith.divf %318, %319 : vector<2x32xf32>
    %321 = vector.extract_strided_slice %308 {offsets = [0, 64], sizes = [2, 32], strides = [1, 1]} : vector<2x128xf32> to vector<2x32xf32>
    %322 = math.tanh %321 : vector<2x32xf32>
    %323 = vector.extract_strided_slice %308 {offsets = [0, 96], sizes = [2, 32], strides = [1, 1]} : vector<2x128xf32> to vector<2x32xf32>
    %324 = arith.negf %323 : vector<2x32xf32>
    %325 = math.exp %324 : vector<2x32xf32>
    %cst_78 = arith.constant 1.000000e+00 : f32
    %326 = vector.broadcast %cst_78 : f32 to vector<2x32xf32>
    %327 = arith.addf %326, %325 : vector<2x32xf32>
    %328 = arith.divf %326, %327 : vector<2x32xf32>
    %329 = arith.mulf %320, %302 : vector<2x32xf32>
    %330 = arith.mulf %314, %322 : vector<2x32xf32>
    %331 = arith.addf %329, %330 : vector<2x32xf32>
    %332 = math.tanh %331 : vector<2x32xf32>
    %333 = arith.mulf %328, %332 : vector<2x32xf32>
    %334 = vector.extract_strided_slice %273 {offsets = [2, 0, 0], sizes = [1, 2, 128], strides = [1, 1, 1]} : vector<8x2x128xf32> to vector<1x2x128xf32>
    %335 = vector.shape_cast %334 : vector<1x2x128xf32> to vector<2x128xf32>
    %cst_79 = arith.constant dense<0.000000e+00> : vector<2x128xf32>
    %336 = tpu.matmul %333, %267, %cst_79 {dimension_numbers = #tpu.dot_dimension_numbers<[1], [0], [0], [1], [0, 0, 1, 1], [], []>} : vector<2x32xf32>, vector<32x128xf32>, vector<2x128xf32> -> vector<2x128xf32>
    %337 = arith.addf %335, %336 : vector<2x128xf32>
    %338 = vector.extract_strided_slice %337 {offsets = [0, 0], sizes = [2, 32], strides = [1, 1]} : vector<2x128xf32> to vector<2x32xf32>
    %339 = arith.negf %338 : vector<2x32xf32>
    %340 = math.exp %339 : vector<2x32xf32>
    %cst_80 = arith.constant 1.000000e+00 : f32
    %341 = vector.broadcast %cst_80 : f32 to vector<2x32xf32>
    %342 = arith.addf %341, %340 : vector<2x32xf32>
    %343 = arith.divf %341, %342 : vector<2x32xf32>
    %344 = vector.extract_strided_slice %337 {offsets = [0, 32], sizes = [2, 32], strides = [1, 1]} : vector<2x128xf32> to vector<2x32xf32>
    %345 = arith.negf %344 : vector<2x32xf32>
    %346 = math.exp %345 : vector<2x32xf32>
    %cst_81 = arith.constant 1.000000e+00 : f32
    %347 = vector.broadcast %cst_81 : f32 to vector<2x32xf32>
    %348 = arith.addf %347, %346 : vector<2x32xf32>
    %349 = arith.divf %347, %348 : vector<2x32xf32>
    %350 = vector.extract_strided_slice %337 {offsets = [0, 64], sizes = [2, 32], strides = [1, 1]} : vector<2x128xf32> to vector<2x32xf32>
    %351 = math.tanh %350 : vector<2x32xf32>
    %352 = vector.extract_strided_slice %337 {offsets = [0, 96], sizes = [2, 32], strides = [1, 1]} : vector<2x128xf32> to vector<2x32xf32>
    %353 = arith.negf %352 : vector<2x32xf32>
    %354 = math.exp %353 : vector<2x32xf32>
    %cst_82 = arith.constant 1.000000e+00 : f32
    %355 = vector.broadcast %cst_82 : f32 to vector<2x32xf32>
    %356 = arith.addf %355, %354 : vector<2x32xf32>
    %357 = arith.divf %355, %356 : vector<2x32xf32>
    %358 = arith.mulf %349, %331 : vector<2x32xf32>
    %359 = arith.mulf %343, %351 : vector<2x32xf32>
    %360 = arith.addf %358, %359 : vector<2x32xf32>
    %361 = math.tanh %360 : vector<2x32xf32>
    %362 = arith.mulf %357, %361 : vector<2x32xf32>
    %363 = vector.extract_strided_slice %273 {offsets = [3, 0, 0], sizes = [1, 2, 128], strides = [1, 1, 1]} : vector<8x2x128xf32> to vector<1x2x128xf32>
    %364 = vector.shape_cast %363 : vector<1x2x128xf32> to vector<2x128xf32>
    %cst_83 = arith.constant dense<0.000000e+00> : vector<2x128xf32>
    %365 = tpu.matmul %362, %267, %cst_83 {dimension_numbers = #tpu.dot_dimension_numbers<[1], [0], [0], [1], [0, 0, 1, 1], [], []>} : vector<2x32xf32>, vector<32x128xf32>, vector<2x128xf32> -> vector<2x128xf32>
    %366 = arith.addf %364, %365 : vector<2x128xf32>
    %367 = vector.extract_strided_slice %366 {offsets = [0, 0], sizes = [2, 32], strides = [1, 1]} : vector<2x128xf32> to vector<2x32xf32>
    %368 = arith.negf %367 : vector<2x32xf32>
    %369 = math.exp %368 : vector<2x32xf32>
    %cst_84 = arith.constant 1.000000e+00 : f32
    %370 = vector.broadcast %cst_84 : f32 to vector<2x32xf32>
    %371 = arith.addf %370, %369 : vector<2x32xf32>
    %372 = arith.divf %370, %371 : vector<2x32xf32>
    %373 = vector.extract_strided_slice %366 {offsets = [0, 32], sizes = [2, 32], strides = [1, 1]} : vector<2x128xf32> to vector<2x32xf32>
    %374 = arith.negf %373 : vector<2x32xf32>
    %375 = math.exp %374 : vector<2x32xf32>
    %cst_85 = arith.constant 1.000000e+00 : f32
    %376 = vector.broadcast %cst_85 : f32 to vector<2x32xf32>
    %377 = arith.addf %376, %375 : vector<2x32xf32>
    %378 = arith.divf %376, %377 : vector<2x32xf32>
    %379 = vector.extract_strided_slice %366 {offsets = [0, 64], sizes = [2, 32], strides = [1, 1]} : vector<2x128xf32> to vector<2x32xf32>
    %380 = math.tanh %379 : vector<2x32xf32>
    %381 = vector.extract_strided_slice %366 {offsets = [0, 96], sizes = [2, 32], strides = [1, 1]} : vector<2x128xf32> to vector<2x32xf32>
    %382 = arith.negf %381 : vector<2x32xf32>
    %383 = math.exp %382 : vector<2x32xf32>
    %cst_86 = arith.constant 1.000000e+00 : f32
    %384 = vector.broadcast %cst_86 : f32 to vector<2x32xf32>
    %385 = arith.addf %384, %383 : vector<2x32xf32>
    %386 = arith.divf %384, %385 : vector<2x32xf32>
    %387 = arith.mulf %378, %360 : vector<2x32xf32>
    %388 = arith.mulf %372, %380 : vector<2x32xf32>
    %389 = arith.addf %387, %388 : vector<2x32xf32>
    %390 = math.tanh %389 : vector<2x32xf32>
    %391 = arith.mulf %386, %390 : vector<2x32xf32>
    %392 = vector.extract_strided_slice %273 {offsets = [4, 0, 0], sizes = [1, 2, 128], strides = [1, 1, 1]} : vector<8x2x128xf32> to vector<1x2x128xf32>
    %393 = vector.shape_cast %392 : vector<1x2x128xf32> to vector<2x128xf32>
    %cst_87 = arith.constant dense<0.000000e+00> : vector<2x128xf32>
    %394 = tpu.matmul %391, %267, %cst_87 {dimension_numbers = #tpu.dot_dimension_numbers<[1], [0], [0], [1], [0, 0, 1, 1], [], []>} : vector<2x32xf32>, vector<32x128xf32>, vector<2x128xf32> -> vector<2x128xf32>
    %395 = arith.addf %393, %394 : vector<2x128xf32>
    %396 = vector.extract_strided_slice %395 {offsets = [0, 0], sizes = [2, 32], strides = [1, 1]} : vector<2x128xf32> to vector<2x32xf32>
    %397 = arith.negf %396 : vector<2x32xf32>
    %398 = math.exp %397 : vector<2x32xf32>
    %cst_88 = arith.constant 1.000000e+00 : f32
    %399 = vector.broadcast %cst_88 : f32 to vector<2x32xf32>
    %400 = arith.addf %399, %398 : vector<2x32xf32>
    %401 = arith.divf %399, %400 : vector<2x32xf32>
    %402 = vector.extract_strided_slice %395 {offsets = [0, 32], sizes = [2, 32], strides = [1, 1]} : vector<2x128xf32> to vector<2x32xf32>
    %403 = arith.negf %402 : vector<2x32xf32>
    %404 = math.exp %403 : vector<2x32xf32>
    %cst_89 = arith.constant 1.000000e+00 : f32
    %405 = vector.broadcast %cst_89 : f32 to vector<2x32xf32>
    %406 = arith.addf %405, %404 : vector<2x32xf32>
    %407 = arith.divf %405, %406 : vector<2x32xf32>
    %408 = vector.extract_strided_slice %395 {offsets = [0, 64], sizes = [2, 32], strides = [1, 1]} : vector<2x128xf32> to vector<2x32xf32>
    %409 = math.tanh %408 : vector<2x32xf32>
    %410 = vector.extract_strided_slice %395 {offsets = [0, 96], sizes = [2, 32], strides = [1, 1]} : vector<2x128xf32> to vector<2x32xf32>
    %411 = arith.negf %410 : vector<2x32xf32>
    %412 = math.exp %411 : vector<2x32xf32>
    %cst_90 = arith.constant 1.000000e+00 : f32
    %413 = vector.broadcast %cst_90 : f32 to vector<2x32xf32>
    %414 = arith.addf %413, %412 : vector<2x32xf32>
    %415 = arith.divf %413, %414 : vector<2x32xf32>
    %416 = arith.mulf %407, %389 : vector<2x32xf32>
    %417 = arith.mulf %401, %409 : vector<2x32xf32>
    %418 = arith.addf %416, %417 : vector<2x32xf32>
    %419 = math.tanh %418 : vector<2x32xf32>
    %420 = arith.mulf %415, %419 : vector<2x32xf32>
    %421 = vector.extract_strided_slice %273 {offsets = [5, 0, 0], sizes = [1, 2, 128], strides = [1, 1, 1]} : vector<8x2x128xf32> to vector<1x2x128xf32>
    %422 = vector.shape_cast %421 : vector<1x2x128xf32> to vector<2x128xf32>
    %cst_91 = arith.constant dense<0.000000e+00> : vector<2x128xf32>
    %423 = tpu.matmul %420, %267, %cst_91 {dimension_numbers = #tpu.dot_dimension_numbers<[1], [0], [0], [1], [0, 0, 1, 1], [], []>} : vector<2x32xf32>, vector<32x128xf32>, vector<2x128xf32> -> vector<2x128xf32>
    %424 = arith.addf %422, %423 : vector<2x128xf32>
    %425 = vector.extract_strided_slice %424 {offsets = [0, 0], sizes = [2, 32], strides = [1, 1]} : vector<2x128xf32> to vector<2x32xf32>
    %426 = arith.negf %425 : vector<2x32xf32>
    %427 = math.exp %426 : vector<2x32xf32>
    %cst_92 = arith.constant 1.000000e+00 : f32
    %428 = vector.broadcast %cst_92 : f32 to vector<2x32xf32>
    %429 = arith.addf %428, %427 : vector<2x32xf32>
    %430 = arith.divf %428, %429 : vector<2x32xf32>
    %431 = vector.extract_strided_slice %424 {offsets = [0, 32], sizes = [2, 32], strides = [1, 1]} : vector<2x128xf32> to vector<2x32xf32>
    %432 = arith.negf %431 : vector<2x32xf32>
    %433 = math.exp %432 : vector<2x32xf32>
    %cst_93 = arith.constant 1.000000e+00 : f32
    %434 = vector.broadcast %cst_93 : f32 to vector<2x32xf32>
    %435 = arith.addf %434, %433 : vector<2x32xf32>
    %436 = arith.divf %434, %435 : vector<2x32xf32>
    %437 = vector.extract_strided_slice %424 {offsets = [0, 64], sizes = [2, 32], strides = [1, 1]} : vector<2x128xf32> to vector<2x32xf32>
    %438 = math.tanh %437 : vector<2x32xf32>
    %439 = vector.extract_strided_slice %424 {offsets = [0, 96], sizes = [2, 32], strides = [1, 1]} : vector<2x128xf32> to vector<2x32xf32>
    %440 = arith.negf %439 : vector<2x32xf32>
    %441 = math.exp %440 : vector<2x32xf32>
    %cst_94 = arith.constant 1.000000e+00 : f32
    %442 = vector.broadcast %cst_94 : f32 to vector<2x32xf32>
    %443 = arith.addf %442, %441 : vector<2x32xf32>
    %444 = arith.divf %442, %443 : vector<2x32xf32>
    %445 = arith.mulf %436, %418 : vector<2x32xf32>
    %446 = arith.mulf %430, %438 : vector<2x32xf32>
    %447 = arith.addf %445, %446 : vector<2x32xf32>
    %448 = math.tanh %447 : vector<2x32xf32>
    %449 = arith.mulf %444, %448 : vector<2x32xf32>
    %450 = vector.extract_strided_slice %273 {offsets = [6, 0, 0], sizes = [1, 2, 128], strides = [1, 1, 1]} : vector<8x2x128xf32> to vector<1x2x128xf32>
    %451 = vector.shape_cast %450 : vector<1x2x128xf32> to vector<2x128xf32>
    %cst_95 = arith.constant dense<0.000000e+00> : vector<2x128xf32>
    %452 = tpu.matmul %449, %267, %cst_95 {dimension_numbers = #tpu.dot_dimension_numbers<[1], [0], [0], [1], [0, 0, 1, 1], [], []>} : vector<2x32xf32>, vector<32x128xf32>, vector<2x128xf32> -> vector<2x128xf32>
    %453 = arith.addf %451, %452 : vector<2x128xf32>
    %454 = vector.extract_strided_slice %453 {offsets = [0, 0], sizes = [2, 32], strides = [1, 1]} : vector<2x128xf32> to vector<2x32xf32>
    %455 = arith.negf %454 : vector<2x32xf32>
    %456 = math.exp %455 : vector<2x32xf32>
    %cst_96 = arith.constant 1.000000e+00 : f32
    %457 = vector.broadcast %cst_96 : f32 to vector<2x32xf32>
    %458 = arith.addf %457, %456 : vector<2x32xf32>
    %459 = arith.divf %457, %458 : vector<2x32xf32>
    %460 = vector.extract_strided_slice %453 {offsets = [0, 32], sizes = [2, 32], strides = [1, 1]} : vector<2x128xf32> to vector<2x32xf32>
    %461 = arith.negf %460 : vector<2x32xf32>
    %462 = math.exp %461 : vector<2x32xf32>
    %cst_97 = arith.constant 1.000000e+00 : f32
    %463 = vector.broadcast %cst_97 : f32 to vector<2x32xf32>
    %464 = arith.addf %463, %462 : vector<2x32xf32>
    %465 = arith.divf %463, %464 : vector<2x32xf32>
    %466 = vector.extract_strided_slice %453 {offsets = [0, 64], sizes = [2, 32], strides = [1, 1]} : vector<2x128xf32> to vector<2x32xf32>
    %467 = math.tanh %466 : vector<2x32xf32>
    %468 = vector.extract_strided_slice %453 {offsets = [0, 96], sizes = [2, 32], strides = [1, 1]} : vector<2x128xf32> to vector<2x32xf32>
    %469 = arith.negf %468 : vector<2x32xf32>
    %470 = math.exp %469 : vector<2x32xf32>
    %cst_98 = arith.constant 1.000000e+00 : f32
    %471 = vector.broadcast %cst_98 : f32 to vector<2x32xf32>
    %472 = arith.addf %471, %470 : vector<2x32xf32>
    %473 = arith.divf %471, %472 : vector<2x32xf32>
    %474 = arith.mulf %465, %447 : vector<2x32xf32>
    %475 = arith.mulf %459, %467 : vector<2x32xf32>
    %476 = arith.addf %474, %475 : vector<2x32xf32>
    %477 = math.tanh %476 : vector<2x32xf32>
    %478 = arith.mulf %473, %477 : vector<2x32xf32>
    %479 = vector.extract_strided_slice %273 {offsets = [7, 0, 0], sizes = [1, 2, 128], strides = [1, 1, 1]} : vector<8x2x128xf32> to vector<1x2x128xf32>
    %480 = vector.shape_cast %479 : vector<1x2x128xf32> to vector<2x128xf32>
    %cst_99 = arith.constant dense<0.000000e+00> : vector<2x128xf32>
    %481 = tpu.matmul %478, %267, %cst_99 {dimension_numbers = #tpu.dot_dimension_numbers<[1], [0], [0], [1], [0, 0, 1, 1], [], []>} : vector<2x32xf32>, vector<32x128xf32>, vector<2x128xf32> -> vector<2x128xf32>
    %482 = arith.addf %480, %481 : vector<2x128xf32>
    %483 = vector.extract_strided_slice %482 {offsets = [0, 0], sizes = [2, 32], strides = [1, 1]} : vector<2x128xf32> to vector<2x32xf32>
    %484 = arith.negf %483 : vector<2x32xf32>
    %485 = math.exp %484 : vector<2x32xf32>
    %cst_100 = arith.constant 1.000000e+00 : f32
    %486 = vector.broadcast %cst_100 : f32 to vector<2x32xf32>
    %487 = arith.addf %486, %485 : vector<2x32xf32>
    %488 = arith.divf %486, %487 : vector<2x32xf32>
    %489 = vector.extract_strided_slice %482 {offsets = [0, 32], sizes = [2, 32], strides = [1, 1]} : vector<2x128xf32> to vector<2x32xf32>
    %490 = arith.negf %489 : vector<2x32xf32>
    %491 = math.exp %490 : vector<2x32xf32>
    %cst_101 = arith.constant 1.000000e+00 : f32
    %492 = vector.broadcast %cst_101 : f32 to vector<2x32xf32>
    %493 = arith.addf %492, %491 : vector<2x32xf32>
    %494 = arith.divf %492, %493 : vector<2x32xf32>
    %495 = vector.extract_strided_slice %482 {offsets = [0, 64], sizes = [2, 32], strides = [1, 1]} : vector<2x128xf32> to vector<2x32xf32>
    %496 = math.tanh %495 : vector<2x32xf32>
    %497 = vector.extract_strided_slice %482 {offsets = [0, 96], sizes = [2, 32], strides = [1, 1]} : vector<2x128xf32> to vector<2x32xf32>
    %498 = arith.negf %497 : vector<2x32xf32>
    %499 = math.exp %498 : vector<2x32xf32>
    %cst_102 = arith.constant 1.000000e+00 : f32
    %500 = vector.broadcast %cst_102 : f32 to vector<2x32xf32>
    %501 = arith.addf %500, %499 : vector<2x32xf32>
    %502 = arith.divf %500, %501 : vector<2x32xf32>
    %503 = arith.mulf %494, %476 : vector<2x32xf32>
    %504 = arith.mulf %488, %496 : vector<2x32xf32>
    %505 = arith.addf %503, %504 : vector<2x32xf32>
    %506 = math.tanh %505 : vector<2x32xf32>
    %507 = arith.mulf %502, %506 : vector<2x32xf32>
    %cst_103 = arith.constant 0.000000e+00 : f32
    %508 = vector.broadcast %cst_103 : f32 to vector<2x10x4xf32>
    %c0_104 = arith.constant 0 : index
    %c0_105 = arith.constant 0 : index
    %c0_106 = arith.constant 0 : index
    %509 = vector.load %arg13[%c0_104, %c0_105, %c0_106] : memref<2x10x4xf32, #tpu.memory_space<vmem>>, vector<2x10x4xf32>
    tpu.vector_store %arg13[%c0_104, %c0_105, %c0_106], %508 {strides = array<i32>} : memref<2x10x4xf32, #tpu.memory_space<vmem>>, vector<2x10x4xf32>,
    %c0_107 = arith.constant 0 : index
    %c1_108 = arith.constant 1 : index
    %c0_109 = arith.constant 0 : index
    %510 = vector.load %arg13[%c0_107, %c1_108, %c0_109] : memref<2x10x4xf32, #tpu.memory_space<vmem>>, vector<2x8x4xf32>
    tpu.vector_store %arg13[%c0_107, %c1_108, %c0_109], %0 {strides = array<i32>} : memref<2x10x4xf32, #tpu.memory_space<vmem>>, vector<2x8x4xf32>,
    %c0_110 = arith.constant 0 : index
    %c0_111 = arith.constant 0 : index
    %511 = vector.load %arg8[%c0_110, %c0_111] : memref<1x32xf32, #tpu.memory_space<vmem>>, vector<1x32xf32>
    %c0_112 = arith.constant 0 : index
    %c0_113 = arith.constant 0 : index
    %c0_114 = arith.constant 0 : index
    %512 = vector.load %arg13[%c0_112, %c0_113, %c0_114] : memref<2x10x4xf32, #tpu.memory_space<vmem>>, vector<2x8x4xf32>
    %c0_115 = arith.constant 0 : index
    %c0_116 = arith.constant 0 : index
    %c0_117 = arith.constant 0 : index
    %513 = vector.load %arg7[%c0_115, %c0_116, %c0_117] : memref<3x4x32xf32, #tpu.memory_space<vmem>>, vector<1x4x32xf32>
    %514 = vector.shape_cast %513 : vector<1x4x32xf32> to vector<4x32xf32>
    "tpu.trace_start"() <{level = 10 : i32, message = "bsd,dh->bsh"}> : () -> ()
    %cst_118 = arith.constant dense<0.000000e+00> : vector<2x8x32xf32>
    %515 = tpu.matmul %512, %514, %cst_118 {dimension_numbers = #tpu.dot_dimension_numbers<[2], [0], [0, 1], [1], [0, 0, 0, 1, 1, 1], [], []>} : vector<2x8x4xf32>, vector<4x32xf32>, vector<2x8x32xf32> -> vector<2x8x32xf32>
    "tpu.trace_stop"() : () -> ()
    %516 = vector.shape_cast %511 : vector<1x32xf32> to vector<1x1x32xf32>
    %517 = vector.broadcast %516 : vector<1x1x32xf32> to vector<2x8x32xf32>
    %518 = arith.addf %517, %515 : vector<2x8x32xf32>
    %c0_119 = arith.constant 0 : index
    %c1_120 = arith.constant 1 : index
    %c0_121 = arith.constant 0 : index
    %519 = vector.load %arg13[%c0_119, %c1_120, %c0_121] : memref<2x10x4xf32, #tpu.memory_space<vmem>>, vector<2x8x4xf32>
    %c1_122 = arith.constant 1 : index
    %c0_123 = arith.constant 0 : index
    %c0_124 = arith.constant 0 : index
    %520 = vector.load %arg7[%c1_122, %c0_123, %c0_124] : memref<3x4x32xf32, #tpu.memory_space<vmem>>, vector<1x4x32xf32>
    %521 = vector.shape_cast %520 : vector<1x4x32xf32> to vector<4x32xf32>
    "tpu.trace_start"() <{level = 10 : i32, message = "bsd,dh->bsh"}> : () -> ()
    %cst_125 = arith.constant dense<0.000000e+00> : vector<2x8x32xf32>
    %522 = tpu.matmul %519, %521, %cst_125 {dimension_numbers = #tpu.dot_dimension_numbers<[2], [0], [0, 1], [1], [0, 0, 0, 1, 1, 1], [], []>} : vector<2x8x4xf32>, vector<4x32xf32>, vector<2x8x32xf32> -> vector<2x8x32xf32>
    "tpu.trace_stop"() : () -> ()
    %523 = arith.addf %518, %522 : vector<2x8x32xf32>
    %c0_126 = arith.constant 0 : index
    %c2_127 = arith.constant 2 : index
    %c0_128 = arith.constant 0 : index
    %524 = vector.load %arg13[%c0_126, %c2_127, %c0_128] : memref<2x10x4xf32, #tpu.memory_space<vmem>>, vector<2x8x4xf32>
    %c2_129 = arith.constant 2 : index
    %c0_130 = arith.constant 0 : index
    %c0_131 = arith.constant 0 : index
    %525 = vector.load %arg7[%c2_129, %c0_130, %c0_131] : memref<3x4x32xf32, #tpu.memory_space<vmem>>, vector<1x4x32xf32>
    %526 = vector.shape_cast %525 : vector<1x4x32xf32> to vector<4x32xf32>
    "tpu.trace_start"() <{level = 10 : i32, message = "bsd,dh->bsh"}> : () -> ()
    %cst_132 = arith.constant dense<0.000000e+00> : vector<2x8x32xf32>
    %527 = tpu.matmul %524, %526, %cst_132 {dimension_numbers = #tpu.dot_dimension_numbers<[2], [0], [0, 1], [1], [0, 0, 0, 1, 1, 1], [], []>} : vector<2x8x4xf32>, vector<4x32xf32>, vector<2x8x32xf32> -> vector<2x8x32xf32>
    "tpu.trace_stop"() : () -> ()
    %528 = arith.addf %523, %527 : vector<2x8x32xf32>
    %529 = vector.shape_cast %507 : vector<2x32xf32> to vector<2x1x32xf32>
    %530 = vector.broadcast %529 : vector<2x1x32xf32> to vector<2x8x32xf32>
    %531 = arith.mulf %528, %530 : vector<2x8x32xf32>
    %cst_133 = arith.constant dense<0.000000e+00> : vector<2x8xf32>
    %532 = vector.multi_reduction <add>, %531, %cst_133 [2] : vector<2x8x32xf32> to vector<2x8xf32>
    %cst_134 = arith.constant dense<0xFF800000> : vector<2xf32>
    %533 = vector.multi_reduction <maximumf>, %532, %cst_134 [1] : vector<2x8xf32> to vector<2xf32>
    %534 = vector.shape_cast %533 : vector<2xf32> to vector<2x1xf32>
    %535 = vector.broadcast %534 : vector<2x1xf32> to vector<2x8xf32>
    %536 = arith.subf %532, %535 : vector<2x8xf32>
    %537 = math.exp %536 : vector<2x8xf32>
    %cst_135 = arith.constant dense<0.000000e+00> : vector<2xf32>
    %538 = vector.multi_reduction <add>, %537, %cst_135 [1] : vector<2x8xf32> to vector<2xf32>
    %539 = vector.shape_cast %538 : vector<2xf32> to vector<2x1xf32>
    %540 = vector.broadcast %539 : vector<2x1xf32> to vector<2x8xf32>
    %541 = arith.divf %537, %540 : vector<2x8xf32>
    %542 = vector.shape_cast %541 : vector<2x8xf32> to vector<2x1x8xf32>
    "tpu.trace_start"() <{level = 10 : i32, message = "bqs,bsh->bqh"}> : () -> ()
    %cst_136 = arith.constant dense<0.000000e+00> : vector<2x1x32xf32>
    %543 = tpu.matmul %542, %528, %cst_136 {dimension_numbers = #tpu.dot_dimension_numbers<[2], [1], [1], [2], [0, 0, 0, 1, 1, 2], [0], [0]>} : vector<2x1x8xf32>, vector<2x8x32xf32>, vector<2x1x32xf32> -> vector<2x1x32xf32>
    "tpu.trace_stop"() : () -> ()
    %544 = vector.shape_cast %543 : vector<2x1x32xf32> to vector<2x32xf32>
    %c0_137 = arith.constant 0 : index
    %c0_138 = arith.constant 0 : index
    %545 = vector.load %arg9[%c0_137, %c0_138] : memref<64x4xf32, #tpu.memory_space<vmem>>, vector<64x4xf32>
    %546 = vector.extract_strided_slice %545 {offsets = [0, 0], sizes = [32, 4], strides = [1, 1]} : vector<64x4xf32> to vector<32x4xf32>
    %cst_139 = arith.constant dense<0.000000e+00> : vector<2x4xf32>
    %547 = tpu.matmul %507, %546, %cst_139 {dimension_numbers = #tpu.dot_dimension_numbers<[1], [0], [0], [1], [0, 0, 1, 1], [], []>} : vector<2x32xf32>, vector<32x4xf32>, vector<2x4xf32> -> vector<2x4xf32>
    %548 = vector.extract_strided_slice %545 {offsets = [32, 0], sizes = [32, 4], strides = [1, 1]} : vector<64x4xf32> to vector<32x4xf32>
    %cst_140 = arith.constant dense<0.000000e+00> : vector<2x4xf32>
    %549 = tpu.matmul %544, %548, %cst_140 {dimension_numbers = #tpu.dot_dimension_numbers<[1], [0], [0], [1], [0, 0, 1, 1], [], []>} : vector<2x32xf32>, vector<32x4xf32>, vector<2x4xf32> -> vector<2x4xf32>
    %550 = arith.addf %547, %549 : vector<2x4xf32>
    %c0_141 = arith.constant 0 : index
    %c0_142 = arith.constant 0 : index
    %551 = vector.load %arg10[%c0_141, %c0_142] : memref<1x4xf32, #tpu.memory_space<vmem>>, vector<1x4xf32>
    %552 = vector.broadcast %551 : vector<1x4xf32> to vector<2x4xf32>
    %553 = arith.addf %550, %552 : vector<2x4xf32>
    %c0_143 = arith.constant 0 : index
    %c0_144 = arith.constant 0 : index
    %554 = vector.load %arg11[%c0_143, %c0_144] : memref<2x4xf32, #tpu.memory_space<vmem>>, vector<2x4xf32>
    tpu.vector_store %arg11[%c0_143, %c0_144], %553 {strides = array<i32>} : memref<2x4xf32, #tpu.memory_space<vmem>>, vector<2x4xf32>,
    return
  }
}

</mosaic_0001>

<llo_original>
// kernel: tpu_custom_call.1
$region0: #{tpu_custom_call.1}
  #allocation0 [shape = 'u32[]', space=smem, size = 0x4, offset = 0x4, fixed_abs, tag = 'smem constant byte address 0x4 - core index']
  #allocation1 [shape = 'u32[144,128]{1,0:T(1,128)}', space=vmem, size = 0x12000, scoped, tag = 'internal scratch']
  #allocation2 [shape = 'f32[8,2,32]{2,1,0:T(2,128)}', space=vmem, size = 0x2000, scoped, tag = 'scratch operand']
  #allocation3 [shape = 'f32[2,10,4]{2,1,0:T(8,128)}', space=vmem, size = 0x4000, scoped, tag = 'scratch operand']
  %s0 = inlined_call_operand.vmem [shape: f32[2,8,4], index: 0, kind: input, shape index: {}]
  %s1 = inlined_call_operand.hbm [shape: f32[4,128], index: 1, kind: input, shape index: {}]
  %s2 = inlined_call_operand.vmem [shape: f32[32,128], index: 2, kind: input, shape index: {}]
  %s3 = inlined_call_operand.vmem [shape: f32[1,128], index: 3, kind: input, shape index: {}]
  %s4 = inlined_call_operand.vmem [shape: f32[32,128], index: 4, kind: input, shape index: {}]
  %s5 = inlined_call_operand.vmem [shape: f32[32,128], index: 5, kind: input, shape index: {}]
  %s6 = inlined_call_operand.vmem [shape: f32[1,128], index: 6, kind: input, shape index: {}]
  %s7 = inlined_call_operand.hbm [shape: f32[3,4,32], index: 7, kind: input, shape index: {}]
  %s8 = inlined_call_operand.vmem [shape: f32[1,32], index: 8, kind: input, shape index: {}]
  %s9 = inlined_call_operand.vmem [shape: f32[64,4], index: 9, kind: input, shape index: {}]
  %s10 = inlined_call_operand.vmem [shape: f32[1,4], index: 10, kind: input, shape index: {}]
  %s11 = inlined_call_operand.hbm [shape: f32[2,4], index: 11, kind: output, shape index: {}]
  %s12 = sld [smem:[#allocation0]]
  $region62: #{tpu_custom_call.1} parent=0
    _
  %s14 = ssub.s32 1, %s12
  %s15 = scalar_select 0, %s14, %s12
  $region1: #{tpu_custom_call.1} parent=0
    #allocation4 [shape = 'u8[2048]{0}', space=vmem, size = 0x800, scoped, tag = 'input window, operand 1, single buffered']
    #allocation5 [shape = 's32[1]{0}', space=sflag, size = 0x4, scoped, tag = 'scoped memory for tpu_custom_call.1']
    #allocation6 [shape = 's32[1]{0}', space=sflag, size = 0x4, scoped, tag = 'scoped memory for tpu_custom_call.1']
    #allocation7 [shape = 'u8[6144]{0}', space=vmem, size = 0x1800, scoped, tag = 'input window, operand 7, single buffered']
    #allocation8 [shape = 's32[1]{0}', space=sflag, size = 0x4, scoped, tag = 'scoped memory for tpu_custom_call.1']
    #allocation9 [shape = 'u8[1024]{0}', space=vmem, size = 0x400, scoped, tag = 'output window, operand 0, single buffered']
    %16 = vsyncpa [#allocation5], 0
    %17 = vsyncpa [#allocation8], 0
    %18 = vsyncpa [#allocation6], 0
    // Predicated region
    $region2: #{tpu_custom_call.1} parent=1 // pred_check
      _
    $region3: #{tpu_custom_call.1} parent=1 // pred_check_branch
      %20 = sbr.rel (0) target = $region5
    $region4: #{tpu_custom_call.1} parent=1 // pred_region
      _
    $region5: #{tpu_custom_call.1} parent=1 // pred_fallthru
      _
    // Predicated region
    $region6: #{tpu_custom_call.1} parent=1 // pred_check
      _
    $region7: #{tpu_custom_call.1} parent=1 // pred_check_branch
      %22 = sbr.rel (0) target = $region9
    $region8: #{tpu_custom_call.1} parent=1 // pred_region
      %s24 = ssub.s32 64, 64
      %25 = vsyncadd [#allocation5], %s24
      %s27 = sshll.u32 [#allocation4], 4
      %s28 = int_to_ptr.vmem [resolvable:$true] %s27
      %30 = dma.hbm_to_vmem [thread:$0]  %s1, 64, %s28, [#allocation5]
    $region9: #{tpu_custom_call.1} parent=1 // pred_fallthru
      _
    // Predicated region
    $region10: #{tpu_custom_call.1} parent=1 // pred_check
      _
    $region11: #{tpu_custom_call.1} parent=1 // pred_check_branch
      %32 = sbr.rel (0) target = $region13
    $region12: #{tpu_custom_call.1} parent=1 // pred_region
      _
    $region13: #{tpu_custom_call.1} parent=1 // pred_fallthru
      _
    // Predicated region
    $region14: #{tpu_custom_call.1} parent=1 // pred_check
      _
    $region15: #{tpu_custom_call.1} parent=1 // pred_check_branch
      %34 = sbr.rel (0) target = $region17
    $region16: #{tpu_custom_call.1} parent=1 // pred_region
      _
    $region17: #{tpu_custom_call.1} parent=1 // pred_fallthru
      _
    // Predicated region
    $region18: #{tpu_custom_call.1} parent=1 // pred_check
      _
    $region19: #{tpu_custom_call.1} parent=1 // pred_check_branch
      %36 = sbr.rel (0) target = $region21
    $region20: #{tpu_custom_call.1} parent=1 // pred_region
      _
    $region21: #{tpu_custom_call.1} parent=1 // pred_fallthru
      _
    // Predicated region
    $region22: #{tpu_custom_call.1} parent=1 // pred_check
      _
    $region23: #{tpu_custom_call.1} parent=1 // pred_check_branch
      %38 = sbr.rel (0) target = $region25
    $region24: #{tpu_custom_call.1} parent=1 // pred_region
      _
    $region25: #{tpu_custom_call.1} parent=1 // pred_fallthru
      _
    // Predicated region
    $region26: #{tpu_custom_call.1} parent=1 // pred_check
      _
    $region27: #{tpu_custom_call.1} parent=1 // pred_check_branch
      %40 = sbr.rel (0) target = $region29
    $region28: #{tpu_custom_call.1} parent=1 // pred_region
      _
    $region29: #{tpu_custom_call.1} parent=1 // pred_fallthru
      _
    // Predicated region
    $region30: #{tpu_custom_call.1} parent=1 // pred_check
      _
    $region31: #{tpu_custom_call.1} parent=1 // pred_check_branch
      %42 = sbr.rel (0) target = $region33
    $region32: #{tpu_custom_call.1} parent=1 // pred_region
      %s44 = ssub.s32 192, 192
      %45 = vsyncadd [#allocation8], %s44
      %s46 = sshll.u32 [#allocation7], 4
      %s47 = int_to_ptr.vmem [resolvable:$true] %s46
      %52 = dma.hbm_to_vmem [thread:$0]  %s7, 192, %s47, [#allocation8], 64, 64, 4
    $region33: #{tpu_custom_call.1} parent=1 // pred_fallthru
      _
    // Predicated region
    $region34: #{tpu_custom_call.1} parent=1 // pred_check
      _
    $region35: #{tpu_custom_call.1} parent=1 // pred_check_branch
      %54 = sbr.rel (0) target = $region37
    $region36: #{tpu_custom_call.1} parent=1 // pred_region
      _
    $region37: #{tpu_custom_call.1} parent=1 // pred_fallthru
      _
    // Predicated region
    $region38: #{tpu_custom_call.1} parent=1 // pred_check
      _
    $region39: #{tpu_custom_call.1} parent=1 // pred_check_branch
      %56 = sbr.rel (0) target = $region41
    $region40: #{tpu_custom_call.1} parent=1 // pred_region
      _
    $region41: #{tpu_custom_call.1} parent=1 // pred_fallthru
      _
    // Predicated region
    $region42: #{tpu_custom_call.1} parent=1 // pred_check
      _
    $region43: #{tpu_custom_call.1} parent=1 // pred_check_branch
      %58 = sbr.rel (0) target = $region45
    $region44: #{tpu_custom_call.1} parent=1 // pred_region
      _
    $region45: #{tpu_custom_call.1} parent=1 // pred_fallthru
      _
    // Predicated region
    $region46: #{tpu_custom_call.1} parent=1 // pred_check
      _
    $region47: #{tpu_custom_call.1} parent=1 // pred_check_branch
      %60 = sbr.rel (0) target = $region49
    $region48: #{tpu_custom_call.1} parent=1 // pred_region
      %61 = dma.done [#allocation5], 64
    $region49: #{tpu_custom_call.1} parent=1 // pred_fallthru
      _
    // Predicated region
    $region50: #{tpu_custom_call.1} parent=1 // pred_check
      _
    $region51: #{tpu_custom_call.1} parent=1 // pred_check_branch
      %63 = sbr.rel (0) target = $region53
    $region52: #{tpu_custom_call.1} parent=1 // pred_region
      %64 = dma.done [#allocation8], 192
    $region53: #{tpu_custom_call.1} parent=1 // pred_fallthru
      _
    %v65 = vld [vmem:[%s0] sm:$0xff]
    %v66 = vld [vmem:[%s0 + $0x8] sm:$0xff]
    %v67 = vld [vmem:[#allocation4] sm:$0xf]
    %v68 = vld [vmem:[%s2] sm:$0xff]
    %v69 = vld [vmem:[%s2 + $0x8] sm:$0xff]
    %v70 = vld [vmem:[%s2 + $0x10] sm:$0xff]
    %v71 = vld [vmem:[%s2 + $0x18] sm:$0xff]
    %v72 = vld [vmem:[%s3] sm:$0x1]
    %v74 = vlaneseq
    %v75 = vshrl.u32 %v74, 7
    %v76 = vsub.s32 0, %v75
    %v77 = vrot.slane %v72, %v76
    %vm79 = vcmask 31744
    %v81 = vsel %vm79, %v65, 0
    %v84 = vsel %vm79, %v66, 0
    %vm86 = vcmask 1043456
    %v88 = vsel %vm86, %v67, 0
    %90 = vmatprep.subr.mxu0 0.0
    %91 = vmatpush1.msra.mxu0 0.0
    %92 = vmatprep.subr.mxu0 0.0
    %93 = vmatpush1.msra.mxu0 0.0
    %94 = vmatprep.subr.mxu0 0.0
    %95 = vmatpush1.msra.mxu0 0.0
    %96 = vmatprep.subr.mxu0 0.0
    %97 = vmatpush1.msra.mxu0 0.0
    %98 = vmatprep.subr.mxu0 0.0
    %99 = vmatpush1.msra.mxu0 0.0
    %100 = vmatprep.subr.mxu0 0.0
    %101 = vmatpush1.msra.mxu0 0.0
    %102 = vmatprep.subr.mxu0 0.0
    %103 = vmatpush1.msra.mxu0 0.0
    %104 = vmatprep.subr.mxu0 0.0
    %105 = vmatpush1.msra.mxu0 0.0
    %106 = vmatprep.subr.mxu0 0.0
    %107 = vmatpush1.msra.mxu0 0.0
    %108 = vmatprep.subr.mxu0 0.0
    %109 = vmatpush1.msra.mxu0 0.0
    %110 = vmatprep.subr.mxu0 0.0
    %111 = vmatpush1.msra.mxu0 0.0
    %112 = vmatprep.subr.mxu0 0.0
    %113 = vmatpush1.msra.mxu0 0.0
    %114 = vmatprep.subr.mxu0 0.0
    %115 = vmatpush1.msra.mxu0 0.0
    %116 = vmatprep.subr.mxu0 0.0
    %117 = vmatpush1.msra.mxu0 0.0
    %118 = vmatprep.subr.mxu0 0.0
    %119 = vmatpush1.msra.mxu0 0.0
    %120 = vmatprep.subr.mxu0 0.0
    %121 = vmatpush1.msra.mxu0 %v88
    %122 = vmatprep.subr.mxu0 0.0
    %123 = vmatpush2.msra.mxu0 0.0
    %124 = vmatprep.subr.mxu0 0.0
    %125 = vmatpush2.msra.mxu0 0.0
    %126 = vmatprep.subr.mxu0 0.0
    %127 = vmatpush2.msra.mxu0 0.0
    %128 = vmatprep.subr.mxu0 0.0
    %129 = vmatpush2.msra.mxu0 0.0
    %130 = vmatprep.subr.mxu0 0.0
    %131 = vmatpush2.msra.mxu0 0.0
    %132 = vmatprep.subr.mxu0 0.0
    %133 = vmatpush2.msra.mxu0 0.0
    %134 = vmatprep.subr.mxu0 0.0
    %135 = vmatpush2.msra.mxu0 0.0
    %136 = vmatprep.subr.mxu0 0.0
    %137 = vmatpush2.msra.mxu0 0.0
    %138 = vmatprep.subr.mxu0 0.0
    %139 = vmatpush2.msra.mxu0 0.0
    %140 = vmatprep.subr.mxu0 0.0
    %141 = vmatpush2.msra.mxu0 0.0
    %142 = vmatprep.subr.mxu0 0.0
    %143 = vmatpush2.msra.mxu0 0.0
    %144 = vmatprep.subr.mxu0 0.0
    %145 = vmatpush2.msra.mxu0 0.0
    %146 = vmatprep.subr.mxu0 0.0
    %147 = vmatpush2.msra.mxu0 0.0
    %148 = vmatprep.subr.mxu0 0.0
    %149 = vmatpush2.msra.mxu0 0.0
    %150 = vmatprep.subr.mxu0 0.0
    %151 = vmatpush2.msra.mxu0 0.0
    %152 = vmatprep.subr.mxu0 0.0
    %153 = vmatpush2.msra.mxu0 0.0
    %154 = vmatprep.mubr.f32.mxu0 0.0
    %155 = vmatmul.mubr.f32.gmra.mxu0 %v81
    %v156 = vpop.f32.mrf.mxu0
    %v157 = vadd.f32 %v77, %v156
    %v158 = vpop.f32.mrf.mxu0
    %159 = vmatprep.mubr.f32.mxu0 0.0
    %160 = vmatmul.mubr.f32.gmra.mxu0 %v84
    %v161 = vpop.f32.mrf.mxu0
    %v162 = vadd.f32 %v77, %v161
    %v163 = vpop.f32.mrf.mxu0
    %164 = vdwg.mxu0
    %vm165 = vcmask 261120
    %v167 = vsel %vm165, 0.0, 0
    %169 = vmatprep.subr.mxu0 0.0
    %170 = vmatpush1.msra.mxu0 0.0
    %171 = vmatprep.subr.mxu0 0.0
    %172 = vmatpush1.msra.mxu0 0.0
    %173 = vmatprep.subr.mxu0 0.0
    %174 = vmatpush1.msra.mxu0 0.0
    %175 = vmatprep.subr.mxu0 0.0
    %176 = vmatpush1.msra.mxu0 0.0
    %177 = vmatprep.subr.mxu0 0.0
    %178 = vmatpush1.msra.mxu0 0.0
    %179 = vmatprep.subr.mxu0 0.0
    %180 = vmatpush1.msra.mxu0 0.0
    %181 = vmatprep.subr.mxu0 0.0
    %182 = vmatpush1.msra.mxu0 0.0
    %183 = vmatprep.subr.mxu0 0.0
    %184 = vmatpush1.msra.mxu0 0.0
    %185 = vmatprep.subr.mxu0 0.0
    %186 = vmatpush1.msra.mxu0 0.0
    %187 = vmatprep.subr.mxu0 0.0
    %188 = vmatpush1.msra.mxu0 0.0
    %189 = vmatprep.subr.mxu0 0.0
    %190 = vmatpush1.msra.mxu0 0.0
    %191 = vmatprep.subr.mxu0 0.0
    %192 = vmatpush1.msra.mxu0 0.0
    %193 = vmatprep.subr.mxu0 0.0
    %194 = vmatpush1.msra.mxu0 %v71
    %195 = vmatprep.subr.mxu0 0.0
    %196 = vmatpush1.msra.mxu0 %v70
    %197 = vmatprep.subr.mxu0 0.0
    %198 = vmatpush1.msra.mxu0 %v69
    %199 = vmatprep.subr.mxu0 0.0
    %200 = vmatpush1.msra.mxu0 %v68
    %201 = vmatprep.subr.mxu0 0.0
    %202 = vmatpush2.msra.mxu0 0.0
    %203 = vmatprep.subr.mxu0 0.0
    %204 = vmatpush2.msra.mxu0 0.0
    %205 = vmatprep.subr.mxu0 0.0
    %206 = vmatpush2.msra.mxu0 0.0
    %207 = vmatprep.subr.mxu0 0.0
    %208 = vmatpush2.msra.mxu0 0.0
    %209 = vmatprep.subr.mxu0 0.0
    %210 = vmatpush2.msra.mxu0 0.0
    %211 = vmatprep.subr.mxu0 0.0
    %212 = vmatpush2.msra.mxu0 0.0
    %213 = vmatprep.subr.mxu0 0.0
    %214 = vmatpush2.msra.mxu0 0.0
    %215 = vmatprep.subr.mxu0 0.0
    %216 = vmatpush2.msra.mxu0 0.0
    %217 = vmatprep.subr.mxu0 0.0
    %218 = vmatpush2.msra.mxu0 0.0
    %219 = vmatprep.subr.mxu0 0.0
    %220 = vmatpush2.msra.mxu0 0.0
    %221 = vmatprep.subr.mxu0 0.0
    %222 = vmatpush2.msra.mxu0 0.0
    %223 = vmatprep.subr.mxu0 0.0
    %224 = vmatpush2.msra.mxu0 0.0
    %225 = vmatprep.subr.mxu0 0.0
    %226 = vmatpush2.msra.mxu0 0.0
    %227 = vmatprep.subr.mxu0 0.0
    %228 = vmatpush2.msra.mxu0 0.0
    %229 = vmatprep.subr.mxu0 0.0
    %230 = vmatpush2.msra.mxu0 0.0
    %231 = vmatprep.subr.mxu0 0.0
    %232 = vmatpush2.msra.mxu0 0.0
    %233 = vmatprep.mubr.f32.mxu0 0.0
    %234 = vmatmul.mubr.f32.gmra.mxu0 %v167
    %v235 = vpop.f32.mrf.mxu0
    %v236 = vadd.f32 0.0, %v235
    %v237 = vpop.f32.mrf.mxu0
    %238 = vdwg.mxu0
    %v240 = vrot.slane %v236, 1
    %v243 = vadd.f32 %v157, %v236
    %v244 = vadd.f32 %v162, %v240
    %v245 = vxor.u32 %v243, 2147483648
    %v246 = vxor.u32 %v244, 2147483648
    %v247 = vmul.f32 %v245, 1.442695
    %v248 = vpow.pop %v247
    %v249 = vmul.f32 %v246, 1.442695
    %v250 = vpow.pop %v249
    %v251 = vadd.f32 %v248, 1.0
    %v252 = vadd.f32 %v250, 1.0
    %v253 = vrcp.pop %v251
    %v254 = vmul.f32 1.0, %v253
    %v255 = vrcp.pop %v252
    %v256 = vmul.f32 1.0, %v255
    %v257 = vtanh.pop %v243
    %v258 = vtanh.pop %v244
    %v259 = vmul.f32 %v254, 0.0
    %v260 = vmul.f32 %v256, 0.0
    %263 = vrot.lane.b32.xlu0 %v257, 64
    %v264 = vpop.permute.xlu0 %263
    %265 = vrot.lane.b32.xlu0 %v258, 64
    %v266 = vpop.permute.xlu0 %265
    %v269 = vmul.f32 %v254, %v264
    %v270 = vmul.f32 %v256, %v266
    %273 = vrot.lane.b32.xlu0 %v269, 32
    %v274 = vpop.permute.xlu0 %273
    %275 = vrot.lane.b32.xlu0 %v270, 32
    %v276 = vpop.permute.xlu0 %275
    %v279 = vadd.f32 %v259, %v274
    %v280 = vadd.f32 %v260, %v276
    %v281 = vtanh.pop %v279
    %v282 = vtanh.pop %v280
    %285 = vrot.lane.b32.xlu0 %v281, 64
    %v286 = vpop.permute.xlu0 %285
    %287 = vrot.lane.b32.xlu0 %v282, 64
    %v288 = vpop.permute.xlu0 %287
    %v291 = vmul.f32 %v254, %v286
    %v292 = vmul.f32 %v256, %v288
    %v295 = vrot.slane %v292, 7
    %vm296 = vcmask 1041409
    %v297 = vsel %vm296, %v295, %v291
    %298 = vrot.lane.b32.xlu0 %v297, 32
    %v299 = vpop.permute.xlu0 %298
    %vm301 = vcmask 254976
    %302 = vst.msk [vmem:[#allocation2] sm:$0x3] %vm301, %v299
    %v303 = vsel %vm165, %v299, 0
    %305 = vmatprep.subr.mxu0 0.0
    %306 = vmatpush1.msra.mxu0 0.0
    %307 = vmatprep.subr.mxu0 0.0
    %308 = vmatpush1.msra.mxu0 0.0
    %309 = vmatprep.subr.mxu0 0.0
    %310 = vmatpush1.msra.mxu0 0.0
    %311 = vmatprep.subr.mxu0 0.0
    %312 = vmatpush1.msra.mxu0 0.0
    %313 = vmatprep.subr.mxu0 0.0
    %314 = vmatpush1.msra.mxu0 0.0
    %315 = vmatprep.subr.mxu0 0.0
    %316 = vmatpush1.msra.mxu0 0.0
    %317 = vmatprep.subr.mxu0 0.0
    %318 = vmatpush1.msra.mxu0 0.0
    %319 = vmatprep.subr.mxu0 0.0
    %320 = vmatpush1.msra.mxu0 0.0
    %321 = vmatprep.subr.mxu0 0.0
    %322 = vmatpush1.msra.mxu0 0.0
    %323 = vmatprep.subr.mxu0 0.0
    %324 = vmatpush1.msra.mxu0 0.0
    %325 = vmatprep.subr.mxu0 0.0
    %326 = vmatpush1.msra.mxu0 0.0
    %327 = vmatprep.subr.mxu0 0.0
    %328 = vmatpush1.msra.mxu0 0.0
    %329 = vmatprep.subr.mxu0 0.0
    %330 = vmatpush1.msra.mxu0 %v71
    %331 = vmatprep.subr.mxu0 0.0
    %332 = vmatpush1.msra.mxu0 %v70
    %333 = vmatprep.subr.mxu0 0.0
    %334 = vmatpush1.msra.mxu0 %v69
    %335 = vmatprep.subr.mxu0 0.0
    %336 = vmatpush1.msra.mxu0 %v68
    %337 = vmatprep.subr.mxu0 0.0
    %338 = vmatpush2.msra.mxu0 0.0
    %339 = vmatprep.subr.mxu0 0.0
    %340 = vmatpush2.msra.mxu0 0.0
    %341 = vmatprep.subr.mxu0 0.0
    %342 = vmatpush2.msra.mxu0 0.0
    %343 = vmatprep.subr.mxu0 0.0
    %344 = vmatpush2.msra.mxu0 0.0
    %345 = vmatprep.subr.mxu0 0.0
    %346 = vmatpush2.msra.mxu0 0.0
    %347 = vmatprep.subr.mxu0 0.0
    %348 = vmatpush2.msra.mxu0 0.0
    %349 = vmatprep.subr.mxu0 0.0
    %350 = vmatpush2.msra.mxu0 0.0
    %351 = vmatprep.subr.mxu0 0.0
    %352 = vmatpush2.msra.mxu0 0.0
    %353 = vmatprep.subr.mxu0 0.0
    %354 = vmatpush2.msra.mxu0 0.0
    %355 = vmatprep.subr.mxu0 0.0
    %356 = vmatpush2.msra.mxu0 0.0
    %357 = vmatprep.subr.mxu0 0.0
    %358 = vmatpush2.msra.mxu0 0.0
    %359 = vmatprep.subr.mxu0 0.0
    %360 = vmatpush2.msra.mxu0 0.0
    %361 = vmatprep.subr.mxu0 0.0
    %362 = vmatpush2.msra.mxu0 0.0
    %363 = vmatprep.subr.mxu0 0.0
    %364 = vmatpush2.msra.mxu0 0.0
    %365 = vmatprep.subr.mxu0 0.0
    %366 = vmatpush2.msra.mxu0 0.0
    %367 = vmatprep.subr.mxu0 0.0
    %368 = vmatpush2.msra.mxu0 0.0
    %369 = vmatprep.mubr.f32.mxu0 0.0
    %370 = vmatmul.mubr.f32.gmra.mxu0 %v303
    %v371 = vpop.f32.mrf.mxu0
    %v372 = vadd.f32 0.0, %v371
    %v373 = vpop.f32.mrf.mxu0
    %374 = vdwg.mxu0
    %v376 = vrot.slane %v372, 7
    %v379 = vadd.f32 %v157, %v376
    %v380 = vadd.f32 %v162, %v372
    %v381 = vxor.u32 %v379, 2147483648
    %v382 = vxor.u32 %v380, 2147483648
    %v383 = vmul.f32 %v381, 1.442695
    %v384 = vpow.pop %v383
    %v385 = vmul.f32 %v382, 1.442695
    %v386 = vpow.pop %v385
    %v387 = vadd.f32 %v384, 1.0
    %v388 = vadd.f32 %v386, 1.0
    %v389 = vrcp.pop %v387
    %v390 = vmul.f32 1.0, %v389
    %v391 = vrcp.pop %v388
    %v392 = vmul.f32 1.0, %v391
    %v393 = vtanh.pop %v379
    %v394 = vtanh.pop %v380
    %v397 = vrot.slane %v279, 7
    %v398 = vrot.slane %v280, 7
    %v401 = vmul.f32 %v390, %v397
    %v402 = vmul.f32 %v392, %v398
    %405 = vrot.lane.b32.xlu0 %v393, 64
    %v406 = vpop.permute.xlu0 %405
    %407 = vrot.lane.b32.xlu0 %v394, 64
    %v408 = vpop.permute.xlu0 %407
    %v411 = vmul.f32 %v390, %v406
    %v412 = vmul.f32 %v392, %v408
    %415 = vrot.lane.b32.xlu0 %v411, 32
    %v416 = vpop.permute.xlu0 %415
    %417 = vrot.lane.b32.xlu0 %v412, 32
    %v418 = vpop.permute.xlu0 %417
    %v421 = vadd.f32 %v401, %v416
    %v422 = vadd.f32 %v402, %v418
    %v423 = vtanh.pop %v421
    %v424 = vtanh.pop %v422
    %427 = vrot.lane.b32.xlu0 %v423, 64
    %v428 = vpop.permute.xlu0 %427
    %429 = vrot.lane.b32.xlu0 %v424, 64
    %v430 = vpop.permute.xlu0 %429
    %v433 = vmul.f32 %v390, %v428
    %v434 = vmul.f32 %v392, %v430
    %v437 = vrot.slane %v434, 7
    %vm438 = vcmask 1042434
    %v439 = vsel %vm438, %v437, %v433
    %440 = vrot.lane.b32.xlu0 %v439, 32
    %v441 = vpop.permute.xlu0 %440
    %s443 = scalar_lea.vmem [#allocation2], 2
    %vm444 = vcmask 256001
    %445 = vst.msk [vmem:[%s443 - $0x1] sm:$0x6] %vm444, %v441
    %v446 = vrot.slane %v433, 1
    %v447 = vsel %vm296, %v434, %v446
    %448 = vrot.lane.b32.xlu0 %v447, 32
    %v449 = vpop.permute.xlu0 %448
    %v450 = vsel %vm165, %v449, 0
    %452 = vmatprep.subr.mxu0 0.0
    %453 = vmatpush1.msra.mxu0 0.0
    %454 = vmatprep.subr.mxu0 0.0
    %455 = vmatpush1.msra.mxu0 0.0
    %456 = vmatprep.subr.mxu0 0.0
    %457 = vmatpush1.msra.mxu0 0.0
    %458 = vmatprep.subr.mxu0 0.0
    %459 = vmatpush1.msra.mxu0 0.0
    %460 = vmatprep.subr.mxu0 0.0
    %461 = vmatpush1.msra.mxu0 0.0
    %462 = vmatprep.subr.mxu0 0.0
    %463 = vmatpush1.msra.mxu0 0.0
    %464 = vmatprep.subr.mxu0 0.0
    %465 = vmatpush1.msra.mxu0 0.0
    %466 = vmatprep.subr.mxu0 0.0
    %467 = vmatpush1.msra.mxu0 0.0
    %468 = vmatprep.subr.mxu0 0.0
    %469 = vmatpush1.msra.mxu0 0.0
    %470 = vmatprep.subr.mxu0 0.0
    %471 = vmatpush1.msra.mxu0 0.0
    %472 = vmatprep.subr.mxu0 0.0
    %473 = vmatpush1.msra.mxu0 0.0
    %474 = vmatprep.subr.mxu0 0.0
    %475 = vmatpush1.msra.mxu0 0.0
    %476 = vmatprep.subr.mxu0 0.0
    %477 = vmatpush1.msra.mxu0 %v71
    %478 = vmatprep.subr.mxu0 0.0
    %479 = vmatpush1.msra.mxu0 %v70
    %480 = vmatprep.subr.mxu0 0.0
    %481 = vmatpush1.msra.mxu0 %v69
    %482 = vmatprep.subr.mxu0 0.0
    %483 = vmatpush1.msra.mxu0 %v68
    %484 = vmatprep.subr.mxu0 0.0
    %485 = vmatpush2.msra.mxu0 0.0
    %486 = vmatprep.subr.mxu0 0.0
    %487 = vmatpush2.msra.mxu0 0.0
    %488 = vmatprep.subr.mxu0 0.0
    %489 = vmatpush2.msra.mxu0 0.0
    %490 = vmatprep.subr.mxu0 0.0
    %491 = vmatpush2.msra.mxu0 0.0
    %492 = vmatprep.subr.mxu0 0.0
    %493 = vmatpush2.msra.mxu0 0.0
    %494 = vmatprep.subr.mxu0 0.0
    %495 = vmatpush2.msra.mxu0 0.0
    %496 = vmatprep.subr.mxu0 0.0
    %497 = vmatpush2.msra.mxu0 0.0
    %498 = vmatprep.subr.mxu0 0.0
    %499 = vmatpush2.msra.mxu0 0.0
    %500 = vmatprep.subr.mxu0 0.0
    %501 = vmatpush2.msra.mxu0 0.0
    %502 = vmatprep.subr.mxu0 0.0
    %503 = vmatpush2.msra.mxu0 0.0
    %504 = vmatprep.subr.mxu0 0.0
    %505 = vmatpush2.msra.mxu0 0.0
    %506 = vmatprep.subr.mxu0 0.0
    %507 = vmatpush2.msra.mxu0 0.0
    %508 = vmatprep.subr.mxu0 0.0
    %509 = vmatpush2.msra.mxu0 0.0
    %510 = vmatprep.subr.mxu0 0.0
    %511 = vmatpush2.msra.mxu0 0.0
    %512 = vmatprep.subr.mxu0 0.0
    %513 = vmatpush2.msra.mxu0 0.0
    %514 = vmatprep.subr.mxu0 0.0
    %515 = vmatpush2.msra.mxu0 0.0
    %516 = vmatprep.mubr.f32.mxu0 0.0
    %517 = vmatmul.mubr.f32.gmra.mxu0 %v450
    %v518 = vpop.f32.mrf.mxu0
    %v519 = vadd.f32 0.0, %v518
    %v520 = vpop.f32.mrf.mxu0
    %521 = vdwg.mxu0
    %v523 = vrot.slane %v519, 6
    %v524 = vrot.slane %v519, 7
    %v527 = vadd.f32 %v157, %v523
    %v528 = vadd.f32 %v162, %v524
    %v529 = vxor.u32 %v527, 2147483648
    %v530 = vxor.u32 %v528, 2147483648
    %v531 = vmul.f32 %v529, 1.442695
    %v532 = vpow.pop %v531
    %v533 = vmul.f32 %v530, 1.442695
    %v534 = vpow.pop %v533
    %v535 = vadd.f32 %v532, 1.0
    %v536 = vadd.f32 %v534, 1.0
    %v537 = vrcp.pop %v535
    %v538 = vmul.f32 1.0, %v537
    %v539 = vrcp.pop %v536
    %v540 = vmul.f32 1.0, %v539
    %v541 = vtanh.pop %v527
    %v542 = vtanh.pop %v528
    %v545 = vrot.slane %v421, 7
    %v546 = vrot.slane %v422, 7
    %v549 = vmul.f32 %v538, %v545
    %v550 = vmul.f32 %v540, %v546
    %553 = vrot.lane.b32.xlu0 %v541, 64
    %v554 = vpop.permute.xlu0 %553
    %555 = vrot.lane.b32.xlu0 %v542, 64
    %v556 = vpop.permute.xlu0 %555
    %v559 = vmul.f32 %v538, %v554
    %v560 = vmul.f32 %v540, %v556
    %563 = vrot.lane.b32.xlu0 %v559, 32
    %v564 = vpop.permute.xlu0 %563
    %565 = vrot.lane.b32.xlu0 %v560, 32
    %v566 = vpop.permute.xlu0 %565
    %v569 = vadd.f32 %v549, %v564
    %v570 = vadd.f32 %v550, %v566
    %v571 = vtanh.pop %v569
    %v572 = vtanh.pop %v570
    %575 = vrot.lane.b32.xlu0 %v571, 64
    %v576 = vpop.permute.xlu0 %575
    %577 = vrot.lane.b32.xlu0 %v572, 64
    %v578 = vpop.permute.xlu0 %577
    %v581 = vmul.f32 %v538, %v576
    %v582 = vmul.f32 %v540, %v578
    %v585 = vrot.slane %v582, 7
    %vm586 = vcmask 1043459
    %v587 = vsel %vm586, %v585, %v581
    %588 = vrot.lane.b32.xlu0 %v587, 32
    %v589 = vpop.permute.xlu0 %588
    %s591 = scalar_lea.vmem [#allocation2], 4
    %vm592 = vcmask 257026
    %593 = vst.msk [vmem:[%s591 - $0x2] sm:$0xc] %vm592, %v589
    %v594 = vrot.slane %v581, 2
    %v595 = vrot.slane %v582, 1
    %v596 = vsel %vm296, %v595, %v594
    %597 = vrot.lane.b32.xlu0 %v596, 32
    %v598 = vpop.permute.xlu0 %597
    %v599 = vsel %vm165, %v598, 0
    %601 = vmatprep.subr.mxu0 0.0
    %602 = vmatpush1.msra.mxu0 0.0
    %603 = vmatprep.subr.mxu0 0.0
    %604 = vmatpush1.msra.mxu0 0.0
    %605 = vmatprep.subr.mxu0 0.0
    %606 = vmatpush1.msra.mxu0 0.0
    %607 = vmatprep.subr.mxu0 0.0
    %608 = vmatpush1.msra.mxu0 0.0
    %609 = vmatprep.subr.mxu0 0.0
    %610 = vmatpush1.msra.mxu0 0.0
    %611 = vmatprep.subr.mxu0 0.0
    %612 = vmatpush1.msra.mxu0 0.0
    %613 = vmatprep.subr.mxu0 0.0
    %614 = vmatpush1.msra.mxu0 0.0
    %615 = vmatprep.subr.mxu0 0.0
    %616 = vmatpush1.msra.mxu0 0.0
    %617 = vmatprep.subr.mxu0 0.0
    %618 = vmatpush1.msra.mxu0 0.0
    %619 = vmatprep.subr.mxu0 0.0
    %620 = vmatpush1.msra.mxu0 0.0
    %621 = vmatprep.subr.mxu0 0.0
    %622 = vmatpush1.msra.mxu0 0.0
    %623 = vmatprep.subr.mxu0 0.0
    %624 = vmatpush1.msra.mxu0 0.0
    %625 = vmatprep.subr.mxu0 0.0
    %626 = vmatpush1.msra.mxu0 %v71
    %627 = vmatprep.subr.mxu0 0.0
    %628 = vmatpush1.msra.mxu0 %v70
    %629 = vmatprep.subr.mxu0 0.0
    %630 = vmatpush1.msra.mxu0 %v69
    %631 = vmatprep.subr.mxu0 0.0
    %632 = vmatpush1.msra.mxu0 %v68
    %633 = vmatprep.subr.mxu0 0.0
    %634 = vmatpush2.msra.mxu0 0.0
    %635 = vmatprep.subr.mxu0 0.0
    %636 = vmatpush2.msra.mxu0 0.0
    %637 = vmatprep.subr.mxu0 0.0
    %638 = vmatpush2.msra.mxu0 0.0
    %639 = vmatprep.subr.mxu0 0.0
    %640 = vmatpush2.msra.mxu0 0.0
    %641 = vmatprep.subr.mxu0 0.0
    %642 = vmatpush2.msra.mxu0 0.0
    %643 = vmatprep.subr.mxu0 0.0
    %644 = vmatpush2.msra.mxu0 0.0
    %645 = vmatprep.subr.mxu0 0.0
    %646 = vmatpush2.msra.mxu0 0.0
    %647 = vmatprep.subr.mxu0 0.0
    %648 = vmatpush2.msra.mxu0 0.0
    %649 = vmatprep.subr.mxu0 0.0
    %650 = vmatpush2.msra.mxu0 0.0
    %651 = vmatprep.subr.mxu0 0.0
    %652 = vmatpush2.msra.mxu0 0.0
    %653 = vmatprep.subr.mxu0 0.0
    %654 = vmatpush2.msra.mxu0 0.0
    %655 = vmatprep.subr.mxu0 0.0
    %656 = vmatpush2.msra.mxu0 0.0
    %657 = vmatprep.subr.mxu0 0.0
    %658 = vmatpush2.msra.mxu0 0.0
    %659 = vmatprep.subr.mxu0 0.0
    %660 = vmatpush2.msra.mxu0 0.0
    %661 = vmatprep.subr.mxu0 0.0
    %662 = vmatpush2.msra.mxu0 0.0
    %663 = vmatprep.subr.mxu0 0.0
    %664 = vmatpush2.msra.mxu0 0.0
    %665 = vmatprep.mubr.f32.mxu0 0.0
    %666 = vmatmul.mubr.f32.gmra.mxu0 %v599
    %v667 = vpop.f32.mrf.mxu0
    %v668 = vadd.f32 0.0, %v667
    %v669 = vpop.f32.mrf.mxu0
    %670 = vdwg.mxu0
    %v672 = vrot.slane %v668, 5
    %v673 = vrot.slane %v668, 6
    %v676 = vadd.f32 %v157, %v672
    %v677 = vadd.f32 %v162, %v673
    %v678 = vxor.u32 %v676, 2147483648
    %v679 = vxor.u32 %v677, 2147483648
    %v680 = vmul.f32 %v678, 1.442695
    %v681 = vpow.pop %v680
    %v682 = vmul.f32 %v679, 1.442695
    %v683 = vpow.pop %v682
    %v684 = vadd.f32 %v681, 1.0
    %v685 = vadd.f32 %v683, 1.0
    %v686 = vrcp.pop %v684
    %v687 = vmul.f32 1.0, %v686
    %v688 = vrcp.pop %v685
    %v689 = vmul.f32 1.0, %v688
    %v690 = vtanh.pop %v676
    %v691 = vtanh.pop %v677
    %v694 = vrot.slane %v569, 7
    %v695 = vrot.slane %v570, 7
    %v698 = vmul.f32 %v687, %v694
    %v699 = vmul.f32 %v689, %v695
    %702 = vrot.lane.b32.xlu0 %v690, 64
    %v703 = vpop.permute.xlu0 %702
    %704 = vrot.lane.b32.xlu0 %v691, 64
    %v705 = vpop.permute.xlu0 %704
    %v708 = vmul.f32 %v687, %v703
    %v709 = vmul.f32 %v689, %v705
    %712 = vrot.lane.b32.xlu0 %v708, 32
    %v713 = vpop.permute.xlu0 %712
    %714 = vrot.lane.b32.xlu0 %v709, 32
    %v715 = vpop.permute.xlu0 %714
    %v718 = vadd.f32 %v698, %v713
    %v719 = vadd.f32 %v699, %v715
    %v720 = vtanh.pop %v718
    %v721 = vtanh.pop %v719
    %724 = vrot.lane.b32.xlu0 %v720, 64
    %v725 = vpop.permute.xlu0 %724
    %726 = vrot.lane.b32.xlu0 %v721, 64
    %v727 = vpop.permute.xlu0 %726
    %v730 = vmul.f32 %v687, %v725
    %v731 = vmul.f32 %v689, %v727
    %v734 = vrot.slane %v731, 7
    %vm735 = vcmask 1044484
    %v736 = vsel %vm735, %v734, %v730
    %737 = vrot.lane.b32.xlu0 %v736, 32
    %v738 = vpop.permute.xlu0 %737
    %s740 = scalar_lea.vmem [#allocation2], 6
    %vm741 = vcmask 258051
    %742 = vst.msk [vmem:[%s740 - $0x3] sm:$0x18] %vm741, %v738
    %v743 = vrot.slane %v730, 3
    %v744 = vrot.slane %v731, 2
    %v745 = vsel %vm296, %v744, %v743
    %746 = vrot.lane.b32.xlu0 %v745, 32
    %v747 = vpop.permute.xlu0 %746
    %v748 = vsel %vm165, %v747, 0
    %750 = vmatprep.subr.mxu0 0.0
    %751 = vmatpush1.msra.mxu0 0.0
    %752 = vmatprep.subr.mxu0 0.0
    %753 = vmatpush1.msra.mxu0 0.0
    %754 = vmatprep.subr.mxu0 0.0
    %755 = vmatpush1.msra.mxu0 0.0
    %756 = vmatprep.subr.mxu0 0.0
    %757 = vmatpush1.msra.mxu0 0.0
    %758 = vmatprep.subr.mxu0 0.0
    %759 = vmatpush1.msra.mxu0 0.0
    %760 = vmatprep.subr.mxu0 0.0
    %761 = vmatpush1.msra.mxu0 0.0
    %762 = vmatprep.subr.mxu0 0.0
    %763 = vmatpush1.msra.mxu0 0.0
    %764 = vmatprep.subr.mxu0 0.0
    %765 = vmatpush1.msra.mxu0 0.0
    %766 = vmatprep.subr.mxu0 0.0
    %767 = vmatpush1.msra.mxu0 0.0
    %768 = vmatprep.subr.mxu0 0.0
    %769 = vmatpush1.msra.mxu0 0.0
    %770 = vmatprep.subr.mxu0 0.0
    %771 = vmatpush1.msra.mxu0 0.0
    %772 = vmatprep.subr.mxu0 0.0
    %773 = vmatpush1.msra.mxu0 0.0
    %774 = vmatprep.subr.mxu0 0.0
    %775 = vmatpush1.msra.mxu0 %v71
    %776 = vmatprep.subr.mxu0 0.0
    %777 = vmatpush1.msra.mxu0 %v70
    %778 = vmatprep.subr.mxu0 0.0
    %779 = vmatpush1.msra.mxu0 %v69
    %780 = vmatprep.subr.mxu0 0.0
    %781 = vmatpush1.msra.mxu0 %v68
    %782 = vmatprep.subr.mxu0 0.0
    %783 = vmatpush2.msra.mxu0 0.0
    %784 = vmatprep.subr.mxu0 0.0
    %785 = vmatpush2.msra.mxu0 0.0
    %786 = vmatprep.subr.mxu0 0.0
    %787 = vmatpush2.msra.mxu0 0.0
    %788 = vmatprep.subr.mxu0 0.0
    %789 = vmatpush2.msra.mxu0 0.0
    %790 = vmatprep.subr.mxu0 0.0
    %791 = vmatpush2.msra.mxu0 0.0
    %792 = vmatprep.subr.mxu0 0.0
    %793 = vmatpush2.msra.mxu0 0.0
    %794 = vmatprep.subr.mxu0 0.0
    %795 = vmatpush2.msra.mxu0 0.0
    %796 = vmatprep.subr.mxu0 0.0
    %797 = vmatpush2.msra.mxu0 0.0
    %798 = vmatprep.subr.mxu0 0.0
    %799 = vmatpush2.msra.mxu0 0.0
    %800 = vmatprep.subr.mxu0 0.0
    %801 = vmatpush2.msra.mxu0 0.0
    %802 = vmatprep.subr.mxu0 0.0
    %803 = vmatpush2.msra.mxu0 0.0
    %804 = vmatprep.subr.mxu0 0.0
    %805 = vmatpush2.msra.mxu0 0.0
    %806 = vmatprep.subr.mxu0 0.0
    %807 = vmatpush2.msra.mxu0 0.0
    %808 = vmatprep.subr.mxu0 0.0
    %809 = vmatpush2.msra.mxu0 0.0
    %810 = vmatprep.subr.mxu0 0.0
    %811 = vmatpush2.msra.mxu0 0.0
    %812 = vmatprep.subr.mxu0 0.0
    %813 = vmatpush2.msra.mxu0 0.0
    %814 = vmatprep.mubr.f32.mxu0 0.0
    %815 = vmatmul.mubr.f32.gmra.mxu0 %v748
    %v816 = vpop.f32.mrf.mxu0
    %v817 = vadd.f32 0.0, %v816
    %v818 = vpop.f32.mrf.mxu0
    %819 = vdwg.mxu0
    %v821 = vrot.slane %v817, 4
    %v822 = vrot.slane %v817, 5
    %v825 = vadd.f32 %v157, %v821
    %v826 = vadd.f32 %v162, %v822
    %v827 = vxor.u32 %v825, 2147483648
    %v828 = vxor.u32 %v826, 2147483648
    %v829 = vmul.f32 %v827, 1.442695
    %v830 = vpow.pop %v829
    %v831 = vmul.f32 %v828, 1.442695
    %v832 = vpow.pop %v831
    %v833 = vadd.f32 %v830, 1.0
    %v834 = vadd.f32 %v832, 1.0
    %v835 = vrcp.pop %v833
    %v836 = vmul.f32 1.0, %v835
    %v837 = vrcp.pop %v834
    %v838 = vmul.f32 1.0, %v837
    %v839 = vtanh.pop %v825
    %v840 = vtanh.pop %v826
    %v843 = vrot.slane %v718, 7
    %v844 = vrot.slane %v719, 7
    %v847 = vmul.f32 %v836, %v843
    %v848 = vmul.f32 %v838, %v844
    %851 = vrot.lane.b32.xlu0 %v839, 64
    %v852 = vpop.permute.xlu0 %851
    %853 = vrot.lane.b32.xlu0 %v840, 64
    %v854 = vpop.permute.xlu0 %853
    %v857 = vmul.f32 %v836, %v852
    %v858 = vmul.f32 %v838, %v854
    %861 = vrot.lane.b32.xlu0 %v857, 32
    %v862 = vpop.permute.xlu0 %861
    %863 = vrot.lane.b32.xlu0 %v858, 32
    %v864 = vpop.permute.xlu0 %863
    %v867 = vadd.f32 %v847, %v862
    %v868 = vadd.f32 %v848, %v864
    %v869 = vtanh.pop %v867
    %v870 = vtanh.pop %v868
    %873 = vrot.lane.b32.xlu0 %v869, 64
    %v874 = vpop.permute.xlu0 %873
    %875 = vrot.lane.b32.xlu0 %v870, 64
    %v876 = vpop.permute.xlu0 %875
    %v879 = vmul.f32 %v836, %v874
    %v880 = vmul.f32 %v838, %v876
    %v883 = vrot.slane %v880, 7
    %vm884 = vcmask 1045509
    %v885 = vsel %vm884, %v883, %v879
    %886 = vrot.lane.b32.xlu0 %v885, 32
    %v887 = vpop.permute.xlu0 %886
    %s889 = scalar_lea.vmem [#allocation2], 8
    %vm890 = vcmask 259076
    %891 = vst.msk [vmem:[%s889 - $0x4] sm:$0x30] %vm890, %v887
    %v892 = vrot.slane %v879, 4
    %v893 = vrot.slane %v880, 3
    %v894 = vsel %vm296, %v893, %v892
    %895 = vrot.lane.b32.xlu0 %v894, 32
    %v896 = vpop.permute.xlu0 %895
    %v897 = vsel %vm165, %v896, 0
    %899 = vmatprep.subr.mxu0 0.0
    %900 = vmatpush1.msra.mxu0 0.0
    %901 = vmatprep.subr.mxu0 0.0
    %902 = vmatpush1.msra.mxu0 0.0
    %903 = vmatprep.subr.mxu0 0.0
    %904 = vmatpush1.msra.mxu0 0.0
    %905 = vmatprep.subr.mxu0 0.0
    %906 = vmatpush1.msra.mxu0 0.0
    %907 = vmatprep.subr.mxu0 0.0
    %908 = vmatpush1.msra.mxu0 0.0
    %909 = vmatprep.subr.mxu0 0.0
    %910 = vmatpush1.msra.mxu0 0.0
    %911 = vmatprep.subr.mxu0 0.0
    %912 = vmatpush1.msra.mxu0 0.0
    %913 = vmatprep.subr.mxu0 0.0
    %914 = vmatpush1.msra.mxu0 0.0
    %915 = vmatprep.subr.mxu0 0.0
    %916 = vmatpush1.msra.mxu0 0.0
    %917 = vmatprep.subr.mxu0 0.0
    %918 = vmatpush1.msra.mxu0 0.0
    %919 = vmatprep.subr.mxu0 0.0
    %920 = vmatpush1.msra.mxu0 0.0
    %921 = vmatprep.subr.mxu0 0.0
    %922 = vmatpush1.msra.mxu0 0.0
    %923 = vmatprep.subr.mxu0 0.0
    %924 = vmatpush1.msra.mxu0 %v71
    %925 = vmatprep.subr.mxu0 0.0
    %926 = vmatpush1.msra.mxu0 %v70
    %927 = vmatprep.subr.mxu0 0.0
    %928 = vmatpush1.msra.mxu0 %v69
    %929 = vmatprep.subr.mxu0 0.0
    %930 = vmatpush1.msra.mxu0 %v68
    %931 = vmatprep.subr.mxu0 0.0
    %932 = vmatpush2.msra.mxu0 0.0
    %933 = vmatprep.subr.mxu0 0.0
    %934 = vmatpush2.msra.mxu0 0.0
    %935 = vmatprep.subr.mxu0 0.0
    %936 = vmatpush2.msra.mxu0 0.0
    %937 = vmatprep.subr.mxu0 0.0
    %938 = vmatpush2.msra.mxu0 0.0
    %939 = vmatprep.subr.mxu0 0.0
    %940 = vmatpush2.msra.mxu0 0.0
    %941 = vmatprep.subr.mxu0 0.0
    %942 = vmatpush2.msra.mxu0 0.0
    %943 = vmatprep.subr.mxu0 0.0
    %944 = vmatpush2.msra.mxu0 0.0
    %945 = vmatprep.subr.mxu0 0.0
    %946 = vmatpush2.msra.mxu0 0.0
    %947 = vmatprep.subr.mxu0 0.0
    %948 = vmatpush2.msra.mxu0 0.0
    %949 = vmatprep.subr.mxu0 0.0
    %950 = vmatpush2.msra.mxu0 0.0
    %951 = vmatprep.subr.mxu0 0.0
    %952 = vmatpush2.msra.mxu0 0.0
    %953 = vmatprep.subr.mxu0 0.0
    %954 = vmatpush2.msra.mxu0 0.0
    %955 = vmatprep.subr.mxu0 0.0
    %956 = vmatpush2.msra.mxu0 0.0
    %957 = vmatprep.subr.mxu0 0.0
    %958 = vmatpush2.msra.mxu0 0.0
    %959 = vmatprep.subr.mxu0 0.0
    %960 = vmatpush2.msra.mxu0 0.0
    %961 = vmatprep.subr.mxu0 0.0
    %962 = vmatpush2.msra.mxu0 0.0
    %963 = vmatprep.mubr.f32.mxu0 0.0
    %964 = vmatmul.mubr.f32.gmra.mxu0 %v897
    %v965 = vpop.f32.mrf.mxu0
    %v966 = vadd.f32 0.0, %v965
    %v967 = vpop.f32.mrf.mxu0
    %968 = vdwg.mxu0
    %v970 = vrot.slane %v966, 3
    %v971 = vrot.slane %v966, 4
    %v974 = vadd.f32 %v157, %v970
    %v975 = vadd.f32 %v162, %v971
    %v976 = vxor.u32 %v974, 2147483648
    %v977 = vxor.u32 %v975, 2147483648
    %v978 = vmul.f32 %v976, 1.442695
    %v979 = vpow.pop %v978
    %v980 = vmul.f32 %v977, 1.442695
    %v981 = vpow.pop %v980
    %v982 = vadd.f32 %v979, 1.0
    %v983 = vadd.f32 %v981, 1.0
    %v984 = vrcp.pop %v982
    %v985 = vmul.f32 1.0, %v984
    %v986 = vrcp.pop %v983
    %v987 = vmul.f32 1.0, %v986
    %v988 = vtanh.pop %v974
    %v989 = vtanh.pop %v975
    %v992 = vrot.slane %v867, 7
    %v993 = vrot.slane %v868, 7
    %v996 = vmul.f32 %v985, %v992
    %v997 = vmul.f32 %v987, %v993
    %1000 = vrot.lane.b32.xlu0 %v988, 64
    %v1001 = vpop.permute.xlu0 %1000
    %1002 = vrot.lane.b32.xlu0 %v989, 64
    %v1003 = vpop.permute.xlu0 %1002
    %v1006 = vmul.f32 %v985, %v1001
    %v1007 = vmul.f32 %v987, %v1003
    %1010 = vrot.lane.b32.xlu0 %v1006, 32
    %v1011 = vpop.permute.xlu0 %1010
    %1012 = vrot.lane.b32.xlu0 %v1007, 32
    %v1013 = vpop.permute.xlu0 %1012
    %v1016 = vadd.f32 %v996, %v1011
    %v1017 = vadd.f32 %v997, %v1013
    %v1018 = vtanh.pop %v1016
    %v1019 = vtanh.pop %v1017
    %1022 = vrot.lane.b32.xlu0 %v1018, 64
    %v1023 = vpop.permute.xlu0 %1022
    %1024 = vrot.lane.b32.xlu0 %v1019, 64
    %v1025 = vpop.permute.xlu0 %1024
    %v1028 = vmul.f32 %v985, %v1023
    %v1029 = vmul.f32 %v987, %v1025
    %v1032 = vrot.slane %v1029, 7
    %vm1033 = vcmask 1046534
    %v1034 = vsel %vm1033, %v1032, %v1028
    %1035 = vrot.lane.b32.xlu0 %v1034, 32
    %v1036 = vpop.permute.xlu0 %1035
    %s1038 = scalar_lea.vmem [#allocation2], 10
    %vm1039 = vcmask 260101
    %1040 = vst.msk [vmem:[%s1038 - $0x5] sm:$0x60] %vm1039, %v1036
    %v1041 = vrot.slane %v1028, 5
    %v1042 = vrot.slane %v1029, 4
    %v1043 = vsel %vm296, %v1042, %v1041
    %1044 = vrot.lane.b32.xlu0 %v1043, 32
    %v1045 = vpop.permute.xlu0 %1044
    %v1046 = vsel %vm165, %v1045, 0
    %1048 = vmatprep.subr.mxu0 0.0
    %1049 = vmatpush1.msra.mxu0 0.0
    %1050 = vmatprep.subr.mxu0 0.0
    %1051 = vmatpush1.msra.mxu0 0.0
    %1052 = vmatprep.subr.mxu0 0.0
    %1053 = vmatpush1.msra.mxu0 0.0
    %1054 = vmatprep.subr.mxu0 0.0
    %1055 = vmatpush1.msra.mxu0 0.0
    %1056 = vmatprep.subr.mxu0 0.0
    %1057 = vmatpush1.msra.mxu0 0.0
    %1058 = vmatprep.subr.mxu0 0.0
    %1059 = vmatpush1.msra.mxu0 0.0
    %1060 = vmatprep.subr.mxu0 0.0
    %1061 = vmatpush1.msra.mxu0 0.0
    %1062 = vmatprep.subr.mxu0 0.0
    %1063 = vmatpush1.msra.mxu0 0.0
    %1064 = vmatprep.subr.mxu0 0.0
    %1065 = vmatpush1.msra.mxu0 0.0
    %1066 = vmatprep.subr.mxu0 0.0
    %1067 = vmatpush1.msra.mxu0 0.0
    %1068 = vmatprep.subr.mxu0 0.0
    %1069 = vmatpush1.msra.mxu0 0.0
    %1070 = vmatprep.subr.mxu0 0.0
    %1071 = vmatpush1.msra.mxu0 0.0
    %1072 = vmatprep.subr.mxu0 0.0
    %1073 = vmatpush1.msra.mxu0 %v71
    %1074 = vmatprep.subr.mxu0 0.0
    %1075 = vmatpush1.msra.mxu0 %v70
    %1076 = vmatprep.subr.mxu0 0.0
    %1077 = vmatpush1.msra.mxu0 %v69
    %1078 = vmatprep.subr.mxu0 0.0
    %1079 = vmatpush1.msra.mxu0 %v68
    %1080 = vmatprep.subr.mxu0 0.0
    %1081 = vmatpush2.msra.mxu0 0.0
    %1082 = vmatprep.subr.mxu0 0.0
    %1083 = vmatpush2.msra.mxu0 0.0
    %1084 = vmatprep.subr.mxu0 0.0
    %1085 = vmatpush2.msra.mxu0 0.0
    %1086 = vmatprep.subr.mxu0 0.0
    %1087 = vmatpush2.msra.mxu0 0.0
    %1088 = vmatprep.subr.mxu0 0.0
    %1089 = vmatpush2.msra.mxu0 0.0
    %1090 = vmatprep.subr.mxu0 0.0
    %1091 = vmatpush2.msra.mxu0 0.0
    %1092 = vmatprep.subr.mxu0 0.0
    %1093 = vmatpush2.msra.mxu0 0.0
    %1094 = vmatprep.subr.mxu0 0.0
    %1095 = vmatpush2.msra.mxu0 0.0
    %1096 = vmatprep.subr.mxu0 0.0
    %1097 = vmatpush2.msra.mxu0 0.0
    %1098 = vmatprep.subr.mxu0 0.0
    %1099 = vmatpush2.msra.mxu0 0.0
    %1100 = vmatprep.subr.mxu0 0.0
    %1101 = vmatpush2.msra.mxu0 0.0
    %1102 = vmatprep.subr.mxu0 0.0
    %1103 = vmatpush2.msra.mxu0 0.0
    %1104 = vmatprep.subr.mxu0 0.0
    %1105 = vmatpush2.msra.mxu0 0.0
    %1106 = vmatprep.subr.mxu0 0.0
    %1107 = vmatpush2.msra.mxu0 0.0
    %1108 = vmatprep.subr.mxu0 0.0
    %1109 = vmatpush2.msra.mxu0 0.0
    %1110 = vmatprep.subr.mxu0 0.0
    %1111 = vmatpush2.msra.mxu0 0.0
    %1112 = vmatprep.mubr.f32.mxu0 0.0
    %1113 = vmatmul.mubr.f32.gmra.mxu0 %v1046
    %v1114 = vpop.f32.mrf.mxu0
    %v1115 = vadd.f32 0.0, %v1114
    %v1116 = vpop.f32.mrf.mxu0
    %1117 = vdwg.mxu0
    %v1119 = vrot.slane %v1115, 2
    %v1120 = vrot.slane %v1115, 3
    %v1123 = vadd.f32 %v157, %v1119
    %v1124 = vadd.f32 %v162, %v1120
    %v1125 = vxor.u32 %v1123, 2147483648
    %v1126 = vxor.u32 %v1124, 2147483648
    %v1127 = vmul.f32 %v1125, 1.442695
    %v1128 = vpow.pop %v1127
    %v1129 = vmul.f32 %v1126, 1.442695
    %v1130 = vpow.pop %v1129
    %v1131 = vadd.f32 %v1128, 1.0
    %v1132 = vadd.f32 %v1130, 1.0
    %v1133 = vrcp.pop %v1131
    %v1134 = vmul.f32 1.0, %v1133
    %v1135 = vrcp.pop %v1132
    %v1136 = vmul.f32 1.0, %v1135
    %v1137 = vtanh.pop %v1123
    %v1138 = vtanh.pop %v1124
    %v1141 = vrot.slane %v1016, 7
    %v1142 = vrot.slane %v1017, 7
    %v1145 = vmul.f32 %v1134, %v1141
    %v1146 = vmul.f32 %v1136, %v1142
    %1149 = vrot.lane.b32.xlu0 %v1137, 64
    %v1150 = vpop.permute.xlu0 %1149
    %1151 = vrot.lane.b32.xlu0 %v1138, 64
    %v1152 = vpop.permute.xlu0 %1151
    %v1155 = vmul.f32 %v1134, %v1150
    %v1156 = vmul.f32 %v1136, %v1152
    %1159 = vrot.lane.b32.xlu0 %v1155, 32
    %v1160 = vpop.permute.xlu0 %1159
    %1161 = vrot.lane.b32.xlu0 %v1156, 32
    %v1162 = vpop.permute.xlu0 %1161
    %v1165 = vadd.f32 %v1145, %v1160
    %v1166 = vadd.f32 %v1146, %v1162
    %v1167 = vtanh.pop %v1165
    %v1168 = vtanh.pop %v1166
    %1171 = vrot.lane.b32.xlu0 %v1167, 64
    %v1172 = vpop.permute.xlu0 %1171
    %1173 = vrot.lane.b32.xlu0 %v1168, 64
    %v1174 = vpop.permute.xlu0 %1173
    %v1177 = vmul.f32 %v1134, %v1172
    %v1178 = vmul.f32 %v1136, %v1174
    %v1181 = vrot.slane %v1178, 7
    %vm1182 = vcmask 1047559
    %v1183 = vsel %vm1182, %v1181, %v1177
    %1184 = vrot.lane.b32.xlu0 %v1183, 32
    %v1185 = vpop.permute.xlu0 %1184
    %s1187 = scalar_lea.vmem [#allocation2], 12
    %vm1188 = vcmask 261126
    %1189 = vst.msk [vmem:[%s1187 - $0x6] sm:$0xc0] %vm1188, %v1185
    %v1190 = vrot.slane %v1177, 6
    %v1191 = vrot.slane %v1178, 5
    %v1192 = vsel %vm296, %v1191, %v1190
    %1193 = vrot.lane.b32.xlu0 %v1192, 32
    %v1194 = vpop.permute.xlu0 %1193
    %v1195 = vsel %vm165, %v1194, 0
    %1197 = vmatprep.subr.mxu0 0.0
    %1198 = vmatpush1.msra.mxu0 0.0
    %1199 = vmatprep.subr.mxu0 0.0
    %1200 = vmatpush1.msra.mxu0 0.0
    %1201 = vmatprep.subr.mxu0 0.0
    %1202 = vmatpush1.msra.mxu0 0.0
    %1203 = vmatprep.subr.mxu0 0.0
    %1204 = vmatpush1.msra.mxu0 0.0
    %1205 = vmatprep.subr.mxu0 0.0
    %1206 = vmatpush1.msra.mxu0 0.0
    %1207 = vmatprep.subr.mxu0 0.0
    %1208 = vmatpush1.msra.mxu0 0.0
    %1209 = vmatprep.subr.mxu0 0.0
    %1210 = vmatpush1.msra.mxu0 0.0
    %1211 = vmatprep.subr.mxu0 0.0
    %1212 = vmatpush1.msra.mxu0 0.0
    %1213 = vmatprep.subr.mxu0 0.0
    %1214 = vmatpush1.msra.mxu0 0.0
    %1215 = vmatprep.subr.mxu0 0.0
    %1216 = vmatpush1.msra.mxu0 0.0
    %1217 = vmatprep.subr.mxu0 0.0
    %1218 = vmatpush1.msra.mxu0 0.0
    %1219 = vmatprep.subr.mxu0 0.0
    %1220 = vmatpush1.msra.mxu0 0.0
    %1221 = vmatprep.subr.mxu0 0.0
    %1222 = vmatpush1.msra.mxu0 %v71
    %1223 = vmatprep.subr.mxu0 0.0
    %1224 = vmatpush1.msra.mxu0 %v70
    %1225 = vmatprep.subr.mxu0 0.0
    %1226 = vmatpush1.msra.mxu0 %v69
    %1227 = vmatprep.subr.mxu0 0.0
    %1228 = vmatpush1.msra.mxu0 %v68
    %1229 = vmatprep.subr.mxu0 0.0
    %1230 = vmatpush2.msra.mxu0 0.0
    %1231 = vmatprep.subr.mxu0 0.0
    %1232 = vmatpush2.msra.mxu0 0.0
    %1233 = vmatprep.subr.mxu0 0.0
    %1234 = vmatpush2.msra.mxu0 0.0
    %1235 = vmatprep.subr.mxu0 0.0
    %1236 = vmatpush2.msra.mxu0 0.0
    %1237 = vmatprep.subr.mxu0 0.0
    %1238 = vmatpush2.msra.mxu0 0.0
    %1239 = vmatprep.subr.mxu0 0.0
    %1240 = vmatpush2.msra.mxu0 0.0
    %1241 = vmatprep.subr.mxu0 0.0
    %1242 = vmatpush2.msra.mxu0 0.0
    %1243 = vmatprep.subr.mxu0 0.0
    %1244 = vmatpush2.msra.mxu0 0.0
    %1245 = vmatprep.subr.mxu0 0.0
    %1246 = vmatpush2.msra.mxu0 0.0
    %1247 = vmatprep.subr.mxu0 0.0
    %1248 = vmatpush2.msra.mxu0 0.0
    %1249 = vmatprep.subr.mxu0 0.0
    %1250 = vmatpush2.msra.mxu0 0.0
    %1251 = vmatprep.subr.mxu0 0.0
    %1252 = vmatpush2.msra.mxu0 0.0
    %1253 = vmatprep.subr.mxu0 0.0
    %1254 = vmatpush2.msra.mxu0 0.0
    %1255 = vmatprep.subr.mxu0 0.0
    %1256 = vmatpush2.msra.mxu0 0.0
    %1257 = vmatprep.subr.mxu0 0.0
    %1258 = vmatpush2.msra.mxu0 0.0
    %1259 = vmatprep.subr.mxu0 0.0
    %1260 = vmatpush2.msra.mxu0 0.0
    %1261 = vmatprep.mubr.f32.mxu0 0.0
    %1262 = vmatmul.mubr.f32.gmra.mxu0 %v1195
    %v1263 = vpop.f32.mrf.mxu0
    %v1264 = vadd.f32 0.0, %v1263
    %v1265 = vpop.f32.mrf.mxu0
    %1266 = vdwg.mxu0
    %v1268 = vrot.slane %v1264, 1
    %v1269 = vrot.slane %v1264, 2
    %v1272 = vadd.f32 %v157, %v1268
    %v1273 = vadd.f32 %v162, %v1269
    %v1274 = vxor.u32 %v1272, 2147483648
    %v1275 = vxor.u32 %v1273, 2147483648
    %v1276 = vmul.f32 %v1274, 1.442695
    %v1277 = vpow.pop %v1276
    %v1278 = vmul.f32 %v1275, 1.442695
    %v1279 = vpow.pop %v1278
    %v1280 = vadd.f32 %v1277, 1.0
    %v1281 = vadd.f32 %v1279, 1.0
    %v1282 = vrcp.pop %v1280
    %v1283 = vmul.f32 1.0, %v1282
    %v1284 = vrcp.pop %v1281
    %v1285 = vmul.f32 1.0, %v1284
    %v1286 = vtanh.pop %v1272
    %v1287 = vtanh.pop %v1273
    %v1290 = vrot.slane %v1165, 7
    %v1291 = vrot.slane %v1166, 7
    %v1294 = vmul.f32 %v1283, %v1290
    %v1295 = vmul.f32 %v1285, %v1291
    %1298 = vrot.lane.b32.xlu0 %v1286, 64
    %v1299 = vpop.permute.xlu0 %1298
    %1300 = vrot.lane.b32.xlu0 %v1287, 64
    %v1301 = vpop.permute.xlu0 %1300
    %v1304 = vmul.f32 %v1283, %v1299
    %v1305 = vmul.f32 %v1285, %v1301
    %1308 = vrot.lane.b32.xlu0 %v1304, 32
    %v1309 = vpop.permute.xlu0 %1308
    %1310 = vrot.lane.b32.xlu0 %v1305, 32
    %v1311 = vpop.permute.xlu0 %1310
    %v1314 = vadd.f32 %v1294, %v1309
    %v1315 = vadd.f32 %v1295, %v1311
    %v1316 = vtanh.pop %v1314
    %v1317 = vtanh.pop %v1315
    %1320 = vrot.lane.b32.xlu0 %v1316, 64
    %v1321 = vpop.permute.xlu0 %1320
    %1322 = vrot.lane.b32.xlu0 %v1317, 64
    %v1323 = vpop.permute.xlu0 %1322
    %v1326 = vmul.f32 %v1283, %v1321
    %v1327 = vmul.f32 %v1285, %v1323
    %v1330 = vrot.slane %v1327, 7
    %1331 = vrot.lane.b32.xlu0 %v1326, 32
    %v1332 = vpop.permute.xlu0 %1331
    %1333 = vrot.lane.b32.xlu0 %v1330, 32
    %v1334 = vpop.permute.xlu0 %1333
    %s1337 = scalar_lea.vmem [#allocation2], 14
    %vm1338 = vcmask 261127
    %1339 = vst.msk [vmem:[%s1337 - $0x7] sm:$0x80] %vm1338, %v1332
    %vm1340 = vcmask 253952
    %1341 = vst.msk [vmem:[%s1337 + $0x1] sm:$0x1] %vm1340, %v1334
    %v1342 = vld [vmem:[%s4] sm:$0xff]
    %v1343 = vld [vmem:[%s4 + $0x8] sm:$0xff]
    %v1344 = vld [vmem:[%s4 + $0x10] sm:$0xff]
    %v1345 = vld [vmem:[%s4 + $0x18] sm:$0xff]
    %v1346 = vld [vmem:[%s5] sm:$0xff]
    %v1347 = vld [vmem:[%s5 + $0x8] sm:$0xff]
    %v1348 = vld [vmem:[%s5 + $0x10] sm:$0xff]
    %v1349 = vld [vmem:[%s5 + $0x18] sm:$0xff]
    %v1350 = vld [vmem:[%s6] sm:$0x1]
    %v1351 = vld [vmem:[#allocation2] sm:$0x3]
    %v1352 = vld [vmem:[#allocation2 + $0x2] sm:$0x3]
    %v1353 = vld [vmem:[#allocation2 + $0x4] sm:$0x3]
    %v1354 = vld [vmem:[#allocation2 + $0x6] sm:$0x3]
    %v1355 = vld [vmem:[#allocation2 + $0x8] sm:$0x3]
    %v1356 = vld [vmem:[#allocation2 + $0xa] sm:$0x3]
    %v1357 = vld [vmem:[#allocation2 + $0xc] sm:$0x3]
    %v1358 = vld [vmem:[#allocation2 + $0xe] sm:$0x3]
    %v1360 = vlaneseq
    %v1361 = vshrl.u32 %v1360, 7
    %v1362 = vsub.s32 0, %v1361
    %v1363 = vrot.slane %v1350, %v1362
    %v1372 = vcombine.low %v1351, %v1352
    %v1373 = vcombine.low %v1353, %v1354
    %v1375 = vunpack.c.l.s4 1983009808
    %v1376 = vunpack.c.0.s8 %v1375
    %v1377 = vlaneseq
    %v1378 = vshrl.u32 %v1377, 7
    %v1379 = vsub.s32 %v1376, %v1378
    %v1380 = vrot.slane %v1372, %v1379
    %v1382 = vunpack.c.l.s4 1983009808
    %v1383 = vunpack.c.0.s8 %v1382
    %v1384 = vlaneseq
    %v1385 = vshrl.u32 %v1384, 7
    %v1386 = vsub.s32 %v1383, %v1385
    %v1387 = vrot.slane %v1373, %v1386
    %v1388 = vcombine.low %v1380, %v1387
    %v1389 = vcombine.low %v1355, %v1356
    %v1390 = vcombine.low %v1357, %v1358
    %v1392 = vunpack.c.l.s4 1983009808
    %v1393 = vunpack.c.0.s8 %v1392
    %v1394 = vlaneseq
    %v1395 = vshrl.u32 %v1394, 7
    %v1396 = vsub.s32 %v1393, %v1395
    %v1397 = vrot.slane %v1389, %v1396
    %v1399 = vunpack.c.l.s4 1983009808
    %v1400 = vunpack.c.0.s8 %v1399
    %v1401 = vlaneseq
    %v1402 = vshrl.u32 %v1401, 7
    %v1403 = vsub.s32 %v1400, %v1402
    %v1404 = vrot.slane %v1390, %v1403
    %v1405 = vcombine.low %v1397, %v1404
    %v1406 = vcombine.low %v1363, %v1363
    %v1408 = vunpack.c.l.s4 1983009808
    %v1409 = vunpack.c.0.s8 %v1408
    %v1410 = vlaneseq
    %v1411 = vshrl.u32 %v1410, 7
    %v1412 = vsub.s32 %v1409, %v1411
    %v1413 = vrot.slane %v1406, %v1412
    %v1414 = vcombine.low %v1413, %v1413
    %v1416 = vsel %vm165, %v1388, 0
    %v1418 = vsel %vm165, %v1405, 0
    %1420 = vmatprep.subr.mxu0 0.0
    %1421 = vmatpush1.msra.mxu0 0.0
    %1422 = vmatprep.subr.mxu0 0.0
    %1423 = vmatpush1.msra.mxu0 0.0
    %1424 = vmatprep.subr.mxu0 0.0
    %1425 = vmatpush1.msra.mxu0 0.0
    %1426 = vmatprep.subr.mxu0 0.0
    %1427 = vmatpush1.msra.mxu0 0.0
    %1428 = vmatprep.subr.mxu0 0.0
    %1429 = vmatpush1.msra.mxu0 0.0
    %1430 = vmatprep.subr.mxu0 0.0
    %1431 = vmatpush1.msra.mxu0 0.0
    %1432 = vmatprep.subr.mxu0 0.0
    %1433 = vmatpush1.msra.mxu0 0.0
    %1434 = vmatprep.subr.mxu0 0.0
    %1435 = vmatpush1.msra.mxu0 0.0
    %1436 = vmatprep.subr.mxu0 0.0
    %1437 = vmatpush1.msra.mxu0 0.0
    %1438 = vmatprep.subr.mxu0 0.0
    %1439 = vmatpush1.msra.mxu0 0.0
    %1440 = vmatprep.subr.mxu0 0.0
    %1441 = vmatpush1.msra.mxu0 0.0
    %1442 = vmatprep.subr.mxu0 0.0
    %1443 = vmatpush1.msra.mxu0 0.0
    %1444 = vmatprep.subr.mxu0 0.0
    %1445 = vmatpush1.msra.mxu0 %v1345
    %1446 = vmatprep.subr.mxu0 0.0
    %1447 = vmatpush1.msra.mxu0 %v1344
    %1448 = vmatprep.subr.mxu0 0.0
    %1449 = vmatpush1.msra.mxu0 %v1343
    %1450 = vmatprep.subr.mxu0 0.0
    %1451 = vmatpush1.msra.mxu0 %v1342
    %1452 = vmatprep.subr.mxu0 0.0
    %1453 = vmatpush2.msra.mxu0 0.0
    %1454 = vmatprep.subr.mxu0 0.0
    %1455 = vmatpush2.msra.mxu0 0.0
    %1456 = vmatprep.subr.mxu0 0.0
    %1457 = vmatpush2.msra.mxu0 0.0
    %1458 = vmatprep.subr.mxu0 0.0
    %1459 = vmatpush2.msra.mxu0 0.0
    %1460 = vmatprep.subr.mxu0 0.0
    %1461 = vmatpush2.msra.mxu0 0.0
    %1462 = vmatprep.subr.mxu0 0.0
    %1463 = vmatpush2.msra.mxu0 0.0
    %1464 = vmatprep.subr.mxu0 0.0
    %1465 = vmatpush2.msra.mxu0 0.0
    %1466 = vmatprep.subr.mxu0 0.0
    %1467 = vmatpush2.msra.mxu0 0.0
    %1468 = vmatprep.subr.mxu0 0.0
    %1469 = vmatpush2.msra.mxu0 0.0
    %1470 = vmatprep.subr.mxu0 0.0
    %1471 = vmatpush2.msra.mxu0 0.0
    %1472 = vmatprep.subr.mxu0 0.0
    %1473 = vmatpush2.msra.mxu0 0.0
    %1474 = vmatprep.subr.mxu0 0.0
    %1475 = vmatpush2.msra.mxu0 0.0
    %1476 = vmatprep.subr.mxu0 0.0
    %1477 = vmatpush2.msra.mxu0 0.0
    %1478 = vmatprep.subr.mxu0 0.0
    %1479 = vmatpush2.msra.mxu0 0.0
    %1480 = vmatprep.subr.mxu0 0.0
    %1481 = vmatpush2.msra.mxu0 0.0
    %1482 = vmatprep.subr.mxu0 0.0
    %1483 = vmatpush2.msra.mxu0 0.0
    %1484 = vmatprep.mubr.f32.mxu0 0.0
    %1485 = vmatmul.mubr.f32.gmra.mxu0 %v1416
    %v1486 = vpop.f32.mrf.mxu0
    %v1487 = vadd.f32 %v1414, %v1486
    %v1488 = vpop.f32.mrf.mxu0
    %1489 = vmatprep.mubr.f32.mxu0 0.0
    %1490 = vmatmul.mubr.f32.gmra.mxu0 %v1418
    %v1491 = vpop.f32.mrf.mxu0
    %v1492 = vadd.f32 %v1414, %v1491
    %v1493 = vpop.f32.mrf.mxu0
    %1494 = vdwg.mxu0
    %v1497 = vcombine.high %v1487, %v1487
    %v1499 = vunpack.c.l.s4 1983009808
    %v1500 = vunpack.c.0.s8 %v1499
    %v1501 = vlaneseq
    %v1502 = vshrl.u32 %v1501, 7
    %v1503 = vsub.s32 %v1500, %v1502
    %v1504 = vrot.slane %v1487, %v1503
    %v1506 = vunpack.c.l.s4 1983009808
    %v1507 = vunpack.c.0.s8 %v1506
    %v1508 = vlaneseq
    %v1509 = vshrl.u32 %v1508, 7
    %v1510 = vsub.s32 %v1507, %v1509
    %v1511 = vrot.slane %v1497, %v1510
    %v1512 = vcombine.high %v1504, %v1504
    %v1513 = vcombine.high %v1511, %v1511
    %v1514 = vcombine.high %v1492, %v1492
    %v1516 = vunpack.c.l.s4 1983009808
    %v1517 = vunpack.c.0.s8 %v1516
    %v1518 = vlaneseq
    %v1519 = vshrl.u32 %v1518, 7
    %v1520 = vsub.s32 %v1517, %v1519
    %v1521 = vrot.slane %v1492, %v1520
    %v1523 = vunpack.c.l.s4 1983009808
    %v1524 = vunpack.c.0.s8 %v1523
    %v1525 = vlaneseq
    %v1526 = vshrl.u32 %v1525, 7
    %v1527 = vsub.s32 %v1524, %v1526
    %v1528 = vrot.slane %v1514, %v1527
    %v1529 = vcombine.high %v1521, %v1521
    %v1530 = vcombine.high %v1528, %v1528
    %1539 = vmatprep.subr.mxu0 0.0
    %1540 = vmatpush1.msra.mxu0 0.0
    %1541 = vmatprep.subr.mxu0 0.0
    %1542 = vmatpush1.msra.mxu0 0.0
    %1543 = vmatprep.subr.mxu0 0.0
    %1544 = vmatpush1.msra.mxu0 0.0
    %1545 = vmatprep.subr.mxu0 0.0
    %1546 = vmatpush1.msra.mxu0 0.0
    %1547 = vmatprep.subr.mxu0 0.0
    %1548 = vmatpush1.msra.mxu0 0.0
    %1549 = vmatprep.subr.mxu0 0.0
    %1550 = vmatpush1.msra.mxu0 0.0
    %1551 = vmatprep.subr.mxu0 0.0
    %1552 = vmatpush1.msra.mxu0 0.0
    %1553 = vmatprep.subr.mxu0 0.0
    %1554 = vmatpush1.msra.mxu0 0.0
    %1555 = vmatprep.subr.mxu0 0.0
    %1556 = vmatpush1.msra.mxu0 0.0
    %1557 = vmatprep.subr.mxu0 0.0
    %1558 = vmatpush1.msra.mxu0 0.0
    %1559 = vmatprep.subr.mxu0 0.0
    %1560 = vmatpush1.msra.mxu0 0.0
    %1561 = vmatprep.subr.mxu0 0.0
    %1562 = vmatpush1.msra.mxu0 0.0
    %1563 = vmatprep.subr.mxu0 0.0
    %1564 = vmatpush1.msra.mxu0 %v1349
    %1565 = vmatprep.subr.mxu0 0.0
    %1566 = vmatpush1.msra.mxu0 %v1348
    %1567 = vmatprep.subr.mxu0 0.0
    %1568 = vmatpush1.msra.mxu0 %v1347
    %1569 = vmatprep.subr.mxu0 0.0
    %1570 = vmatpush1.msra.mxu0 %v1346
    %1571 = vmatprep.subr.mxu0 0.0
    %1572 = vmatpush2.msra.mxu0 0.0
    %1573 = vmatprep.subr.mxu0 0.0
    %1574 = vmatpush2.msra.mxu0 0.0
    %1575 = vmatprep.subr.mxu0 0.0
    %1576 = vmatpush2.msra.mxu0 0.0
    %1577 = vmatprep.subr.mxu0 0.0
    %1578 = vmatpush2.msra.mxu0 0.0
    %1579 = vmatprep.subr.mxu0 0.0
    %1580 = vmatpush2.msra.mxu0 0.0
    %1581 = vmatprep.subr.mxu0 0.0
    %1582 = vmatpush2.msra.mxu0 0.0
    %1583 = vmatprep.subr.mxu0 0.0
    %1584 = vmatpush2.msra.mxu0 0.0
    %1585 = vmatprep.subr.mxu0 0.0
    %1586 = vmatpush2.msra.mxu0 0.0
    %1587 = vmatprep.subr.mxu0 0.0
    %1588 = vmatpush2.msra.mxu0 0.0
    %1589 = vmatprep.subr.mxu0 0.0
    %1590 = vmatpush2.msra.mxu0 0.0
    %1591 = vmatprep.subr.mxu0 0.0
    %1592 = vmatpush2.msra.mxu0 0.0
    %1593 = vmatprep.subr.mxu0 0.0
    %1594 = vmatpush2.msra.mxu0 0.0
    %1595 = vmatprep.subr.mxu0 0.0
    %1596 = vmatpush2.msra.mxu0 0.0
    %1597 = vmatprep.subr.mxu0 0.0
    %1598 = vmatpush2.msra.mxu0 0.0
    %1599 = vmatprep.subr.mxu0 0.0
    %1600 = vmatpush2.msra.mxu0 0.0
    %1601 = vmatprep.subr.mxu0 0.0
    %1602 = vmatpush2.msra.mxu0 0.0
    %1603 = vmatprep.mubr.f32.mxu0 0.0
    %1604 = vmatmul.mubr.f32.gmra.mxu0 %v167
    %v1605 = vpop.f32.mrf.mxu0
    %v1606 = vadd.f32 0.0, %v1605
    %v1607 = vpop.f32.mrf.mxu0
    %1608 = vdwg.mxu0
    %v1609 = vadd.f32 %v1504, %v1606
    %v1610 = vxor.u32 %v1609, 2147483648
    %v1611 = vmul.f32 %v1610, 1.442695
    %v1612 = vpow.pop %v1611
    %v1613 = vadd.f32 %v1612, 1.0
    %v1614 = vrcp.pop %v1613
    %v1615 = vmul.f32 1.0, %v1614
    %v1616 = vtanh.pop %v1609
    %v1617 = vmul.f32 %v1615, 0.0
    %1619 = vrot.lane.b32.xlu0 %v1616, 64
    %v1620 = vpop.permute.xlu0 %1619
    %v1622 = vmul.f32 %v1615, %v1620
    %1624 = vrot.lane.b32.xlu0 %v1622, 32
    %v1625 = vpop.permute.xlu0 %1624
    %v1627 = vadd.f32 %v1617, %v1625
    %v1628 = vtanh.pop %v1627
    %1630 = vrot.lane.b32.xlu0 %v1628, 64
    %v1631 = vpop.permute.xlu0 %1630
    %v1633 = vmul.f32 %v1615, %v1631
    %v1636 = vunpack.c.l.s4 1983009808
    %v1637 = vunpack.c.0.s8 %v1636
    %v1638 = vlaneseq
    %v1639 = vshrl.u32 %v1638, 7
    %v1640 = vsub.s32 %v1637, %v1639
    %v1641 = vrot.slane %v1633, %v1640
    %1642 = vrot.lane.b32.xlu0 %v1641, 32
    %v1643 = vpop.permute.xlu0 %1642
    %v1644 = vsel %vm165, %v1643, 0
    %1646 = vmatprep.subr.mxu0 0.0
    %1647 = vmatpush1.msra.mxu0 0.0
    %1648 = vmatprep.subr.mxu0 0.0
    %1649 = vmatpush1.msra.mxu0 0.0
    %1650 = vmatprep.subr.mxu0 0.0
    %1651 = vmatpush1.msra.mxu0 0.0
    %1652 = vmatprep.subr.mxu0 0.0
    %1653 = vmatpush1.msra.mxu0 0.0
    %1654 = vmatprep.subr.mxu0 0.0
    %1655 = vmatpush1.msra.mxu0 0.0
    %1656 = vmatprep.subr.mxu0 0.0
    %1657 = vmatpush1.msra.mxu0 0.0
    %1658 = vmatprep.subr.mxu0 0.0
    %1659 = vmatpush1.msra.mxu0 0.0
    %1660 = vmatprep.subr.mxu0 0.0
    %1661 = vmatpush1.msra.mxu0 0.0
    %1662 = vmatprep.subr.mxu0 0.0
    %1663 = vmatpush1.msra.mxu0 0.0
    %1664 = vmatprep.subr.mxu0 0.0
    %1665 = vmatpush1.msra.mxu0 0.0
    %1666 = vmatprep.subr.mxu0 0.0
    %1667 = vmatpush1.msra.mxu0 0.0
    %1668 = vmatprep.subr.mxu0 0.0
    %1669 = vmatpush1.msra.mxu0 0.0
    %1670 = vmatprep.subr.mxu0 0.0
    %1671 = vmatpush1.msra.mxu0 %v1349
    %1672 = vmatprep.subr.mxu0 0.0
    %1673 = vmatpush1.msra.mxu0 %v1348
    %1674 = vmatprep.subr.mxu0 0.0
    %1675 = vmatpush1.msra.mxu0 %v1347
    %1676 = vmatprep.subr.mxu0 0.0
    %1677 = vmatpush1.msra.mxu0 %v1346
    %1678 = vmatprep.subr.mxu0 0.0
    %1679 = vmatpush2.msra.mxu0 0.0
    %1680 = vmatprep.subr.mxu0 0.0
    %1681 = vmatpush2.msra.mxu0 0.0
    %1682 = vmatprep.subr.mxu0 0.0
    %1683 = vmatpush2.msra.mxu0 0.0
    %1684 = vmatprep.subr.mxu0 0.0
    %1685 = vmatpush2.msra.mxu0 0.0
    %1686 = vmatprep.subr.mxu0 0.0
    %1687 = vmatpush2.msra.mxu0 0.0
    %1688 = vmatprep.subr.mxu0 0.0
    %1689 = vmatpush2.msra.mxu0 0.0
    %1690 = vmatprep.subr.mxu0 0.0
    %1691 = vmatpush2.msra.mxu0 0.0
    %1692 = vmatprep.subr.mxu0 0.0
    %1693 = vmatpush2.msra.mxu0 0.0
    %1694 = vmatprep.subr.mxu0 0.0
    %1695 = vmatpush2.msra.mxu0 0.0
    %1696 = vmatprep.subr.mxu0 0.0
    %1697 = vmatpush2.msra.mxu0 0.0
    %1698 = vmatprep.subr.mxu0 0.0
    %1699 = vmatpush2.msra.mxu0 0.0
    %1700 = vmatprep.subr.mxu0 0.0
    %1701 = vmatpush2.msra.mxu0 0.0
    %1702 = vmatprep.subr.mxu0 0.0
    %1703 = vmatpush2.msra.mxu0 0.0
    %1704 = vmatprep.subr.mxu0 0.0
    %1705 = vmatpush2.msra.mxu0 0.0
    %1706 = vmatprep.subr.mxu0 0.0
    %1707 = vmatpush2.msra.mxu0 0.0
    %1708 = vmatprep.subr.mxu0 0.0
    %1709 = vmatpush2.msra.mxu0 0.0
    %1710 = vmatprep.mubr.f32.mxu0 0.0
    %1711 = vmatmul.mubr.f32.gmra.mxu0 %v1644
    %v1712 = vpop.f32.mrf.mxu0
    %v1713 = vadd.f32 0.0, %v1712
    %v1714 = vpop.f32.mrf.mxu0
    %1715 = vdwg.mxu0
    %v1716 = vadd.f32 %v1512, %v1713
    %v1717 = vxor.u32 %v1716, 2147483648
    %v1718 = vmul.f32 %v1717, 1.442695
    %v1719 = vpow.pop %v1718
    %v1720 = vadd.f32 %v1719, 1.0
    %v1721 = vrcp.pop %v1720
    %v1722 = vmul.f32 1.0, %v1721
    %v1723 = vtanh.pop %v1716
    %v1724 = vmul.f32 %v1722, %v1627
    %1726 = vrot.lane.b32.xlu0 %v1723, 64
    %v1727 = vpop.permute.xlu0 %1726
    %v1729 = vmul.f32 %v1722, %v1727
    %1731 = vrot.lane.b32.xlu0 %v1729, 32
    %v1732 = vpop.permute.xlu0 %1731
    %v1734 = vadd.f32 %v1724, %v1732
    %v1735 = vtanh.pop %v1734
    %1737 = vrot.lane.b32.xlu0 %v1735, 64
    %v1738 = vpop.permute.xlu0 %1737
    %v1740 = vmul.f32 %v1722, %v1738
    %v1743 = vunpack.c.l.s4 1983009808
    %v1744 = vunpack.c.0.s8 %v1743
    %v1745 = vlaneseq
    %v1746 = vshrl.u32 %v1745, 7
    %v1747 = vsub.s32 %v1744, %v1746
    %v1748 = vrot.slane %v1740, %v1747
    %1749 = vrot.lane.b32.xlu0 %v1748, 32
    %v1750 = vpop.permute.xlu0 %1749
    %v1751 = vsel %vm165, %v1750, 0
    %1753 = vmatprep.subr.mxu0 0.0
    %1754 = vmatpush1.msra.mxu0 0.0
    %1755 = vmatprep.subr.mxu0 0.0
    %1756 = vmatpush1.msra.mxu0 0.0
    %1757 = vmatprep.subr.mxu0 0.0
    %1758 = vmatpush1.msra.mxu0 0.0
    %1759 = vmatprep.subr.mxu0 0.0
    %1760 = vmatpush1.msra.mxu0 0.0
    %1761 = vmatprep.subr.mxu0 0.0
    %1762 = vmatpush1.msra.mxu0 0.0
    %1763 = vmatprep.subr.mxu0 0.0
    %1764 = vmatpush1.msra.mxu0 0.0
    %1765 = vmatprep.subr.mxu0 0.0
    %1766 = vmatpush1.msra.mxu0 0.0
    %1767 = vmatprep.subr.mxu0 0.0
    %1768 = vmatpush1.msra.mxu0 0.0
    %1769 = vmatprep.subr.mxu0 0.0
    %1770 = vmatpush1.msra.mxu0 0.0
    %1771 = vmatprep.subr.mxu0 0.0
    %1772 = vmatpush1.msra.mxu0 0.0
    %1773 = vmatprep.subr.mxu0 0.0
    %1774 = vmatpush1.msra.mxu0 0.0
    %1775 = vmatprep.subr.mxu0 0.0
    %1776 = vmatpush1.msra.mxu0 0.0
    %1777 = vmatprep.subr.mxu0 0.0
    %1778 = vmatpush1.msra.mxu0 %v1349
    %1779 = vmatprep.subr.mxu0 0.0
    %1780 = vmatpush1.msra.mxu0 %v1348
    %1781 = vmatprep.subr.mxu0 0.0
    %1782 = vmatpush1.msra.mxu0 %v1347
    %1783 = vmatprep.subr.mxu0 0.0
    %1784 = vmatpush1.msra.mxu0 %v1346
    %1785 = vmatprep.subr.mxu0 0.0
    %1786 = vmatpush2.msra.mxu0 0.0
    %1787 = vmatprep.subr.mxu0 0.0
    %1788 = vmatpush2.msra.mxu0 0.0
    %1789 = vmatprep.subr.mxu0 0.0
    %1790 = vmatpush2.msra.mxu0 0.0
    %1791 = vmatprep.subr.mxu0 0.0
    %1792 = vmatpush2.msra.mxu0 0.0
    %1793 = vmatprep.subr.mxu0 0.0
    %1794 = vmatpush2.msra.mxu0 0.0
    %1795 = vmatprep.subr.mxu0 0.0
    %1796 = vmatpush2.msra.mxu0 0.0
    %1797 = vmatprep.subr.mxu0 0.0
    %1798 = vmatpush2.msra.mxu0 0.0
    %1799 = vmatprep.subr.mxu0 0.0
    %1800 = vmatpush2.msra.mxu0 0.0
    %1801 = vmatprep.subr.mxu0 0.0
    %1802 = vmatpush2.msra.mxu0 0.0
    %1803 = vmatprep.subr.mxu0 0.0
    %1804 = vmatpush2.msra.mxu0 0.0
    %1805 = vmatprep.subr.mxu0 0.0
    %1806 = vmatpush2.msra.mxu0 0.0
    %1807 = vmatprep.subr.mxu0 0.0
    %1808 = vmatpush2.msra.mxu0 0.0
    %1809 = vmatprep.subr.mxu0 0.0
    %1810 = vmatpush2.msra.mxu0 0.0
    %1811 = vmatprep.subr.mxu0 0.0
    %1812 = vmatpush2.msra.mxu0 0.0
    %1813 = vmatprep.subr.mxu0 0.0
    %1814 = vmatpush2.msra.mxu0 0.0
    %1815 = vmatprep.subr.mxu0 0.0
    %1816 = vmatpush2.msra.mxu0 0.0
    %1817 = vmatprep.mubr.f32.mxu0 0.0
    %1818 = vmatmul.mubr.f32.gmra.mxu0 %v1751
    %v1819 = vpop.f32.mrf.mxu0
    %v1820 = vadd.f32 0.0, %v1819
    %v1821 = vpop.f32.mrf.mxu0
    %1822 = vdwg.mxu0
    %v1823 = vadd.f32 %v1511, %v1820
    %v1824 = vxor.u32 %v1823, 2147483648
    %v1825 = vmul.f32 %v1824, 1.442695
    %v1826 = vpow.pop %v1825
    %v1827 = vadd.f32 %v1826, 1.0
    %v1828 = vrcp.pop %v1827
    %v1829 = vmul.f32 1.0, %v1828
    %v1830 = vtanh.pop %v1823
    %v1831 = vmul.f32 %v1829, %v1734
    %1833 = vrot.lane.b32.xlu0 %v1830, 64
    %v1834 = vpop.permute.xlu0 %1833
    %v1836 = vmul.f32 %v1829, %v1834
    %1838 = vrot.lane.b32.xlu0 %v1836, 32
    %v1839 = vpop.permute.xlu0 %1838
    %v1841 = vadd.f32 %v1831, %v1839
    %v1842 = vtanh.pop %v1841
    %1844 = vrot.lane.b32.xlu0 %v1842, 64
    %v1845 = vpop.permute.xlu0 %1844
    %v1847 = vmul.f32 %v1829, %v1845
    %v1850 = vunpack.c.l.s4 1983009808
    %v1851 = vunpack.c.0.s8 %v1850
    %v1852 = vlaneseq
    %v1853 = vshrl.u32 %v1852, 7
    %v1854 = vsub.s32 %v1851, %v1853
    %v1855 = vrot.slane %v1847, %v1854
    %1856 = vrot.lane.b32.xlu0 %v1855, 32
    %v1857 = vpop.permute.xlu0 %1856
    %v1858 = vsel %vm165, %v1857, 0
    %1860 = vmatprep.subr.mxu0 0.0
    %1861 = vmatpush1.msra.mxu0 0.0
    %1862 = vmatprep.subr.mxu0 0.0
    %1863 = vmatpush1.msra.mxu0 0.0
    %1864 = vmatprep.subr.mxu0 0.0
    %1865 = vmatpush1.msra.mxu0 0.0
    %1866 = vmatprep.subr.mxu0 0.0
    %1867 = vmatpush1.msra.mxu0 0.0
    %1868 = vmatprep.subr.mxu0 0.0
    %1869 = vmatpush1.msra.mxu0 0.0
    %1870 = vmatprep.subr.mxu0 0.0
    %1871 = vmatpush1.msra.mxu0 0.0
    %1872 = vmatprep.subr.mxu0 0.0
    %1873 = vmatpush1.msra.mxu0 0.0
    %1874 = vmatprep.subr.mxu0 0.0
    %1875 = vmatpush1.msra.mxu0 0.0
    %1876 = vmatprep.subr.mxu0 0.0
    %1877 = vmatpush1.msra.mxu0 0.0
    %1878 = vmatprep.subr.mxu0 0.0
    %1879 = vmatpush1.msra.mxu0 0.0
    %1880 = vmatprep.subr.mxu0 0.0
    %1881 = vmatpush1.msra.mxu0 0.0
    %1882 = vmatprep.subr.mxu0 0.0
    %1883 = vmatpush1.msra.mxu0 0.0
    %1884 = vmatprep.subr.mxu0 0.0
    %1885 = vmatpush1.msra.mxu0 %v1349
    %1886 = vmatprep.subr.mxu0 0.0
    %1887 = vmatpush1.msra.mxu0 %v1348
    %1888 = vmatprep.subr.mxu0 0.0
    %1889 = vmatpush1.msra.mxu0 %v1347
    %1890 = vmatprep.subr.mxu0 0.0
    %1891 = vmatpush1.msra.mxu0 %v1346
    %1892 = vmatprep.subr.mxu0 0.0
    %1893 = vmatpush2.msra.mxu0 0.0
    %1894 = vmatprep.subr.mxu0 0.0
    %1895 = vmatpush2.msra.mxu0 0.0
    %1896 = vmatprep.subr.mxu0 0.0
    %1897 = vmatpush2.msra.mxu0 0.0
    %1898 = vmatprep.subr.mxu0 0.0
    %1899 = vmatpush2.msra.mxu0 0.0
    %1900 = vmatprep.subr.mxu0 0.0
    %1901 = vmatpush2.msra.mxu0 0.0
    %1902 = vmatprep.subr.mxu0 0.0
    %1903 = vmatpush2.msra.mxu0 0.0
    %1904 = vmatprep.subr.mxu0 0.0
    %1905 = vmatpush2.msra.mxu0 0.0
    %1906 = vmatprep.subr.mxu0 0.0
    %1907 = vmatpush2.msra.mxu0 0.0
    %1908 = vmatprep.subr.mxu0 0.0
    %1909 = vmatpush2.msra.mxu0 0.0
    %1910 = vmatprep.subr.mxu0 0.0
    %1911 = vmatpush2.msra.mxu0 0.0
    %1912 = vmatprep.subr.mxu0 0.0
    %1913 = vmatpush2.msra.mxu0 0.0
    %1914 = vmatprep.subr.mxu0 0.0
    %1915 = vmatpush2.msra.mxu0 0.0
    %1916 = vmatprep.subr.mxu0 0.0
    %1917 = vmatpush2.msra.mxu0 0.0
    %1918 = vmatprep.subr.mxu0 0.0
    %1919 = vmatpush2.msra.mxu0 0.0
    %1920 = vmatprep.subr.mxu0 0.0
    %1921 = vmatpush2.msra.mxu0 0.0
    %1922 = vmatprep.subr.mxu0 0.0
    %1923 = vmatpush2.msra.mxu0 0.0
    %1924 = vmatprep.mubr.f32.mxu0 0.0
    %1925 = vmatmul.mubr.f32.gmra.mxu0 %v1858
    %v1926 = vpop.f32.mrf.mxu0
    %v1927 = vadd.f32 0.0, %v1926
    %v1928 = vpop.f32.mrf.mxu0
    %1929 = vdwg.mxu0
    %v1930 = vadd.f32 %v1513, %v1927
    %v1931 = vxor.u32 %v1930, 2147483648
    %v1932 = vmul.f32 %v1931, 1.442695
    %v1933 = vpow.pop %v1932
    %v1934 = vadd.f32 %v1933, 1.0
    %v1935 = vrcp.pop %v1934
    %v1936 = vmul.f32 1.0, %v1935
    %v1937 = vtanh.pop %v1930
    %v1938 = vmul.f32 %v1936, %v1841
    %1940 = vrot.lane.b32.xlu0 %v1937, 64
    %v1941 = vpop.permute.xlu0 %1940
    %v1943 = vmul.f32 %v1936, %v1941
    %1945 = vrot.lane.b32.xlu0 %v1943, 32
    %v1946 = vpop.permute.xlu0 %1945
    %v1948 = vadd.f32 %v1938, %v1946
    %v1949 = vtanh.pop %v1948
    %1951 = vrot.lane.b32.xlu0 %v1949, 64
    %v1952 = vpop.permute.xlu0 %1951
    %v1954 = vmul.f32 %v1936, %v1952
    %v1957 = vunpack.c.l.s4 1983009808
    %v1958 = vunpack.c.0.s8 %v1957
    %v1959 = vlaneseq
    %v1960 = vshrl.u32 %v1959, 7
    %v1961 = vsub.s32 %v1958, %v1960
    %v1962 = vrot.slane %v1954, %v1961
    %1963 = vrot.lane.b32.xlu0 %v1962, 32
    %v1964 = vpop.permute.xlu0 %1963
    %v1965 = vsel %vm165, %v1964, 0
    %1967 = vmatprep.subr.mxu0 0.0
    %1968 = vmatpush1.msra.mxu0 0.0
    %1969 = vmatprep.subr.mxu0 0.0
    %1970 = vmatpush1.msra.mxu0 0.0
    %1971 = vmatprep.subr.mxu0 0.0
    %1972 = vmatpush1.msra.mxu0 0.0
    %1973 = vmatprep.subr.mxu0 0.0
    %1974 = vmatpush1.msra.mxu0 0.0
    %1975 = vmatprep.subr.mxu0 0.0
    %1976 = vmatpush1.msra.mxu0 0.0
    %1977 = vmatprep.subr.mxu0 0.0
    %1978 = vmatpush1.msra.mxu0 0.0
    %1979 = vmatprep.subr.mxu0 0.0
    %1980 = vmatpush1.msra.mxu0 0.0
    %1981 = vmatprep.subr.mxu0 0.0
    %1982 = vmatpush1.msra.mxu0 0.0
    %1983 = vmatprep.subr.mxu0 0.0
    %1984 = vmatpush1.msra.mxu0 0.0
    %1985 = vmatprep.subr.mxu0 0.0
    %1986 = vmatpush1.msra.mxu0 0.0
    %1987 = vmatprep.subr.mxu0 0.0
    %1988 = vmatpush1.msra.mxu0 0.0
    %1989 = vmatprep.subr.mxu0 0.0
    %1990 = vmatpush1.msra.mxu0 0.0
    %1991 = vmatprep.subr.mxu0 0.0
    %1992 = vmatpush1.msra.mxu0 %v1349
    %1993 = vmatprep.subr.mxu0 0.0
    %1994 = vmatpush1.msra.mxu0 %v1348
    %1995 = vmatprep.subr.mxu0 0.0
    %1996 = vmatpush1.msra.mxu0 %v1347
    %1997 = vmatprep.subr.mxu0 0.0
    %1998 = vmatpush1.msra.mxu0 %v1346
    %1999 = vmatprep.subr.mxu0 0.0
    %2000 = vmatpush2.msra.mxu0 0.0
    %2001 = vmatprep.subr.mxu0 0.0
    %2002 = vmatpush2.msra.mxu0 0.0
    %2003 = vmatprep.subr.mxu0 0.0
    %2004 = vmatpush2.msra.mxu0 0.0
    %2005 = vmatprep.subr.mxu0 0.0
    %2006 = vmatpush2.msra.mxu0 0.0
    %2007 = vmatprep.subr.mxu0 0.0
    %2008 = vmatpush2.msra.mxu0 0.0
    %2009 = vmatprep.subr.mxu0 0.0
    %2010 = vmatpush2.msra.mxu0 0.0
    %2011 = vmatprep.subr.mxu0 0.0
    %2012 = vmatpush2.msra.mxu0 0.0
    %2013 = vmatprep.subr.mxu0 0.0
    %2014 = vmatpush2.msra.mxu0 0.0
    %2015 = vmatprep.subr.mxu0 0.0
    %2016 = vmatpush2.msra.mxu0 0.0
    %2017 = vmatprep.subr.mxu0 0.0
    %2018 = vmatpush2.msra.mxu0 0.0
    %2019 = vmatprep.subr.mxu0 0.0
    %2020 = vmatpush2.msra.mxu0 0.0
    %2021 = vmatprep.subr.mxu0 0.0
    %2022 = vmatpush2.msra.mxu0 0.0
    %2023 = vmatprep.subr.mxu0 0.0
    %2024 = vmatpush2.msra.mxu0 0.0
    %2025 = vmatprep.subr.mxu0 0.0
    %2026 = vmatpush2.msra.mxu0 0.0
    %2027 = vmatprep.subr.mxu0 0.0
    %2028 = vmatpush2.msra.mxu0 0.0
    %2029 = vmatprep.subr.mxu0 0.0
    %2030 = vmatpush2.msra.mxu0 0.0
    %2031 = vmatprep.mubr.f32.mxu0 0.0
    %2032 = vmatmul.mubr.f32.gmra.mxu0 %v1965
    %v2033 = vpop.f32.mrf.mxu0
    %v2034 = vadd.f32 0.0, %v2033
    %v2035 = vpop.f32.mrf.mxu0
    %2036 = vdwg.mxu0
    %v2037 = vadd.f32 %v1521, %v2034
    %v2038 = vxor.u32 %v2037, 2147483648
    %v2039 = vmul.f32 %v2038, 1.442695
    %v2040 = vpow.pop %v2039
    %v2041 = vadd.f32 %v2040, 1.0
    %v2042 = vrcp.pop %v2041
    %v2043 = vmul.f32 1.0, %v2042
    %v2044 = vtanh.pop %v2037
    %v2045 = vmul.f32 %v2043, %v1948
    %2047 = vrot.lane.b32.xlu0 %v2044, 64
    %v2048 = vpop.permute.xlu0 %2047
    %v2050 = vmul.f32 %v2043, %v2048
    %2052 = vrot.lane.b32.xlu0 %v2050, 32
    %v2053 = vpop.permute.xlu0 %2052
    %v2055 = vadd.f32 %v2045, %v2053
    %v2056 = vtanh.pop %v2055
    %2058 = vrot.lane.b32.xlu0 %v2056, 64
    %v2059 = vpop.permute.xlu0 %2058
    %v2061 = vmul.f32 %v2043, %v2059
    %v2064 = vunpack.c.l.s4 1983009808
    %v2065 = vunpack.c.0.s8 %v2064
    %v2066 = vlaneseq
    %v2067 = vshrl.u32 %v2066, 7
    %v2068 = vsub.s32 %v2065, %v2067
    %v2069 = vrot.slane %v2061, %v2068
    %2070 = vrot.lane.b32.xlu0 %v2069, 32
    %v2071 = vpop.permute.xlu0 %2070
    %v2072 = vsel %vm165, %v2071, 0
    %2074 = vmatprep.subr.mxu0 0.0
    %2075 = vmatpush1.msra.mxu0 0.0
    %2076 = vmatprep.subr.mxu0 0.0
    %2077 = vmatpush1.msra.mxu0 0.0
    %2078 = vmatprep.subr.mxu0 0.0
    %2079 = vmatpush1.msra.mxu0 0.0
    %2080 = vmatprep.subr.mxu0 0.0
    %2081 = vmatpush1.msra.mxu0 0.0
    %2082 = vmatprep.subr.mxu0 0.0
    %2083 = vmatpush1.msra.mxu0 0.0
    %2084 = vmatprep.subr.mxu0 0.0
    %2085 = vmatpush1.msra.mxu0 0.0
    %2086 = vmatprep.subr.mxu0 0.0
    %2087 = vmatpush1.msra.mxu0 0.0
    %2088 = vmatprep.subr.mxu0 0.0
    %2089 = vmatpush1.msra.mxu0 0.0
    %2090 = vmatprep.subr.mxu0 0.0
    %2091 = vmatpush1.msra.mxu0 0.0
    %2092 = vmatprep.subr.mxu0 0.0
    %2093 = vmatpush1.msra.mxu0 0.0
    %2094 = vmatprep.subr.mxu0 0.0
    %2095 = vmatpush1.msra.mxu0 0.0
    %2096 = vmatprep.subr.mxu0 0.0
    %2097 = vmatpush1.msra.mxu0 0.0
    %2098 = vmatprep.subr.mxu0 0.0
    %2099 = vmatpush1.msra.mxu0 %v1349
    %2100 = vmatprep.subr.mxu0 0.0
    %2101 = vmatpush1.msra.mxu0 %v1348
    %2102 = vmatprep.subr.mxu0 0.0
    %2103 = vmatpush1.msra.mxu0 %v1347
    %2104 = vmatprep.subr.mxu0 0.0
    %2105 = vmatpush1.msra.mxu0 %v1346
    %2106 = vmatprep.subr.mxu0 0.0
    %2107 = vmatpush2.msra.mxu0 0.0
    %2108 = vmatprep.subr.mxu0 0.0
    %2109 = vmatpush2.msra.mxu0 0.0
    %2110 = vmatprep.subr.mxu0 0.0
    %2111 = vmatpush2.msra.mxu0 0.0
    %2112 = vmatprep.subr.mxu0 0.0
    %2113 = vmatpush2.msra.mxu0 0.0
    %2114 = vmatprep.subr.mxu0 0.0
    %2115 = vmatpush2.msra.mxu0 0.0
    %2116 = vmatprep.subr.mxu0 0.0
    %2117 = vmatpush2.msra.mxu0 0.0
    %2118 = vmatprep.subr.mxu0 0.0
    %2119 = vmatpush2.msra.mxu0 0.0
    %2120 = vmatprep.subr.mxu0 0.0
    %2121 = vmatpush2.msra.mxu0 0.0
    %2122 = vmatprep.subr.mxu0 0.0
    %2123 = vmatpush2.msra.mxu0 0.0
    %2124 = vmatprep.subr.mxu0 0.0
    %2125 = vmatpush2.msra.mxu0 0.0
    %2126 = vmatprep.subr.mxu0 0.0
    %2127 = vmatpush2.msra.mxu0 0.0
    %2128 = vmatprep.subr.mxu0 0.0
    %2129 = vmatpush2.msra.mxu0 0.0
    %2130 = vmatprep.subr.mxu0 0.0
    %2131 = vmatpush2.msra.mxu0 0.0
    %2132 = vmatprep.subr.mxu0 0.0
    %2133 = vmatpush2.msra.mxu0 0.0
    %2134 = vmatprep.subr.mxu0 0.0
    %2135 = vmatpush2.msra.mxu0 0.0
    %2136 = vmatprep.subr.mxu0 0.0
    %2137 = vmatpush2.msra.mxu0 0.0
    %2138 = vmatprep.mubr.f32.mxu0 0.0
    %2139 = vmatmul.mubr.f32.gmra.mxu0 %v2072
    %v2140 = vpop.f32.mrf.mxu0
    %v2141 = vadd.f32 0.0, %v2140
    %v2142 = vpop.f32.mrf.mxu0
    %2143 = vdwg.mxu0
    %v2144 = vadd.f32 %v1529, %v2141
    %v2145 = vxor.u32 %v2144, 2147483648
    %v2146 = vmul.f32 %v2145, 1.442695
    %v2147 = vpow.pop %v2146
    %v2148 = vadd.f32 %v2147, 1.0
    %v2149 = vrcp.pop %v2148
    %v2150 = vmul.f32 1.0, %v2149
    %v2151 = vtanh.pop %v2144
    %v2152 = vmul.f32 %v2150, %v2055
    %2154 = vrot.lane.b32.xlu0 %v2151, 64
    %v2155 = vpop.permute.xlu0 %2154
    %v2157 = vmul.f32 %v2150, %v2155
    %2159 = vrot.lane.b32.xlu0 %v2157, 32
    %v2160 = vpop.permute.xlu0 %2159
    %v2162 = vadd.f32 %v2152, %v2160
    %v2163 = vtanh.pop %v2162
    %2165 = vrot.lane.b32.xlu0 %v2163, 64
    %v2166 = vpop.permute.xlu0 %2165
    %v2168 = vmul.f32 %v2150, %v2166
    %v2171 = vunpack.c.l.s4 1983009808
    %v2172 = vunpack.c.0.s8 %v2171
    %v2173 = vlaneseq
    %v2174 = vshrl.u32 %v2173, 7
    %v2175 = vsub.s32 %v2172, %v2174
    %v2176 = vrot.slane %v2168, %v2175
    %2177 = vrot.lane.b32.xlu0 %v2176, 32
    %v2178 = vpop.permute.xlu0 %2177
    %v2179 = vsel %vm165, %v2178, 0
    %2181 = vmatprep.subr.mxu0 0.0
    %2182 = vmatpush1.msra.mxu0 0.0
    %2183 = vmatprep.subr.mxu0 0.0
    %2184 = vmatpush1.msra.mxu0 0.0
    %2185 = vmatprep.subr.mxu0 0.0
    %2186 = vmatpush1.msra.mxu0 0.0
    %2187 = vmatprep.subr.mxu0 0.0
    %2188 = vmatpush1.msra.mxu0 0.0
    %2189 = vmatprep.subr.mxu0 0.0
    %2190 = vmatpush1.msra.mxu0 0.0
    %2191 = vmatprep.subr.mxu0 0.0
    %2192 = vmatpush1.msra.mxu0 0.0
    %2193 = vmatprep.subr.mxu0 0.0
    %2194 = vmatpush1.msra.mxu0 0.0
    %2195 = vmatprep.subr.mxu0 0.0
    %2196 = vmatpush1.msra.mxu0 0.0
    %2197 = vmatprep.subr.mxu0 0.0
    %2198 = vmatpush1.msra.mxu0 0.0
    %2199 = vmatprep.subr.mxu0 0.0
    %2200 = vmatpush1.msra.mxu0 0.0
    %2201 = vmatprep.subr.mxu0 0.0
    %2202 = vmatpush1.msra.mxu0 0.0
    %2203 = vmatprep.subr.mxu0 0.0
    %2204 = vmatpush1.msra.mxu0 0.0
    %2205 = vmatprep.subr.mxu0 0.0
    %2206 = vmatpush1.msra.mxu0 %v1349
    %2207 = vmatprep.subr.mxu0 0.0
    %2208 = vmatpush1.msra.mxu0 %v1348
    %2209 = vmatprep.subr.mxu0 0.0
    %2210 = vmatpush1.msra.mxu0 %v1347
    %2211 = vmatprep.subr.mxu0 0.0
    %2212 = vmatpush1.msra.mxu0 %v1346
    %2213 = vmatprep.subr.mxu0 0.0
    %2214 = vmatpush2.msra.mxu0 0.0
    %2215 = vmatprep.subr.mxu0 0.0
    %2216 = vmatpush2.msra.mxu0 0.0
    %2217 = vmatprep.subr.mxu0 0.0
    %2218 = vmatpush2.msra.mxu0 0.0
    %2219 = vmatprep.subr.mxu0 0.0
    %2220 = vmatpush2.msra.mxu0 0.0
    %2221 = vmatprep.subr.mxu0 0.0
    %2222 = vmatpush2.msra.mxu0 0.0
    %2223 = vmatprep.subr.mxu0 0.0
    %2224 = vmatpush2.msra.mxu0 0.0
    %2225 = vmatprep.subr.mxu0 0.0
    %2226 = vmatpush2.msra.mxu0 0.0
    %2227 = vmatprep.subr.mxu0 0.0
    %2228 = vmatpush2.msra.mxu0 0.0
    %2229 = vmatprep.subr.mxu0 0.0
    %2230 = vmatpush2.msra.mxu0 0.0
    %2231 = vmatprep.subr.mxu0 0.0
    %2232 = vmatpush2.msra.mxu0 0.0
    %2233 = vmatprep.subr.mxu0 0.0
    %2234 = vmatpush2.msra.mxu0 0.0
    %2235 = vmatprep.subr.mxu0 0.0
    %2236 = vmatpush2.msra.mxu0 0.0
    %2237 = vmatprep.subr.mxu0 0.0
    %2238 = vmatpush2.msra.mxu0 0.0
    %2239 = vmatprep.subr.mxu0 0.0
    %2240 = vmatpush2.msra.mxu0 0.0
    %2241 = vmatprep.subr.mxu0 0.0
    %2242 = vmatpush2.msra.mxu0 0.0
    %2243 = vmatprep.subr.mxu0 0.0
    %2244 = vmatpush2.msra.mxu0 0.0
    %2245 = vmatprep.mubr.f32.mxu0 0.0
    %2246 = vmatmul.mubr.f32.gmra.mxu0 %v2179
    %v2247 = vpop.f32.mrf.mxu0
    %v2248 = vadd.f32 0.0, %v2247
    %v2249 = vpop.f32.mrf.mxu0
    %2250 = vdwg.mxu0
    %v2251 = vadd.f32 %v1528, %v2248
    %v2252 = vxor.u32 %v2251, 2147483648
    %v2253 = vmul.f32 %v2252, 1.442695
    %v2254 = vpow.pop %v2253
    %v2255 = vadd.f32 %v2254, 1.0
    %v2256 = vrcp.pop %v2255
    %v2257 = vmul.f32 1.0, %v2256
    %v2258 = vtanh.pop %v2251
    %v2259 = vmul.f32 %v2257, %v2162
    %2261 = vrot.lane.b32.xlu0 %v2258, 64
    %v2262 = vpop.permute.xlu0 %2261
    %v2264 = vmul.f32 %v2257, %v2262
    %2266 = vrot.lane.b32.xlu0 %v2264, 32
    %v2267 = vpop.permute.xlu0 %2266
    %v2269 = vadd.f32 %v2259, %v2267
    %v2270 = vtanh.pop %v2269
    %2272 = vrot.lane.b32.xlu0 %v2270, 64
    %v2273 = vpop.permute.xlu0 %2272
    %v2275 = vmul.f32 %v2257, %v2273
    %v2278 = vunpack.c.l.s4 1983009808
    %v2279 = vunpack.c.0.s8 %v2278
    %v2280 = vlaneseq
    %v2281 = vshrl.u32 %v2280, 7
    %v2282 = vsub.s32 %v2279, %v2281
    %v2283 = vrot.slane %v2275, %v2282
    %2284 = vrot.lane.b32.xlu0 %v2283, 32
    %v2285 = vpop.permute.xlu0 %2284
    %v2286 = vsel %vm165, %v2285, 0
    %2288 = vmatprep.subr.mxu0 0.0
    %2289 = vmatpush1.msra.mxu0 0.0
    %2290 = vmatprep.subr.mxu0 0.0
    %2291 = vmatpush1.msra.mxu0 0.0
    %2292 = vmatprep.subr.mxu0 0.0
    %2293 = vmatpush1.msra.mxu0 0.0
    %2294 = vmatprep.subr.mxu0 0.0
    %2295 = vmatpush1.msra.mxu0 0.0
    %2296 = vmatprep.subr.mxu0 0.0
    %2297 = vmatpush1.msra.mxu0 0.0
    %2298 = vmatprep.subr.mxu0 0.0
    %2299 = vmatpush1.msra.mxu0 0.0
    %2300 = vmatprep.subr.mxu0 0.0
    %2301 = vmatpush1.msra.mxu0 0.0
    %2302 = vmatprep.subr.mxu0 0.0
    %2303 = vmatpush1.msra.mxu0 0.0
    %2304 = vmatprep.subr.mxu0 0.0
    %2305 = vmatpush1.msra.mxu0 0.0
    %2306 = vmatprep.subr.mxu0 0.0
    %2307 = vmatpush1.msra.mxu0 0.0
    %2308 = vmatprep.subr.mxu0 0.0
    %2309 = vmatpush1.msra.mxu0 0.0
    %2310 = vmatprep.subr.mxu0 0.0
    %2311 = vmatpush1.msra.mxu0 0.0
    %2312 = vmatprep.subr.mxu0 0.0
    %2313 = vmatpush1.msra.mxu0 %v1349
    %2314 = vmatprep.subr.mxu0 0.0
    %2315 = vmatpush1.msra.mxu0 %v1348
    %2316 = vmatprep.subr.mxu0 0.0
    %2317 = vmatpush1.msra.mxu0 %v1347
    %2318 = vmatprep.subr.mxu0 0.0
    %2319 = vmatpush1.msra.mxu0 %v1346
    %2320 = vmatprep.subr.mxu0 0.0
    %2321 = vmatpush2.msra.mxu0 0.0
    %2322 = vmatprep.subr.mxu0 0.0
    %2323 = vmatpush2.msra.mxu0 0.0
    %2324 = vmatprep.subr.mxu0 0.0
    %2325 = vmatpush2.msra.mxu0 0.0
    %2326 = vmatprep.subr.mxu0 0.0
    %2327 = vmatpush2.msra.mxu0 0.0
    %2328 = vmatprep.subr.mxu0 0.0
    %2329 = vmatpush2.msra.mxu0 0.0
    %2330 = vmatprep.subr.mxu0 0.0
    %2331 = vmatpush2.msra.mxu0 0.0
    %2332 = vmatprep.subr.mxu0 0.0
    %2333 = vmatpush2.msra.mxu0 0.0
    %2334 = vmatprep.subr.mxu0 0.0
    %2335 = vmatpush2.msra.mxu0 0.0
    %2336 = vmatprep.subr.mxu0 0.0
    %2337 = vmatpush2.msra.mxu0 0.0
    %2338 = vmatprep.subr.mxu0 0.0
    %2339 = vmatpush2.msra.mxu0 0.0
    %2340 = vmatprep.subr.mxu0 0.0
    %2341 = vmatpush2.msra.mxu0 0.0
    %2342 = vmatprep.subr.mxu0 0.0
    %2343 = vmatpush2.msra.mxu0 0.0
    %2344 = vmatprep.subr.mxu0 0.0
    %2345 = vmatpush2.msra.mxu0 0.0
    %2346 = vmatprep.subr.mxu0 0.0
    %2347 = vmatpush2.msra.mxu0 0.0
    %2348 = vmatprep.subr.mxu0 0.0
    %2349 = vmatpush2.msra.mxu0 0.0
    %2350 = vmatprep.subr.mxu0 0.0
    %2351 = vmatpush2.msra.mxu0 0.0
    %2352 = vmatprep.mubr.f32.mxu0 0.0
    %2353 = vmatmul.mubr.f32.gmra.mxu0 %v2286
    %v2354 = vpop.f32.mrf.mxu0
    %v2355 = vadd.f32 0.0, %v2354
    %v2356 = vpop.f32.mrf.mxu0
    %2357 = vdwg.mxu0
    %v2358 = vadd.f32 %v1530, %v2355
    %v2359 = vxor.u32 %v2358, 2147483648
    %v2360 = vmul.f32 %v2359, 1.442695
    %v2361 = vpow.pop %v2360
    %v2362 = vadd.f32 %v2361, 1.0
    %v2363 = vrcp.pop %v2362
    %v2364 = vmul.f32 1.0, %v2363
    %v2365 = vtanh.pop %v2358
    %v2366 = vmul.f32 %v2364, %v2269
    %2368 = vrot.lane.b32.xlu0 %v2365, 64
    %v2369 = vpop.permute.xlu0 %2368
    %v2371 = vmul.f32 %v2364, %v2369
    %2373 = vrot.lane.b32.xlu0 %v2371, 32
    %v2374 = vpop.permute.xlu0 %2373
    %v2376 = vadd.f32 %v2366, %v2374
    %v2377 = vtanh.pop %v2376
    %2379 = vrot.lane.b32.xlu0 %v2377, 64
    %v2380 = vpop.permute.xlu0 %2379
    %v2382 = vmul.f32 %v2364, %v2380
    %2383 = vst.msk [vmem:[#allocation3] sm:$0xff] %vm79, 0.0
    %vm2384 = vcmask 25600
    %2385 = vst.msk [vmem:[#allocation3 + $0x8] sm:$0x3] %vm2384, 0.0
    %2386 = vst.msk [vmem:[#allocation3 + $0x10] sm:$0xff] %vm79, 0.0
    %2387 = vst.msk [vmem:[#allocation3 + $0x18] sm:$0x3] %vm2384, 0.0
    %2388 = vst.msk [vmem:[#allocation3 + $0x1] sm:$0xff] %vm79, %v65
    %2389 = vst.msk [vmem:[#allocation3 + $0x11] sm:$0xff] %vm79, %v66
    %v2390 = vld [vmem:[%s8] sm:$0x1]
    %v2391 = vld [vmem:[#allocation3] sm:$0xff]
    %v2392 = vld [vmem:[#allocation3 + $0x10] sm:$0xff]
    %v2393 = vld [vmem:[#allocation7] sm:$0xf]
    %v2395 = vsel %vm79, %v2391, 0
    %v2398 = vsel %vm79, %v2392, 0
    %v2401 = vsel %vm86, %v2393, 0
    %2403 = vmatprep.subr.mxu0 0.0
    %2404 = vmatpush1.msra.mxu0 0.0
    %2405 = vmatprep.subr.mxu0 0.0
    %2406 = vmatpush1.msra.mxu0 0.0
    %2407 = vmatprep.subr.mxu0 0.0
    %2408 = vmatpush1.msra.mxu0 0.0
    %2409 = vmatprep.subr.mxu0 0.0
    %2410 = vmatpush1.msra.mxu0 0.0
    %2411 = vmatprep.subr.mxu0 0.0
    %2412 = vmatpush1.msra.mxu0 0.0
    %2413 = vmatprep.subr.mxu0 0.0
    %2414 = vmatpush1.msra.mxu0 0.0
    %2415 = vmatprep.subr.mxu0 0.0
    %2416 = vmatpush1.msra.mxu0 0.0
    %2417 = vmatprep.subr.mxu0 0.0
    %2418 = vmatpush1.msra.mxu0 0.0
    %2419 = vmatprep.subr.mxu0 0.0
    %2420 = vmatpush1.msra.mxu0 0.0
    %2421 = vmatprep.subr.mxu0 0.0
    %2422 = vmatpush1.msra.mxu0 0.0
    %2423 = vmatprep.subr.mxu0 0.0
    %2424 = vmatpush1.msra.mxu0 0.0
    %2425 = vmatprep.subr.mxu0 0.0
    %2426 = vmatpush1.msra.mxu0 0.0
    %2427 = vmatprep.subr.mxu0 0.0
    %2428 = vmatpush1.msra.mxu0 0.0
    %2429 = vmatprep.subr.mxu0 0.0
    %2430 = vmatpush1.msra.mxu0 0.0
    %2431 = vmatprep.subr.mxu0 0.0
    %2432 = vmatpush1.msra.mxu0 0.0
    %2433 = vmatprep.subr.mxu0 0.0
    %2434 = vmatpush1.msra.mxu0 %v2401
    %2435 = vmatprep.subr.mxu0 0.0
    %2436 = vmatpush2.msra.mxu0 0.0
    %2437 = vmatprep.subr.mxu0 0.0
    %2438 = vmatpush2.msra.mxu0 0.0
    %2439 = vmatprep.subr.mxu0 0.0
    %2440 = vmatpush2.msra.mxu0 0.0
    %2441 = vmatprep.subr.mxu0 0.0
    %2442 = vmatpush2.msra.mxu0 0.0
    %2443 = vmatprep.subr.mxu0 0.0
    %2444 = vmatpush2.msra.mxu0 0.0
    %2445 = vmatprep.subr.mxu0 0.0
    %2446 = vmatpush2.msra.mxu0 0.0
    %2447 = vmatprep.subr.mxu0 0.0
    %2448 = vmatpush2.msra.mxu0 0.0
    %2449 = vmatprep.subr.mxu0 0.0
    %2450 = vmatpush2.msra.mxu0 0.0
    %2451 = vmatprep.subr.mxu0 0.0
    %2452 = vmatpush2.msra.mxu0 0.0
    %2453 = vmatprep.subr.mxu0 0.0
    %2454 = vmatpush2.msra.mxu0 0.0
    %2455 = vmatprep.subr.mxu0 0.0
    %2456 = vmatpush2.msra.mxu0 0.0
    %2457 = vmatprep.subr.mxu0 0.0
    %2458 = vmatpush2.msra.mxu0 0.0
    %2459 = vmatprep.subr.mxu0 0.0
    %2460 = vmatpush2.msra.mxu0 0.0
    %2461 = vmatprep.subr.mxu0 0.0
    %2462 = vmatpush2.msra.mxu0 0.0
    %2463 = vmatprep.subr.mxu0 0.0
    %2464 = vmatpush2.msra.mxu0 0.0
    %2465 = vmatprep.subr.mxu0 0.0
    %2466 = vmatpush2.msra.mxu0 0.0
    %2467 = vmatprep.mubr.f32.mxu0 0.0
    %2468 = vmatmul.mubr.f32.gmra.mxu0 %v2395
    %v2469 = vpop.f32.mrf.mxu0
    %v2470 = vadd.f32 0.0, %v2469
    %v2471 = vpop.f32.mrf.mxu0
    %2472 = vmatprep.mubr.f32.mxu0 0.0
    %2473 = vmatmul.mubr.f32.gmra.mxu0 %v2398
    %v2474 = vpop.f32.mrf.mxu0
    %v2475 = vadd.f32 0.0, %v2474
    %v2476 = vpop.f32.mrf.mxu0
    %2477 = vdwg.mxu0
    %v2479 = vlaneseq
    %v2480 = vshrl.u32 %v2479, 7
    %v2481 = vsub.s32 0, %v2480
    %v2482 = vrot.slane %v2390, %v2481
    %v2484 = vadd.f32 %v2482, %v2470
    %v2485 = vadd.f32 %v2482, %v2475
    %v2486 = vld [vmem:[#allocation3 + $0x1] sm:$0xff]
    %v2487 = vld [vmem:[#allocation3 + $0x11] sm:$0xff]
    %s2488 = scalar_lea.vmem [#allocation7], 4
    %v2489 = vld [vmem:[%s2488] sm:$0xf]
    %v2491 = vsel %vm79, %v2486, 0
    %v2494 = vsel %vm79, %v2487, 0
    %v2497 = vsel %vm86, %v2489, 0
    %2499 = vmatprep.subr.mxu0 0.0
    %2500 = vmatpush1.msra.mxu0 0.0
    %2501 = vmatprep.subr.mxu0 0.0
    %2502 = vmatpush1.msra.mxu0 0.0
    %2503 = vmatprep.subr.mxu0 0.0
    %2504 = vmatpush1.msra.mxu0 0.0
    %2505 = vmatprep.subr.mxu0 0.0
    %2506 = vmatpush1.msra.mxu0 0.0
    %2507 = vmatprep.subr.mxu0 0.0
    %2508 = vmatpush1.msra.mxu0 0.0
    %2509 = vmatprep.subr.mxu0 0.0
    %2510 = vmatpush1.msra.mxu0 0.0
    %2511 = vmatprep.subr.mxu0 0.0
    %2512 = vmatpush1.msra.mxu0 0.0
    %2513 = vmatprep.subr.mxu0 0.0
    %2514 = vmatpush1.msra.mxu0 0.0
    %2515 = vmatprep.subr.mxu0 0.0
    %2516 = vmatpush1.msra.mxu0 0.0
    %2517 = vmatprep.subr.mxu0 0.0
    %2518 = vmatpush1.msra.mxu0 0.0
    %2519 = vmatprep.subr.mxu0 0.0
    %2520 = vmatpush1.msra.mxu0 0.0
    %2521 = vmatprep.subr.mxu0 0.0
    %2522 = vmatpush1.msra.mxu0 0.0
    %2523 = vmatprep.subr.mxu0 0.0
    %2524 = vmatpush1.msra.mxu0 0.0
    %2525 = vmatprep.subr.mxu0 0.0
    %2526 = vmatpush1.msra.mxu0 0.0
    %2527 = vmatprep.subr.mxu0 0.0
    %2528 = vmatpush1.msra.mxu0 0.0
    %2529 = vmatprep.subr.mxu0 0.0
    %2530 = vmatpush1.msra.mxu0 %v2497
    %2531 = vmatprep.subr.mxu0 0.0
    %2532 = vmatpush2.msra.mxu0 0.0
    %2533 = vmatprep.subr.mxu0 0.0
    %2534 = vmatpush2.msra.mxu0 0.0
    %2535 = vmatprep.subr.mxu0 0.0
    %2536 = vmatpush2.msra.mxu0 0.0
    %2537 = vmatprep.subr.mxu0 0.0
    %2538 = vmatpush2.msra.mxu0 0.0
    %2539 = vmatprep.subr.mxu0 0.0
    %2540 = vmatpush2.msra.mxu0 0.0
    %2541 = vmatprep.subr.mxu0 0.0
    %2542 = vmatpush2.msra.mxu0 0.0
    %2543 = vmatprep.subr.mxu0 0.0
    %2544 = vmatpush2.msra.mxu0 0.0
    %2545 = vmatprep.subr.mxu0 0.0
    %2546 = vmatpush2.msra.mxu0 0.0
    %2547 = vmatprep.subr.mxu0 0.0
    %2548 = vmatpush2.msra.mxu0 0.0
    %2549 = vmatprep.subr.mxu0 0.0
    %2550 = vmatpush2.msra.mxu0 0.0
    %2551 = vmatprep.subr.mxu0 0.0
    %2552 = vmatpush2.msra.mxu0 0.0
    %2553 = vmatprep.subr.mxu0 0.0
    %2554 = vmatpush2.msra.mxu0 0.0
    %2555 = vmatprep.subr.mxu0 0.0
    %2556 = vmatpush2.msra.mxu0 0.0
    %2557 = vmatprep.subr.mxu0 0.0
    %2558 = vmatpush2.msra.mxu0 0.0
    %2559 = vmatprep.subr.mxu0 0.0
    %2560 = vmatpush2.msra.mxu0 0.0
    %2561 = vmatprep.subr.mxu0 0.0
    %2562 = vmatpush2.msra.mxu0 0.0
    %2563 = vmatprep.mubr.f32.mxu0 0.0
    %2564 = vmatmul.mubr.f32.gmra.mxu0 %v2491
    %v2565 = vpop.f32.mrf.mxu0
    %v2566 = vadd.f32 0.0, %v2565
    %v2567 = vpop.f32.mrf.mxu0
    %2568 = vmatprep.mubr.f32.mxu0 0.0
    %2569 = vmatmul.mubr.f32.gmra.mxu0 %v2494
    %v2570 = vpop.f32.mrf.mxu0
    %v2571 = vadd.f32 0.0, %v2570
    %v2572 = vpop.f32.mrf.mxu0
    %2573 = vdwg.mxu0
    %v2574 = vadd.f32 %v2484, %v2566
    %v2575 = vadd.f32 %v2485, %v2571
    %v2576 = vld [vmem:[#allocation3 + $0x2] sm:$0xff]
    %v2577 = vld [vmem:[#allocation3 + $0x12] sm:$0xff]
    %s2578 = scalar_lea.vmem [#allocation7], 8
    %v2579 = vld [vmem:[%s2578] sm:$0xf]
    %v2581 = vsel %vm79, %v2576, 0
    %v2584 = vsel %vm79, %v2577, 0
    %v2587 = vsel %vm86, %v2579, 0
    %2589 = vmatprep.subr.mxu0 0.0
    %2590 = vmatpush1.msra.mxu0 0.0
    %2591 = vmatprep.subr.mxu0 0.0
    %2592 = vmatpush1.msra.mxu0 0.0
    %2593 = vmatprep.subr.mxu0 0.0
    %2594 = vmatpush1.msra.mxu0 0.0
    %2595 = vmatprep.subr.mxu0 0.0
    %2596 = vmatpush1.msra.mxu0 0.0
    %2597 = vmatprep.subr.mxu0 0.0
    %2598 = vmatpush1.msra.mxu0 0.0
    %2599 = vmatprep.subr.mxu0 0.0
    %2600 = vmatpush1.msra.mxu0 0.0
    %2601 = vmatprep.subr.mxu0 0.0
    %2602 = vmatpush1.msra.mxu0 0.0
    %2603 = vmatprep.subr.mxu0 0.0
    %2604 = vmatpush1.msra.mxu0 0.0
    %2605 = vmatprep.subr.mxu0 0.0
    %2606 = vmatpush1.msra.mxu0 0.0
    %2607 = vmatprep.subr.mxu0 0.0
    %2608 = vmatpush1.msra.mxu0 0.0
    %2609 = vmatprep.subr.mxu0 0.0
    %2610 = vmatpush1.msra.mxu0 0.0
    %2611 = vmatprep.subr.mxu0 0.0
    %2612 = vmatpush1.msra.mxu0 0.0
    %2613 = vmatprep.subr.mxu0 0.0
    %2614 = vmatpush1.msra.mxu0 0.0
    %2615 = vmatprep.subr.mxu0 0.0
    %2616 = vmatpush1.msra.mxu0 0.0
    %2617 = vmatprep.subr.mxu0 0.0
    %2618 = vmatpush1.msra.mxu0 0.0
    %2619 = vmatprep.subr.mxu0 0.0
    %2620 = vmatpush1.msra.mxu0 %v2587
    %2621 = vmatprep.subr.mxu0 0.0
    %2622 = vmatpush2.msra.mxu0 0.0
    %2623 = vmatprep.subr.mxu0 0.0
    %2624 = vmatpush2.msra.mxu0 0.0
    %2625 = vmatprep.subr.mxu0 0.0
    %2626 = vmatpush2.msra.mxu0 0.0
    %2627 = vmatprep.subr.mxu0 0.0
    %2628 = vmatpush2.msra.mxu0 0.0
    %2629 = vmatprep.subr.mxu0 0.0
    %2630 = vmatpush2.msra.mxu0 0.0
    %2631 = vmatprep.subr.mxu0 0.0
    %2632 = vmatpush2.msra.mxu0 0.0
    %2633 = vmatprep.subr.mxu0 0.0
    %2634 = vmatpush2.msra.mxu0 0.0
    %2635 = vmatprep.subr.mxu0 0.0
    %2636 = vmatpush2.msra.mxu0 0.0
    %2637 = vmatprep.subr.mxu0 0.0
    %2638 = vmatpush2.msra.mxu0 0.0
    %2639 = vmatprep.subr.mxu0 0.0
    %2640 = vmatpush2.msra.mxu0 0.0
    %2641 = vmatprep.subr.mxu0 0.0
    %2642 = vmatpush2.msra.mxu0 0.0
    %2643 = vmatprep.subr.mxu0 0.0
    %2644 = vmatpush2.msra.mxu0 0.0
    %2645 = vmatprep.subr.mxu0 0.0
    %2646 = vmatpush2.msra.mxu0 0.0
    %2647 = vmatprep.subr.mxu0 0.0
    %2648 = vmatpush2.msra.mxu0 0.0
    %2649 = vmatprep.subr.mxu0 0.0
    %2650 = vmatpush2.msra.mxu0 0.0
    %2651 = vmatprep.subr.mxu0 0.0
    %2652 = vmatpush2.msra.mxu0 0.0
    %2653 = vmatprep.mubr.f32.mxu0 0.0
    %2654 = vmatmul.mubr.f32.gmra.mxu0 %v2581
    %v2655 = vpop.f32.mrf.mxu0
    %v2656 = vadd.f32 0.0, %v2655
    %v2657 = vpop.f32.mrf.mxu0
    %2658 = vmatprep.mubr.f32.mxu0 0.0
    %2659 = vmatmul.mubr.f32.gmra.mxu0 %v2584
    %v2660 = vpop.f32.mrf.mxu0
    %v2661 = vadd.f32 0.0, %v2660
    %v2662 = vpop.f32.mrf.mxu0
    %2663 = vdwg.mxu0
    %v2664 = vadd.f32 %v2574, %v2656
    %v2665 = vadd.f32 %v2575, %v2661
    %v2668 = vunpack.c.l.s4 1966171168
    %v2669 = vunpack.c.0.s8 %v2668
    %v2670 = vlaneseq
    %v2671 = vshrl.u32 %v2670, 7
    %v2672 = vsub.s32 %v2669, %v2671
    %v2673 = vrot.slane %v2382, %v2672
    %v2674 = vcombine.high %v2673, %v2673
    %v2675 = vlaneseq
    %v2676 = vshrl.u32 %v2675, 7
    %v2677 = vsub.s32 0, %v2676
    %v2678 = vrot.slane %v2673, %v2677
    %v2679 = vlaneseq
    %v2680 = vshrl.u32 %v2679, 7
    %v2681 = vsub.s32 0, %v2680
    %v2682 = vrot.slane %v2674, %v2681
    %2683 = vrot.lane.b32.xlu0 %v2678, 32
    %v2684 = vpop.permute.xlu0 %2683
    %2685 = vrot.lane.b32.xlu0 %v2682, 32
    %v2686 = vpop.permute.xlu0 %2685
    %v2689 = vmul.f32 %v2664, %v2684
    %v2690 = vmul.f32 %v2665, %v2686
    %v2691 = vsel %vm165, %v2689, 0.0
    %2692 = vadd.xlane.f32.xlu0 %v2691
    %v2693 = vpop.xlane.xlu0 %2692
    %v2694 = vsel %vm165, %v2690, 0.0
    %2695 = vadd.xlane.f32.xlu0 %v2694
    %v2696 = vpop.xlane.xlu0 %2695
    %v2699 = vlaneseq
    %v2700 = vand.u32 %v2699, 127
    %v2701 = vlaneseq
    %v2702 = vshrl.u32 %v2701, 7
    %v2703 = vsub.s32 %v2700, %v2702
    %v2704 = vrot.slane %v2693, %v2703
    %v2705 = vlaneseq
    %v2706 = vshrl.u32 %v2705, 7
    %v2707 = vsub.s32 %v2700, %v2706
    %v2708 = vrot.slane %v2696, %v2707
    %v2709 = vsel %vm296, %v2708, %v2704
    %vm2711 = vcmask 58368
    %v2712 = vsel %vm2711, %v2709, -inf
    %2713 = vmax.xlane.f32.xlu0 %v2712
    %v2714 = vpop.xlane.xlu0 %2713
    %v2716 = vlaneseq
    %v2717 = vshrl.u32 %v2716, 7
    %v2718 = vsub.s32 0, %v2717
    %v2719 = vrot.slane %v2714, %v2718
    %v2720 = vlaneseq
    %v2721 = vshrl.u32 %v2720, 7
    %v2722 = vsub.s32 1, %v2721
    %v2723 = vrot.slane %v2714, %v2722
    %v2726 = vsub.f32 %v2693, %v2719
    %v2727 = vsub.f32 %v2696, %v2723
    %v2728 = vmul.f32 %v2726, 1.442695
    %v2729 = vpow.pop %v2728
    %v2730 = vmul.f32 %v2727, 1.442695
    %v2731 = vpow.pop %v2730
    %2734 = vset.pattern.permute.xlu0 0
    %2735 = vperm.xlu0 %2734, %v2729
    %v2736 = vpop.permute.xlu0 %2735
    %2737 = vset.pattern.permute.xlu0 0
    %2738 = vperm.xlu0 %2737, %v2731
    %v2739 = vpop.permute.xlu0 %2738
    %v2740 = vlaneseq
    %v2741 = vshrl.u32 %v2740, 7
    %v2742 = vsub.s32 %v2700, %v2741
    %v2743 = vrot.slane %v2736, %v2742
    %v2744 = vlaneseq
    %v2745 = vshrl.u32 %v2744, 7
    %v2746 = vsub.s32 %v2700, %v2745
    %v2747 = vrot.slane %v2739, %v2746
    %v2748 = vsel %vm296, %v2747, %v2743
    %v2750 = vsel %vm2711, %v2748, 0.0
    %2751 = vadd.xlane.f32.xlu0 %v2750
    %v2752 = vpop.xlane.xlu0 %2751
    %v2754 = vlaneseq
    %v2755 = vshrl.u32 %v2754, 7
    %v2756 = vsub.s32 0, %v2755
    %v2757 = vrot.slane %v2752, %v2756
    %v2758 = vlaneseq
    %v2759 = vshrl.u32 %v2758, 7
    %v2760 = vsub.s32 1, %v2759
    %v2761 = vrot.slane %v2752, %v2760
    %v2764 = vrcp.pop %v2757
    %v2765 = vmul.f32 %v2729, %v2764
    %v2766 = vrcp.pop %v2761
    %v2767 = vmul.f32 %v2731, %v2766
    %2769 = vset.pattern.permute.xlu0 0
    %2770 = vperm.xlu0 %2769, %v2765
    %v2771 = vpop.permute.xlu0 %2770
    %v2772 = vlaneseq
    %v2773 = vshrl.u32 %v2772, 7
    %v2774 = vsub.s32 %v2700, %v2773
    %v2775 = vrot.slane %v2771, %v2774
    %vm2776 = vcmask 64512
    %v2777 = vsel %vm2776, %v2775, 0
    %2779 = vmatprep.subr.mxu0 0.0
    %2780 = vmatpush1.msra.mxu0 0.0
    %2781 = vmatprep.subr.mxu0 0.0
    %2782 = vmatpush1.msra.mxu0 0.0
    %2783 = vmatprep.subr.mxu0 0.0
    %2784 = vmatpush1.msra.mxu0 0.0
    %2785 = vmatprep.subr.mxu0 0.0
    %2786 = vmatpush1.msra.mxu0 0.0
    %2787 = vmatprep.subr.mxu0 0.0
    %2788 = vmatpush1.msra.mxu0 0.0
    %2789 = vmatprep.subr.mxu0 0.0
    %2790 = vmatpush1.msra.mxu0 0.0
    %2791 = vmatprep.subr.mxu0 0.0
    %2792 = vmatpush1.msra.mxu0 0.0
    %2793 = vmatprep.subr.mxu0 0.0
    %2794 = vmatpush1.msra.mxu0 0.0
    %2795 = vmatprep.subr.mxu0 0.0
    %2796 = vmatpush1.msra.mxu0 0.0
    %2797 = vmatprep.subr.mxu0 0.0
    %2798 = vmatpush1.msra.mxu0 0.0
    %2799 = vmatprep.subr.mxu0 0.0
    %2800 = vmatpush1.msra.mxu0 0.0
    %2801 = vmatprep.subr.mxu0 0.0
    %2802 = vmatpush1.msra.mxu0 0.0
    %2803 = vmatprep.subr.mxu0 0.0
    %2804 = vmatpush1.msra.mxu0 0.0
    %2805 = vmatprep.subr.mxu0 0.0
    %2806 = vmatpush1.msra.mxu0 0.0
    %2807 = vmatprep.subr.mxu0 0.0
    %2808 = vmatpush1.msra.mxu0 0.0
    %2809 = vmatprep.subr.mxu0 0.0
    %2810 = vmatpush1.msra.mxu0 %v2664
    %2811 = vmatprep.subr.mxu0 0.0
    %2812 = vmatpush2.msra.mxu0 0.0
    %2813 = vmatprep.subr.mxu0 0.0
    %2814 = vmatpush2.msra.mxu0 0.0
    %2815 = vmatprep.subr.mxu0 0.0
    %2816 = vmatpush2.msra.mxu0 0.0
    %2817 = vmatprep.subr.mxu0 0.0
    %2818 = vmatpush2.msra.mxu0 0.0
    %2819 = vmatprep.subr.mxu0 0.0
    %2820 = vmatpush2.msra.mxu0 0.0
    %2821 = vmatprep.subr.mxu0 0.0
    %2822 = vmatpush2.msra.mxu0 0.0
    %2823 = vmatprep.subr.mxu0 0.0
    %2824 = vmatpush2.msra.mxu0 0.0
    %2825 = vmatprep.subr.mxu0 0.0
    %2826 = vmatpush2.msra.mxu0 0.0
    %2827 = vmatprep.subr.mxu0 0.0
    %2828 = vmatpush2.msra.mxu0 0.0
    %2829 = vmatprep.subr.mxu0 0.0
    %2830 = vmatpush2.msra.mxu0 0.0
    %2831 = vmatprep.subr.mxu0 0.0
    %2832 = vmatpush2.msra.mxu0 0.0
    %2833 = vmatprep.subr.mxu0 0.0
    %2834 = vmatpush2.msra.mxu0 0.0
    %2835 = vmatprep.subr.mxu0 0.0
    %2836 = vmatpush2.msra.mxu0 0.0
    %2837 = vmatprep.subr.mxu0 0.0
    %2838 = vmatpush2.msra.mxu0 0.0
    %2839 = vmatprep.subr.mxu0 0.0
    %2840 = vmatpush2.msra.mxu0 0.0
    %2841 = vmatprep.subr.mxu0 0.0
    %2842 = vmatpush2.msra.mxu0 0.0
    %2843 = vmatprep.mubr.f32.mxu0 0.0
    %2844 = vmatmul.mubr.f32.gmra.mxu0 %v2777
    %v2845 = vpop.f32.mrf.mxu0
    %v2846 = vadd.f32 0.0, %v2845
    %v2847 = vpop.f32.mrf.mxu0
    %2848 = vdwg.mxu0
    %2850 = vset.pattern.permute.xlu0 0
    %2851 = vperm.xlu0 %2850, %v2767
    %v2852 = vpop.permute.xlu0 %2851
    %v2853 = vlaneseq
    %v2854 = vshrl.u32 %v2853, 7
    %v2855 = vsub.s32 %v2700, %v2854
    %v2856 = vrot.slane %v2852, %v2855
    %v2857 = vsel %vm2776, %v2856, 0
    %2859 = vmatprep.subr.mxu0 0.0
    %2860 = vmatpush1.msra.mxu0 0.0
    %2861 = vmatprep.subr.mxu0 0.0
    %2862 = vmatpush1.msra.mxu0 0.0
    %2863 = vmatprep.subr.mxu0 0.0
    %2864 = vmatpush1.msra.mxu0 0.0
    %2865 = vmatprep.subr.mxu0 0.0
    %2866 = vmatpush1.msra.mxu0 0.0
    %2867 = vmatprep.subr.mxu0 0.0
    %2868 = vmatpush1.msra.mxu0 0.0
    %2869 = vmatprep.subr.mxu0 0.0
    %2870 = vmatpush1.msra.mxu0 0.0
    %2871 = vmatprep.subr.mxu0 0.0
    %2872 = vmatpush1.msra.mxu0 0.0
    %2873 = vmatprep.subr.mxu0 0.0
    %2874 = vmatpush1.msra.mxu0 0.0
    %2875 = vmatprep.subr.mxu0 0.0
    %2876 = vmatpush1.msra.mxu0 0.0
    %2877 = vmatprep.subr.mxu0 0.0
    %2878 = vmatpush1.msra.mxu0 0.0
    %2879 = vmatprep.subr.mxu0 0.0
    %2880 = vmatpush1.msra.mxu0 0.0
    %2881 = vmatprep.subr.mxu0 0.0
    %2882 = vmatpush1.msra.mxu0 0.0
    %2883 = vmatprep.subr.mxu0 0.0
    %2884 = vmatpush1.msra.mxu0 0.0
    %2885 = vmatprep.subr.mxu0 0.0
    %2886 = vmatpush1.msra.mxu0 0.0
    %2887 = vmatprep.subr.mxu0 0.0
    %2888 = vmatpush1.msra.mxu0 0.0
    %2889 = vmatprep.subr.mxu0 0.0
    %2890 = vmatpush1.msra.mxu0 %v2665
    %2891 = vmatprep.subr.mxu0 0.0
    %2892 = vmatpush2.msra.mxu0 0.0
    %2893 = vmatprep.subr.mxu0 0.0
    %2894 = vmatpush2.msra.mxu0 0.0
    %2895 = vmatprep.subr.mxu0 0.0
    %2896 = vmatpush2.msra.mxu0 0.0
    %2897 = vmatprep.subr.mxu0 0.0
    %2898 = vmatpush2.msra.mxu0 0.0
    %2899 = vmatprep.subr.mxu0 0.0
    %2900 = vmatpush2.msra.mxu0 0.0
    %2901 = vmatprep.subr.mxu0 0.0
    %2902 = vmatpush2.msra.mxu0 0.0
    %2903 = vmatprep.subr.mxu0 0.0
    %2904 = vmatpush2.msra.mxu0 0.0
    %2905 = vmatprep.subr.mxu0 0.0
    %2906 = vmatpush2.msra.mxu0 0.0
    %2907 = vmatprep.subr.mxu0 0.0
    %2908 = vmatpush2.msra.mxu0 0.0
    %2909 = vmatprep.subr.mxu0 0.0
    %2910 = vmatpush2.msra.mxu0 0.0
    %2911 = vmatprep.subr.mxu0 0.0
    %2912 = vmatpush2.msra.mxu0 0.0
    %2913 = vmatprep.subr.mxu0 0.0
    %2914 = vmatpush2.msra.mxu0 0.0
    %2915 = vmatprep.subr.mxu0 0.0
    %2916 = vmatpush2.msra.mxu0 0.0
    %2917 = vmatprep.subr.mxu0 0.0
    %2918 = vmatpush2.msra.mxu0 0.0
    %2919 = vmatprep.subr.mxu0 0.0
    %2920 = vmatpush2.msra.mxu0 0.0
    %2921 = vmatprep.subr.mxu0 0.0
    %2922 = vmatpush2.msra.mxu0 0.0
    %2923 = vmatprep.mubr.f32.mxu0 0.0
    %2924 = vmatmul.mubr.f32.gmra.mxu0 %v2857
    %v2925 = vpop.f32.mrf.mxu0
    %v2926 = vadd.f32 0.0, %v2925
    %v2927 = vpop.f32.mrf.mxu0
    %2928 = vdwg.mxu0
    %v2929 = vld [vmem:[%s9] sm:$0xff]
    %v2930 = vld [vmem:[%s9 + $0x8] sm:$0xff]
    %v2931 = vld [vmem:[%s9 + $0x10] sm:$0xff]
    %v2932 = vld [vmem:[%s9 + $0x18] sm:$0xff]
    %v2933 = vld [vmem:[%s9 + $0x20] sm:$0xff]
    %v2934 = vld [vmem:[%s9 + $0x28] sm:$0xff]
    %v2935 = vld [vmem:[%s9 + $0x30] sm:$0xff]
    %v2936 = vld [vmem:[%s9 + $0x38] sm:$0xff]
    %v2939 = vrot.slane %v2926, 7
    %v2940 = vsel %vm296, %v2939, %v2846
    %v2941 = vsel %vm165, %v2940, 0
    %2943 = vmatprep.subr.mxu0 0.0
    %2944 = vmatpush1.msra.mxu0 0.0
    %2945 = vmatprep.subr.mxu0 0.0
    %2946 = vmatpush1.msra.mxu0 0.0
    %2947 = vmatprep.subr.mxu0 0.0
    %2948 = vmatpush1.msra.mxu0 0.0
    %2949 = vmatprep.subr.mxu0 0.0
    %2950 = vmatpush1.msra.mxu0 0.0
    %2951 = vmatprep.subr.mxu0 0.0
    %2952 = vmatpush1.msra.mxu0 0.0
    %2953 = vmatprep.subr.mxu0 0.0
    %2954 = vmatpush1.msra.mxu0 0.0
    %2955 = vmatprep.subr.mxu0 0.0
    %2956 = vmatpush1.msra.mxu0 0.0
    %2957 = vmatprep.subr.mxu0 0.0
    %2958 = vmatpush1.msra.mxu0 0.0
    %2959 = vmatprep.subr.mxu0 0.0
    %2960 = vmatpush1.msra.mxu0 0.0
    %2961 = vmatprep.subr.mxu0 0.0
    %2962 = vmatpush1.msra.mxu0 0.0
    %2963 = vmatprep.subr.mxu0 0.0
    %2964 = vmatpush1.msra.mxu0 0.0
    %2965 = vmatprep.subr.mxu0 0.0
    %2966 = vmatpush1.msra.mxu0 0.0
    %2967 = vmatprep.subr.mxu0 0.0
    %2968 = vmatpush1.msra.mxu0 %v2936
    %2969 = vmatprep.subr.mxu0 0.0
    %2970 = vmatpush1.msra.mxu0 %v2935
    %2971 = vmatprep.subr.mxu0 0.0
    %2972 = vmatpush1.msra.mxu0 %v2934
    %2973 = vmatprep.subr.mxu0 0.0
    %2974 = vmatpush1.msra.mxu0 %v2933
    %2975 = vmatprep.subr.mxu0 0.0
    %2976 = vmatpush2.msra.mxu0 0.0
    %2977 = vmatprep.subr.mxu0 0.0
    %2978 = vmatpush2.msra.mxu0 0.0
    %2979 = vmatprep.subr.mxu0 0.0
    %2980 = vmatpush2.msra.mxu0 0.0
    %2981 = vmatprep.subr.mxu0 0.0
    %2982 = vmatpush2.msra.mxu0 0.0
    %2983 = vmatprep.subr.mxu0 0.0
    %2984 = vmatpush2.msra.mxu0 0.0
    %2985 = vmatprep.subr.mxu0 0.0
    %2986 = vmatpush2.msra.mxu0 0.0
    %2987 = vmatprep.subr.mxu0 0.0
    %2988 = vmatpush2.msra.mxu0 0.0
    %2989 = vmatprep.subr.mxu0 0.0
    %2990 = vmatpush2.msra.mxu0 0.0
    %2991 = vmatprep.subr.mxu0 0.0
    %2992 = vmatpush2.msra.mxu0 0.0
    %2993 = vmatprep.subr.mxu0 0.0
    %2994 = vmatpush2.msra.mxu0 0.0
    %2995 = vmatprep.subr.mxu0 0.0
    %2996 = vmatpush2.msra.mxu0 0.0
    %2997 = vmatprep.subr.mxu0 0.0
    %2998 = vmatpush2.msra.mxu0 0.0
    %2999 = vmatprep.subr.mxu0 0.0
    %3000 = vmatpush2.msra.mxu0 0.0
    %3001 = vmatprep.subr.mxu0 0.0
    %3002 = vmatpush2.msra.mxu0 0.0
    %3003 = vmatprep.subr.mxu0 0.0
    %3004 = vmatpush2.msra.mxu0 0.0
    %3005 = vmatprep.subr.mxu0 0.0
    %3006 = vmatpush2.msra.mxu0 0.0
    %3007 = vmatprep.mubr.f32.mxu0 0.0
    %3008 = vmatmul.mubr.f32.gmra.mxu0 %v2941
    %v3009 = vpop.f32.mrf.mxu0
    %v3010 = vadd.f32 0.0, %v3009
    %v3011 = vpop.f32.mrf.mxu0
    %3012 = vdwg.mxu0
    %v3014 = vunpack.c.l.s4 1983009808
    %v3015 = vunpack.c.0.s8 %v3014
    %v3016 = vlaneseq
    %v3017 = vshrl.u32 %v3016, 7
    %v3018 = vsub.s32 %v3015, %v3017
    %v3019 = vrot.slane %v2382, %v3018
    %3020 = vrot.lane.b32.xlu0 %v3019, 32
    %v3021 = vpop.permute.xlu0 %3020
    %v3022 = vsel %vm165, %v3021, 0
    %3024 = vmatprep.subr.mxu0 0.0
    %3025 = vmatpush1.msra.mxu0 0.0
    %3026 = vmatprep.subr.mxu0 0.0
    %3027 = vmatpush1.msra.mxu0 0.0
    %3028 = vmatprep.subr.mxu0 0.0
    %3029 = vmatpush1.msra.mxu0 0.0
    %3030 = vmatprep.subr.mxu0 0.0
    %3031 = vmatpush1.msra.mxu0 0.0
    %3032 = vmatprep.subr.mxu0 0.0
    %3033 = vmatpush1.msra.mxu0 0.0
    %3034 = vmatprep.subr.mxu0 0.0
    %3035 = vmatpush1.msra.mxu0 0.0
    %3036 = vmatprep.subr.mxu0 0.0
    %3037 = vmatpush1.msra.mxu0 0.0
    %3038 = vmatprep.subr.mxu0 0.0
    %3039 = vmatpush1.msra.mxu0 0.0
    %3040 = vmatprep.subr.mxu0 0.0
    %3041 = vmatpush1.msra.mxu0 0.0
    %3042 = vmatprep.subr.mxu0 0.0
    %3043 = vmatpush1.msra.mxu0 0.0
    %3044 = vmatprep.subr.mxu0 0.0
    %3045 = vmatpush1.msra.mxu0 0.0
    %3046 = vmatprep.subr.mxu0 0.0
    %3047 = vmatpush1.msra.mxu0 0.0
    %3048 = vmatprep.subr.mxu0 0.0
    %3049 = vmatpush1.msra.mxu0 %v2932
    %3050 = vmatprep.subr.mxu0 0.0
    %3051 = vmatpush1.msra.mxu0 %v2931
    %3052 = vmatprep.subr.mxu0 0.0
    %3053 = vmatpush1.msra.mxu0 %v2930
    %3054 = vmatprep.subr.mxu0 0.0
    %3055 = vmatpush1.msra.mxu0 %v2929
    %3056 = vmatprep.subr.mxu0 0.0
    %3057 = vmatpush2.msra.mxu0 0.0
    %3058 = vmatprep.subr.mxu0 0.0
    %3059 = vmatpush2.msra.mxu0 0.0
    %3060 = vmatprep.subr.mxu0 0.0
    %3061 = vmatpush2.msra.mxu0 0.0
    %3062 = vmatprep.subr.mxu0 0.0
    %3063 = vmatpush2.msra.mxu0 0.0
    %3064 = vmatprep.subr.mxu0 0.0
    %3065 = vmatpush2.msra.mxu0 0.0
    %3066 = vmatprep.subr.mxu0 0.0
    %3067 = vmatpush2.msra.mxu0 0.0
    %3068 = vmatprep.subr.mxu0 0.0
    %3069 = vmatpush2.msra.mxu0 0.0
    %3070 = vmatprep.subr.mxu0 0.0
    %3071 = vmatpush2.msra.mxu0 0.0
    %3072 = vmatprep.subr.mxu0 0.0
    %3073 = vmatpush2.msra.mxu0 0.0
    %3074 = vmatprep.subr.mxu0 0.0
    %3075 = vmatpush2.msra.mxu0 0.0
    %3076 = vmatprep.subr.mxu0 0.0
    %3077 = vmatpush2.msra.mxu0 0.0
    %3078 = vmatprep.subr.mxu0 0.0
    %3079 = vmatpush2.msra.mxu0 0.0
    %3080 = vmatprep.subr.mxu0 0.0
    %3081 = vmatpush2.msra.mxu0 0.0
    %3082 = vmatprep.subr.mxu0 0.0
    %3083 = vmatpush2.msra.mxu0 0.0
    %3084 = vmatprep.subr.mxu0 0.0
    %3085 = vmatpush2.msra.mxu0 0.0
    %3086 = vmatprep.subr.mxu0 0.0
    %3087 = vmatpush2.msra.mxu0 0.0
    %3088 = vmatprep.mubr.f32.mxu0 0.0
    %3089 = vmatmul.mubr.f32.gmra.mxu0 %v3022
    %v3090 = vpop.f32.mrf.mxu0
    %v3091 = vadd.f32 %v3010, %v3090
    %v3092 = vpop.f32.mrf.mxu0
    %3093 = vdwg.mxu0
    %v3094 = vld [vmem:[%s10] sm:$0x1]
    %v3096 = vlaneseq
    %v3097 = vshrl.u32 %v3096, 7
    %v3098 = vsub.s32 0, %v3097
    %v3099 = vrot.slane %v3094, %v3098
    %v3101 = vadd.f32 %v3091, %v3099
    %3102 = vst.msk [vmem:[#allocation9] sm:$0x3] %vm2384, %v3101
    // Predicated region
    $region54: #{tpu_custom_call.1} parent=1 // pred_check
      _
    $region55: #{tpu_custom_call.1} parent=1 // pred_check_branch
      %3104 = sbr.rel (0) target = $region57
    $region56: #{tpu_custom_call.1} parent=1 // pred_region
      %s3106 = ssub.s32 32, 32
      %3107 = vsyncadd [#allocation6], %s3106
      %s3109 = sshll.u32 [#allocation9], 4
      %s3110 = int_to_ptr.vmem [resolvable:$true] %s3109
      %3112 = dma.vmem_to_hbm [thread:$0]  %s3110, 32, %s11, [#allocation6]
    $region57: #{tpu_custom_call.1} parent=1 // pred_fallthru
      _
    // Predicated region
    $region58: #{tpu_custom_call.1} parent=1 // pred_check
      _
    $region59: #{tpu_custom_call.1} parent=1 // pred_check_branch
      %3114 = sbr.rel (0) target = $region61
    $region60: #{tpu_custom_call.1} parent=1 // pred_region
      %3115 = dma.done [#allocation6], 32
    $region61: #{tpu_custom_call.1} parent=1 // pred_fallthru
      _
    %3116 = vsyncpa [#allocation5], 1
    %3117 = vsyncpa [#allocation8], 1
    %3118 = vsyncpa [#allocation6], 1

</llo_original>
